<compile_context>
chip_gen: v6e
topology: v6e:2x2x1
jax: 0.10.0
libtpu: 0.0.40
codegen_flags: <defaults>
</compile_context>

<pallas_src>
import jax
import jax.numpy as jnp
from jax import lax
from jax.experimental import pallas as pl
from jax.experimental.pallas import tpu as pltpu

# Small, module-consistent sizes (scaled down from hidden=50, embed=300,
# vocab=20000 — structurally identical).
HIDDEN = 32          # hidden_size
EMBED = 64           # embed_size
LAYERS = 2           # layer_size
VOCAB = 256          # tgt_vocab_size
PAD = 0
SOS = 2

ACT_PAD = 128        # 3*HIDDEN (=96) padded to one full 128-lane tile


def _decoder_kernel(emb_ref, h0_ref, c0_ref,
                    w0_ref, b0_ref, w1_ref, b1_ref,
                    enca_ref, sbias_ref, enc_ref,
                    aw_ref, awb_ref,
                    act_ref,
                    h_scr, c_scr):
    """One grid step = a block of up to 8 decode steps.

    Emits tanh(attention_wight(cat(h_top, ctx))) per step (lane-padded to 128);
    the (3H, V) vocab projection is hoisted out and done in XLA afterwards.
    LSTM state is carried across grid steps in VMEM scratch.
    """
    H = HIDDEN
    TBLK = act_ref.shape[0]

    @pl.when(pl.program_id(0) == 0)
    def _():
        h_scr[...] = h0_ref[...]
        c_scr[...] = c0_ref[...]

    def lstm_cell(x, h, c, w_ref, b_ref):
        # Fused [W_ih; W_hh]: one bf16 MXU push per layer per step, f32 acc.
        xh = jnp.concatenate([x, h], axis=-1).astype(jnp.bfloat16)
        g = (jnp.dot(xh, w_ref[...], preferred_element_type=jnp.float32)
             + b_ref[...])                                   # bias pre-broadcast (Bp, 4H)
        # PyTorch gate order i, f, g, o ; bias already = b_ih + b_hh.
        sig = jax.nn.sigmoid(g)
        th = jnp.tanh(g)
        i = sig[:, 0 * H:1 * H]
        f = sig[:, 1 * H:2 * H]
        gg = th[:, 2 * H:3 * H]
        o = sig[:, 3 * H:4 * H]
        c_new = f * c + i * gg
        h_new = o * jnp.tanh(c_new)
        return h_new, c_new

    def step(t, carry):
        h_l0, c_l0, h_l1, c_l1 = carry
        x = emb_ref[t]                                                   # (Bp, E)

        # 2-layer LSTM, one time step (inter-layer dropout = identity in eval).
        h_l0, c_l0 = lstm_cell(x, h_l0, c_l0, w0_ref, b0_ref)
        h_l1, c_l1 = lstm_cell(h_l0, h_l1, c_l1, w1_ref, b1_ref)

        # Attention against the pre-projected encoder states (enc @ W^T and
        # b . enc hoisted out of the loop): VPU multiply + XLU reduces, no
        # degenerate 1-row MXU pushes on the sequential path.
        scores = (jnp.sum(h_l1[:, None, :] * enca_ref[...], axis=-1)
                  + sbias_ref[...])                                      # (Bp, S)
        m = jnp.max(scores, axis=-1, keepdims=True)
        e = jnp.exp(scores - m)
        denom = jnp.sum(e, axis=-1, keepdims=True)
        probs = e * pl.reciprocal(denom)                                 # softmax(dim=-1)
        ctx = jnp.sum(probs[:, :, None] * enc_ref[...], axis=1)         # (Bp, 2H)

        # attention_wight(cat(h_top, ctx)): single fused matmul, 128-lane cols.
        hc = jnp.concatenate([h_l1, ctx], axis=-1).astype(jnp.bfloat16)
        pre = (jnp.dot(hc, aw_ref[...], preferred_element_type=jnp.float32)
               + awb_ref[...])
        # dropout = identity (eval); argmax "predict" is dead under teacher forcing.
        act_ref[t] = jnp.tanh(pre)                                       # (Bp, 128) dense store
        return (h_l0, c_l0, h_l1, c_l1)

    init = (h_scr[0], c_scr[0], h_scr[1], c_scr[1])
    h_l0, c_l0, h_l1, c_l1 = lax.fori_loop(0, TBLK, step, init, unroll=True)
    h_scr[0] = h_l0
    c_scr[0] = c_l0
    h_scr[1] = h_l1
    c_scr[1] = c_l1


def decoder_forward(params, encoder_output, encoder_hidden, output_words):
    """Mirrors Decoder.forward (teacher forcing, eval-mode dropout)."""
    h_enc, c_enc = encoder_hidden                 # each (2*LAYERS, B, HIDDEN)
    B = output_words.shape[0]
    T = output_words.shape[1] - 1                 # output_seq_len
    S = encoder_output.shape[1]                   # src_seq_len
    H = HIDDEN

    h_enc = h_enc.reshape(2, LAYERS, B, H)
    c_enc = c_enc.reshape(2, LAYERS, B, H)
    h0 = h_enc[0] + h_enc[1]                      # (LAYERS, B, H)
    c0 = c_enc[0] + c_enc[1]

    # Teacher forcing: embed the whole source once (glue) and feed time-major.
    source = output_words[:, :-1]                                # (B, T)
    emb = jnp.take(params['embed'], source, axis=0)              # (B, T, E)
    emb = jnp.transpose(emb, (1, 0, 2)).astype(jnp.float32)      # (T, B, E)

    # Pad batch to a sublane multiple (8); pad T to the step-block size so the
    # 1-D grid tiles evenly (extra steps run on zero embeddings and are sliced off).
    Bp = ((B + 7) // 8) * 8
    pb = Bp - B
    TBLK = min(T, 8)
    T_pad = ((T + TBLK - 1) // TBLK) * TBLK
    emb = jnp.pad(emb, ((0, T_pad - T), (0, pb), (0, 0)))
    h0 = jnp.pad(h0, ((0, 0), (0, pb), (0, 0)))
    c0 = jnp.pad(c0, ((0, 0), (0, pb), (0, 0)))
    enc = jnp.pad(encoder_output.astype(jnp.float32), ((0, pb), (0, 0), (0, 0)))

    # Hoisted (time-invariant) attention projection: enc_a = enc @ W^T, plus
    # the bias's contribution to the scores. Done once, outside the loop.
    enc_a = jnp.einsum('bsj,ij->bsi', enc, params['attw'],
                       preferred_element_type=jnp.float32)       # (Bp, S, H)
    sbias = jnp.einsum('bsj,j->bs', enc, params['attb'][0],
                       preferred_element_type=jnp.float32)       # (Bp, S)

    # Fused LSTM weights (bf16 for single-pass MXU), biases pre-broadcast.
    w0 = jnp.concatenate([params['wih0'], params['whh0']], axis=0).astype(jnp.bfloat16)
    w1 = jnp.concatenate([params['wih1'], params['whh1']], axis=0).astype(jnp.bfloat16)
    b0 = jnp.broadcast_to(params['b0'], (Bp, 4 * H))
    b1 = jnp.broadcast_to(params['b1'], (Bp, 4 * H))

    # Fused output head, columns padded to a full 128-lane tile (lane-dense store).
    pa = ACT_PAD - 3 * H
    aw = jnp.concatenate([params['awh'], params['awc']], axis=0)          # (3H, 3H)
    aw = jnp.pad(aw, ((0, 0), (0, pa))).astype(jnp.bfloat16)              # (3H, 128)
    awb = jnp.broadcast_to(jnp.pad(params['awb'], ((0, 0), (0, pa))), (Bp, ACT_PAD))

    const3 = lambda t: (0, 0, 0)
    const2 = lambda t: (0, 0)

    act = pl.pallas_call(
        _decoder_kernel,
        out_shape=jax.ShapeDtypeStruct((T_pad, Bp, ACT_PAD), jnp.float32),
        grid_spec=pltpu.PrefetchScalarGridSpec(
            num_scalar_prefetch=0,
            grid=(T_pad // TBLK,),
            in_specs=[
                pl.BlockSpec((TBLK, Bp, EMBED), lambda t: (t, 0, 0)),     # emb (streamed)
                pl.BlockSpec((LAYERS, Bp, H), const3),                    # h0
                pl.BlockSpec((LAYERS, Bp, H), const3),                    # c0
                pl.BlockSpec((EMBED + H, 4 * H), const2),                 # fused W layer 0
                pl.BlockSpec((Bp, 4 * H), const2),                        # bias 0
                pl.BlockSpec((2 * H, 4 * H), const2),                     # fused W layer 1
                pl.BlockSpec((Bp, 4 * H), const2),                        # bias 1
                pl.BlockSpec((Bp, S, H), const3),                         # enc_a (hoisted proj)
                pl.BlockSpec((Bp, S), const2),                            # score bias
                pl.BlockSpec((Bp, S, 2 * H), const3),                     # enc
                pl.BlockSpec((3 * H, ACT_PAD), const2),                   # fused head W
                pl.BlockSpec((Bp, ACT_PAD), const2),                      # head bias
            ],
            out_specs=pl.BlockSpec((TBLK, Bp, ACT_PAD), lambda t: (t, 0, 0)),
            scratch_shapes=[pltpu.VMEM((LAYERS, Bp, H), jnp.float32),     # h state carry
                            pltpu.VMEM((LAYERS, Bp, H), jnp.float32)]),   # c state carry
        compiler_params=pltpu.CompilerParams(
            dimension_semantics=("arbitrary",),                # sequential recurrence over T
            vmem_limit_bytes=32 * 1024 * 1024),                # v5e scoped default is only 16 MiB
    )(emb, h0, c0, w0, b0, w1, b1, enc_a, sbias, enc, aw, awb)
    # TODO(synk): on v7x, add a leading core_parallel grid axis splitting Bp across the
    # two TensorCores (batch elements are independent) for ~2x on the sequential part.

    # Hoisted vocab projection: outw zero-padded to K=128 so the lane-dense act
    # slab feeds one dense (T*B,128)@(128,V) matmul with no relayout/lane slice.
    outw = jnp.pad(params['outw'], ((0, pa), (0, 0)))                     # (128, V)
    logits = jnp.einsum('tbk,kv->tbv', act[:T, :B, :], outw,
                        preferred_element_type=jnp.float32) + params['outb']
    outputs = jnp.transpose(logits, (1, 0, 2))                   # (B, T, VOCAB)
    attention_result = jnp.zeros((T, S), dtype=jnp.float32)      # never written in forward()
    return outputs, attention_result


def reference_forward(params, encoder_output, encoder_hidden, output_words):
    """Pure-JAX reference with identical math (f32), for correctness checking."""
    h_enc, c_enc = encoder_hidden
    B = output_words.shape[0]
    T = output_words.shape[1] - 1
    h_enc = h_enc.reshape(2, LAYERS, B, HIDDEN)
    c_enc = c_enc.reshape(2, LAYERS, B, HIDDEN)
    h = h_enc[0] + h_enc[1]
    c = c_enc[0] + c_enc[1]
    source = output_words[:, :-1]

    def cell(x, hh, cc, wih, whh, b):
        g = x @ wih + hh @ whh + b
        i_, f_, g_, o_ = jnp.split(g, 4, axis=-1)
        cn = jax.nn.sigmoid(f_) * cc + jax.nn.sigmoid(i_) * jnp.tanh(g_)
        hn = jax.nn.sigmoid(o_) * jnp.tanh(cn)
        return hn, cn

    outs = []
    for i in range(T):
        x = params['embed'][source[:, i]].astype(jnp.float32)
        h0n, c0n = cell(x, h[0], c[0], params['wih0'], params['whh0'], params['b0'])
        h1n, c1n = cell(h0n, h[1], c[1], params['wih1'], params['whh1'], params['b1'])
        h = jnp.stack([h0n, h1n])
        c = jnp.stack([c0n, c1n])
        q = h1n @ params['attw'] + params['attb']
        scores = jnp.einsum('bk,bsk->bs', q, encoder_output)
        p = jax.nn.softmax(scores, axis=-1)
        ctx = jnp.einsum('bs,bsk->bk', p, encoder_output)
        pre = h1n @ params['awh'] + ctx @ params['awc'] + params['awb']
        outs.append(jnp.tanh(pre) @ params['outw'] + params['outb'])
    return jnp.transpose(jnp.stack(outs), (1, 0, 2))


if __name__ == "__main__":
    key = jax.random.PRNGKey(0)
    keys = jax.random.split(key, 18)

    def rand(k, shape, scale=0.1):
        return scale * jax.random.normal(k, shape, dtype=jnp.float32)

    params = {
        # nn.Embedding(tgt_vocab_size, embed_size, padding_idx=PAD): row PAD is zero.
        'embed': rand(keys[0], (VOCAB, EMBED)).at[PAD].set(0.0),
        # LSTM layer 0 (input = embed_size); weights stored (in, out) = PyTorch W^T.
        'wih0': rand(keys[1], (EMBED, 4 * HIDDEN)),
        'whh0': rand(keys[2], (HIDDEN, 4 * HIDDEN)),
        'b0':   rand(keys[3], (1, 4 * HIDDEN)),          # b_ih + b_hh combined
        # LSTM layer 1 (input = hidden_size)
        'wih1': rand(keys[4], (HIDDEN, 4 * HIDDEN)),
        'whh1': rand(keys[5], (HIDDEN, 4 * HIDDEN)),
        'b1':   rand(keys[6], (1, 4 * HIDDEN)),
        # Attention.W : Linear(H, 2H)
        'attw': rand(keys[7], (HIDDEN, 2 * HIDDEN)),
        'attb': rand(keys[8], (1, 2 * HIDDEN)),
        # Decoder.attention_wight : Linear(3H, 3H), split for the concat input
        'awh':  rand(keys[9], (HIDDEN, 3 * HIDDEN)),
        'awc':  rand(keys[10], (2 * HIDDEN, 3 * HIDDEN)),
        'awb':  rand(keys[11], (1, 3 * HIDDEN)),
        # Decoder.out : Linear(3H, vocab) — applied OUTSIDE the kernel (hoisted).
        'outw': rand(keys[12], (3 * HIDDEN, VOCAB)),
        'outb': rand(keys[13], (1, VOCAB)),
    }

    B, S, T_plus1 = 2, 8, 7   # batch, src_seq_len, output_words length (T = 6 decode steps)
    encoder_output = rand(keys[14], (B, S, 2 * HIDDEN), scale=1.0)
    enc_h = rand(keys[15], (2 * LAYERS, B, HIDDEN), scale=1.0)
    enc_c = rand(keys[16], (2 * LAYERS, B, HIDDEN), scale=1.0)
    output_words = jax.random.randint(keys[17], (B, T_plus1), 0, VOCAB, dtype=jnp.int32)

    outputs, attn = decoder_forward(params, encoder_output, (enc_h, enc_c), output_words)
    outputs = jax.block_until_ready(outputs)
    attn = jax.block_until_ready(attn)

    ref = reference_forward(params, encoder_output, (enc_h, enc_c), output_words)
    max_err = float(jnp.max(jnp.abs(outputs - ref)))
    assert outputs.shape == (B, T_plus1 - 1, VOCAB), outputs.shape
    assert attn.shape == (T_plus1 - 1, S), attn.shape
    # Tolerance accounts for the bf16 MXU operands in the recurrent kernel
    # (per perf guidance) vs the f32 reference; a wiring bug would be O(0.1-1).
    assert max_err < 3e-2, f"mismatch vs reference: {max_err}"
    print("KERNEL_OK")
</pallas_src>

<mosaic_0001>
module attributes {stable_mosaic.version = 11 : i64} {
  func.func @_decoder_kernel(%arg0: i32, %arg1: memref<6x8x64xf32, #tpu.memory_space<vmem>>, %arg2: memref<2x8x32xf32, #tpu.memory_space<vmem>>, %arg3: memref<2x8x32xf32, #tpu.memory_space<vmem>>, %arg4: memref<96x128xbf16, #tpu.memory_space<vmem>>, %arg5: memref<8x128xf32, #tpu.memory_space<vmem>>, %arg6: memref<64x128xbf16, #tpu.memory_space<vmem>>, %arg7: memref<8x128xf32, #tpu.memory_space<vmem>>, %arg8: memref<8x8x32xf32, #tpu.memory_space<vmem>>, %arg9: memref<8x8xf32, #tpu.memory_space<vmem>>, %arg10: memref<8x8x64xf32, #tpu.memory_space<vmem>>, %arg11: memref<96x128xbf16, #tpu.memory_space<vmem>>, %arg12: memref<8x128xf32, #tpu.memory_space<vmem>>, %arg13: memref<6x8x128xf32, #tpu.memory_space<vmem>>, %arg14: memref<2x8x32xf32, #tpu.memory_space<vmem>>, %arg15: memref<2x8x32xf32, #tpu.memory_space<vmem>>) attributes {dimension_semantics = [#tpu.dimension_semantics<arbitrary>], iteration_bounds = array<i64: 1>, scalar_prefetch = 0 : i64, scratch_operands = 2 : i64, tpu.core_type = #tpu.core_type<tc>, window_params = [{transform_indices = @transform_0, window_bounds = array<i64: 6, 8, 64>}, {pipeline_mode = #tpu.pipeline_mode<synchronous>, transform_indices = @transform_1, window_bounds = array<i64: 2, 8, 32>}, {pipeline_mode = #tpu.pipeline_mode<synchronous>, transform_indices = @transform_2, window_bounds = array<i64: 2, 8, 32>}, {pipeline_mode = #tpu.pipeline_mode<synchronous>, transform_indices = @transform_3, window_bounds = array<i64: 96, 128>}, {pipeline_mode = #tpu.pipeline_mode<synchronous>, transform_indices = @transform_4, window_bounds = array<i64: 8, 128>}, {pipeline_mode = #tpu.pipeline_mode<synchronous>, transform_indices = @transform_5, window_bounds = array<i64: 64, 128>}, {pipeline_mode = #tpu.pipeline_mode<synchronous>, transform_indices = @transform_6, window_bounds = array<i64: 8, 128>}, {pipeline_mode = #tpu.pipeline_mode<synchronous>, transform_indices = @transform_7, window_bounds = array<i64: 8, 8, 32>}, {pipeline_mode = #tpu.pipeline_mode<synchronous>, transform_indices = @transform_8, window_bounds = array<i64: 8, 8>}, {pipeline_mode = #tpu.pipeline_mode<synchronous>, transform_indices = @transform_9, window_bounds = array<i64: 8, 8, 64>}, {pipeline_mode = #tpu.pipeline_mode<synchronous>, transform_indices = @transform_10, window_bounds = array<i64: 96, 128>}, {pipeline_mode = #tpu.pipeline_mode<synchronous>, transform_indices = @transform_11, window_bounds = array<i64: 8, 128>}, {transform_indices = @transform_12, window_bounds = array<i64: 6, 8, 128>}]} {
    %c0_i32 = arith.constant 0 : i32
    %0 = arith.cmpi eq, %arg0, %c0_i32 : i32
    %1 = arith.extui %0 : i1 to i32
    %c0_i32_0 = arith.constant 0 : i32
    %2 = arith.cmpi ne, %1, %c0_i32_0 : i32
    scf.if %2 {
      %c0_221 = arith.constant 0 : index
      %c0_222 = arith.constant 0 : index
      %c0_223 = arith.constant 0 : index
      %491 = vector.load %arg2[%c0_221, %c0_222, %c0_223] : memref<2x8x32xf32, #tpu.memory_space<vmem>>, vector<2x8x32xf32>
      %c0_224 = arith.constant 0 : index
      %c0_225 = arith.constant 0 : index
      %c0_226 = arith.constant 0 : index
      %492 = vector.load %arg14[%c0_224, %c0_225, %c0_226] : memref<2x8x32xf32, #tpu.memory_space<vmem>>, vector<2x8x32xf32>
      tpu.vector_store %arg14[%c0_224, %c0_225, %c0_226], %491 {strides = array<i32>} : memref<2x8x32xf32, #tpu.memory_space<vmem>>, vector<2x8x32xf32>,
      %c0_227 = arith.constant 0 : index
      %c0_228 = arith.constant 0 : index
      %c0_229 = arith.constant 0 : index
      %493 = vector.load %arg3[%c0_227, %c0_228, %c0_229] : memref<2x8x32xf32, #tpu.memory_space<vmem>>, vector<2x8x32xf32>
      %c0_230 = arith.constant 0 : index
      %c0_231 = arith.constant 0 : index
      %c0_232 = arith.constant 0 : index
      %494 = vector.load %arg15[%c0_230, %c0_231, %c0_232] : memref<2x8x32xf32, #tpu.memory_space<vmem>>, vector<2x8x32xf32>
      tpu.vector_store %arg15[%c0_230, %c0_231, %c0_232], %493 {strides = array<i32>} : memref<2x8x32xf32, #tpu.memory_space<vmem>>, vector<2x8x32xf32>,
    } else {
    }
    %c0 = arith.constant 0 : index
    %c0_1 = arith.constant 0 : index
    %c0_2 = arith.constant 0 : index
    %3 = vector.load %arg14[%c0, %c0_1, %c0_2] : memref<2x8x32xf32, #tpu.memory_space<vmem>>, vector<1x8x32xf32>
    %4 = vector.shape_cast %3 : vector<1x8x32xf32> to vector<8x32xf32>
    %c0_3 = arith.constant 0 : index
    %c0_4 = arith.constant 0 : index
    %c0_5 = arith.constant 0 : index
    %5 = vector.load %arg15[%c0_3, %c0_4, %c0_5] : memref<2x8x32xf32, #tpu.memory_space<vmem>>, vector<1x8x32xf32>
    %6 = vector.shape_cast %5 : vector<1x8x32xf32> to vector<8x32xf32>
    %c1 = arith.constant 1 : index
    %c0_6 = arith.constant 0 : index
    %c0_7 = arith.constant 0 : index
    %7 = vector.load %arg14[%c1, %c0_6, %c0_7] : memref<2x8x32xf32, #tpu.memory_space<vmem>>, vector<1x8x32xf32>
    %8 = vector.shape_cast %7 : vector<1x8x32xf32> to vector<8x32xf32>
    %c1_8 = arith.constant 1 : index
    %c0_9 = arith.constant 0 : index
    %c0_10 = arith.constant 0 : index
    %9 = vector.load %arg15[%c1_8, %c0_9, %c0_10] : memref<2x8x32xf32, #tpu.memory_space<vmem>>, vector<1x8x32xf32>
    %10 = vector.shape_cast %9 : vector<1x8x32xf32> to vector<8x32xf32>
    %c0_i32_11 = arith.constant 0 : i32
    %11 = arith.index_cast %c0_i32_11 : i32 to index
    %c0_12 = arith.constant 0 : index
    %c0_13 = arith.constant 0 : index
    %12 = vector.load %arg1[%11, %c0_12, %c0_13] : memref<6x8x64xf32, #tpu.memory_space<vmem>>, vector<1x8x64xf32>
    %13 = vector.shape_cast %12 : vector<1x8x64xf32> to vector<8x64xf32>
    %14 = tpu.concatenate %13, %4 in 1 : vector<8x64xf32>, vector<8x32xf32> -> vector<8x96xf32>
    %15 = arith.truncf %14 : vector<8x96xf32> to vector<8x96xbf16>
    %c0_14 = arith.constant 0 : index
    %c0_15 = arith.constant 0 : index
    %16 = vector.load %arg4[%c0_14, %c0_15] : memref<96x128xbf16, #tpu.memory_space<vmem>>, vector<96x128xbf16>
    %cst = arith.constant dense<0.000000e+00> : vector<8x128xf32>
    %17 = tpu.matmul %15, %16, %cst {dimension_numbers = #tpu.dot_dimension_numbers<[1], [0], [0], [1], [0, 0, 1, 1], [], []>} : vector<8x96xbf16>, vector<96x128xbf16>, vector<8x128xf32> -> vector<8x128xf32>
    %c0_16 = arith.constant 0 : index
    %c0_17 = arith.constant 0 : index
    %18 = vector.load %arg5[%c0_16, %c0_17] : memref<8x128xf32, #tpu.memory_space<vmem>>, vector<8x128xf32>
    %19 = arith.addf %17, %18 : vector<8x128xf32>
    %20 = arith.negf %19 : vector<8x128xf32>
    %21 = math.exp %20 : vector<8x128xf32>
    %cst_18 = arith.constant 1.000000e+00 : f32
    %22 = vector.broadcast %cst_18 : f32 to vector<8x128xf32>
    %23 = arith.addf %22, %21 : vector<8x128xf32>
    %24 = arith.divf %22, %23 : vector<8x128xf32>
    %25 = math.tanh %19 : vector<8x128xf32>
    %26 = vector.extract_strided_slice %24 {offsets = [0, 0], sizes = [8, 32], strides = [1, 1]} : vector<8x128xf32> to vector<8x32xf32>
    %27 = vector.extract_strided_slice %24 {offsets = [0, 32], sizes = [8, 32], strides = [1, 1]} : vector<8x128xf32> to vector<8x32xf32>
    %28 = vector.extract_strided_slice %25 {offsets = [0, 64], sizes = [8, 32], strides = [1, 1]} : vector<8x128xf32> to vector<8x32xf32>
    %29 = vector.extract_strided_slice %24 {offsets = [0, 96], sizes = [8, 32], strides = [1, 1]} : vector<8x128xf32> to vector<8x32xf32>
    %30 = arith.mulf %27, %6 : vector<8x32xf32>
    %31 = arith.mulf %26, %28 : vector<8x32xf32>
    %32 = arith.addf %30, %31 : vector<8x32xf32>
    %33 = math.tanh %32 : vector<8x32xf32>
    %34 = arith.mulf %29, %33 : vector<8x32xf32>
    %35 = tpu.concatenate %34, %8 in 1 : vector<8x32xf32>, vector<8x32xf32> -> vector<8x64xf32>
    %36 = arith.truncf %35 : vector<8x64xf32> to vector<8x64xbf16>
    %c0_19 = arith.constant 0 : index
    %c0_20 = arith.constant 0 : index
    %37 = vector.load %arg6[%c0_19, %c0_20] : memref<64x128xbf16, #tpu.memory_space<vmem>>, vector<64x128xbf16>
    %cst_21 = arith.constant dense<0.000000e+00> : vector<8x128xf32>
    %38 = tpu.matmul %36, %37, %cst_21 {dimension_numbers = #tpu.dot_dimension_numbers<[1], [0], [0], [1], [0, 0, 1, 1], [], []>} : vector<8x64xbf16>, vector<64x128xbf16>, vector<8x128xf32> -> vector<8x128xf32>
    %c0_22 = arith.constant 0 : index
    %c0_23 = arith.constant 0 : index
    %39 = vector.load %arg7[%c0_22, %c0_23] : memref<8x128xf32, #tpu.memory_space<vmem>>, vector<8x128xf32>
    %40 = arith.addf %38, %39 : vector<8x128xf32>
    %41 = arith.negf %40 : vector<8x128xf32>
    %42 = math.exp %41 : vector<8x128xf32>
    %cst_24 = arith.constant 1.000000e+00 : f32
    %43 = vector.broadcast %cst_24 : f32 to vector<8x128xf32>
    %44 = arith.addf %43, %42 : vector<8x128xf32>
    %45 = arith.divf %43, %44 : vector<8x128xf32>
    %46 = math.tanh %40 : vector<8x128xf32>
    %47 = vector.extract_strided_slice %45 {offsets = [0, 0], sizes = [8, 32], strides = [1, 1]} : vector<8x128xf32> to vector<8x32xf32>
    %48 = vector.extract_strided_slice %45 {offsets = [0, 32], sizes = [8, 32], strides = [1, 1]} : vector<8x128xf32> to vector<8x32xf32>
    %49 = vector.extract_strided_slice %46 {offsets = [0, 64], sizes = [8, 32], strides = [1, 1]} : vector<8x128xf32> to vector<8x32xf32>
    %50 = vector.extract_strided_slice %45 {offsets = [0, 96], sizes = [8, 32], strides = [1, 1]} : vector<8x128xf32> to vector<8x32xf32>
    %51 = arith.mulf %48, %10 : vector<8x32xf32>
    %52 = arith.mulf %47, %49 : vector<8x32xf32>
    %53 = arith.addf %51, %52 : vector<8x32xf32>
    %54 = math.tanh %53 : vector<8x32xf32>
    %55 = arith.mulf %50, %54 : vector<8x32xf32>
    %56 = vector.shape_cast %55 : vector<8x32xf32> to vector<8x1x32xf32>
    %c0_25 = arith.constant 0 : index
    %c0_26 = arith.constant 0 : index
    %c0_27 = arith.constant 0 : index
    %57 = vector.load %arg8[%c0_25, %c0_26, %c0_27] : memref<8x8x32xf32, #tpu.memory_space<vmem>>, vector<8x8x32xf32>
    %58 = vector.broadcast %56 : vector<8x1x32xf32> to vector<8x8x32xf32>
    %59 = arith.mulf %58, %57 : vector<8x8x32xf32>
    %cst_28 = arith.constant dense<0.000000e+00> : vector<8x8xf32>
    %60 = vector.multi_reduction <add>, %59, %cst_28 [2] : vector<8x8x32xf32> to vector<8x8xf32>
    %c0_29 = arith.constant 0 : index
    %c0_30 = arith.constant 0 : index
    %61 = vector.load %arg9[%c0_29, %c0_30] : memref<8x8xf32, #tpu.memory_space<vmem>>, vector<8x8xf32>
    %62 = arith.addf %60, %61 : vector<8x8xf32>
    %cst_31 = arith.constant dense<0xFF800000> : vector<8xf32>
    %63 = vector.multi_reduction <maximumf>, %62, %cst_31 [1] : vector<8x8xf32> to vector<8xf32>
    %64 = vector.shape_cast %63 : vector<8xf32> to vector<8x1xf32>
    %65 = vector.broadcast %64 : vector<8x1xf32> to vector<8x8xf32>
    %66 = arith.subf %62, %65 : vector<8x8xf32>
    %67 = math.exp %66 : vector<8x8xf32>
    %cst_32 = arith.constant dense<0.000000e+00> : vector<8xf32>
    %68 = vector.multi_reduction <add>, %67, %cst_32 [1] : vector<8x8xf32> to vector<8xf32>
    %69 = vector.shape_cast %68 : vector<8xf32> to vector<8x1xf32>
    %70 = tpu.reciprocal %69 : vector<8x1xf32> -> vector<8x1xf32>
    %71 = vector.broadcast %70 : vector<8x1xf32> to vector<8x8xf32>
    %72 = arith.mulf %67, %71 : vector<8x8xf32>
    %73 = vector.shape_cast %72 : vector<8x8xf32> to vector<8x8x1xf32>
    %c0_33 = arith.constant 0 : index
    %c0_34 = arith.constant 0 : index
    %c0_35 = arith.constant 0 : index
    %74 = vector.load %arg10[%c0_33, %c0_34, %c0_35] : memref<8x8x64xf32, #tpu.memory_space<vmem>>, vector<8x8x64xf32>
    %75 = vector.broadcast %73 : vector<8x8x1xf32> to vector<8x8x64xf32>
    %76 = arith.mulf %75, %74 : vector<8x8x64xf32>
    %cst_36 = arith.constant dense<0.000000e+00> : vector<8x64xf32>
    %77 = vector.multi_reduction <add>, %76, %cst_36 [1] : vector<8x8x64xf32> to vector<8x64xf32>
    %78 = tpu.concatenate %55, %77 in 1 : vector<8x32xf32>, vector<8x64xf32> -> vector<8x96xf32>
    %79 = arith.truncf %78 : vector<8x96xf32> to vector<8x96xbf16>
    %c0_37 = arith.constant 0 : index
    %c0_38 = arith.constant 0 : index
    %80 = vector.load %arg11[%c0_37, %c0_38] : memref<96x128xbf16, #tpu.memory_space<vmem>>, vector<96x128xbf16>
    %cst_39 = arith.constant dense<0.000000e+00> : vector<8x128xf32>
    %81 = tpu.matmul %79, %80, %cst_39 {dimension_numbers = #tpu.dot_dimension_numbers<[1], [0], [0], [1], [0, 0, 1, 1], [], []>} : vector<8x96xbf16>, vector<96x128xbf16>, vector<8x128xf32> -> vector<8x128xf32>
    %c0_40 = arith.constant 0 : index
    %c0_41 = arith.constant 0 : index
    %82 = vector.load %arg12[%c0_40, %c0_41] : memref<8x128xf32, #tpu.memory_space<vmem>>, vector<8x128xf32>
    %83 = arith.addf %81, %82 : vector<8x128xf32>
    %84 = math.tanh %83 : vector<8x128xf32>
    %85 = arith.index_cast %c0_i32_11 : i32 to index
    %c0_42 = arith.constant 0 : index
    %c0_43 = arith.constant 0 : index
    %86 = vector.load %arg13[%85, %c0_42, %c0_43] : memref<6x8x128xf32, #tpu.memory_space<vmem>>, vector<1x8x128xf32>
    %87 = vector.shape_cast %86 : vector<1x8x128xf32> to vector<8x128xf32>
    %88 = vector.shape_cast %84 : vector<8x128xf32> to vector<1x8x128xf32>
    tpu.vector_store %arg13[%85, %c0_42, %c0_43], %88 {strides = array<i32>} : memref<6x8x128xf32, #tpu.memory_space<vmem>>, vector<1x8x128xf32>,
    %c1_i32 = arith.constant 1 : i32
    %89 = arith.index_cast %c1_i32 : i32 to index
    %c0_44 = arith.constant 0 : index
    %c0_45 = arith.constant 0 : index
    %90 = vector.load %arg1[%89, %c0_44, %c0_45] : memref<6x8x64xf32, #tpu.memory_space<vmem>>, vector<1x8x64xf32>
    %91 = vector.shape_cast %90 : vector<1x8x64xf32> to vector<8x64xf32>
    %92 = tpu.concatenate %91, %34 in 1 : vector<8x64xf32>, vector<8x32xf32> -> vector<8x96xf32>
    %93 = arith.truncf %92 : vector<8x96xf32> to vector<8x96xbf16>
    %c0_46 = arith.constant 0 : index
    %c0_47 = arith.constant 0 : index
    %94 = vector.load %arg4[%c0_46, %c0_47] : memref<96x128xbf16, #tpu.memory_space<vmem>>, vector<96x128xbf16>
    %cst_48 = arith.constant dense<0.000000e+00> : vector<8x128xf32>
    %95 = tpu.matmul %93, %94, %cst_48 {dimension_numbers = #tpu.dot_dimension_numbers<[1], [0], [0], [1], [0, 0, 1, 1], [], []>} : vector<8x96xbf16>, vector<96x128xbf16>, vector<8x128xf32> -> vector<8x128xf32>
    %c0_49 = arith.constant 0 : index
    %c0_50 = arith.constant 0 : index
    %96 = vector.load %arg5[%c0_49, %c0_50] : memref<8x128xf32, #tpu.memory_space<vmem>>, vector<8x128xf32>
    %97 = arith.addf %95, %96 : vector<8x128xf32>
    %98 = arith.negf %97 : vector<8x128xf32>
    %99 = math.exp %98 : vector<8x128xf32>
    %cst_51 = arith.constant 1.000000e+00 : f32
    %100 = vector.broadcast %cst_51 : f32 to vector<8x128xf32>
    %101 = arith.addf %100, %99 : vector<8x128xf32>
    %102 = arith.divf %100, %101 : vector<8x128xf32>
    %103 = math.tanh %97 : vector<8x128xf32>
    %104 = vector.extract_strided_slice %102 {offsets = [0, 0], sizes = [8, 32], strides = [1, 1]} : vector<8x128xf32> to vector<8x32xf32>
    %105 = vector.extract_strided_slice %102 {offsets = [0, 32], sizes = [8, 32], strides = [1, 1]} : vector<8x128xf32> to vector<8x32xf32>
    %106 = vector.extract_strided_slice %103 {offsets = [0, 64], sizes = [8, 32], strides = [1, 1]} : vector<8x128xf32> to vector<8x32xf32>
    %107 = vector.extract_strided_slice %102 {offsets = [0, 96], sizes = [8, 32], strides = [1, 1]} : vector<8x128xf32> to vector<8x32xf32>
    %108 = arith.mulf %105, %32 : vector<8x32xf32>
    %109 = arith.mulf %104, %106 : vector<8x32xf32>
    %110 = arith.addf %108, %109 : vector<8x32xf32>
    %111 = math.tanh %110 : vector<8x32xf32>
    %112 = arith.mulf %107, %111 : vector<8x32xf32>
    %113 = tpu.concatenate %112, %55 in 1 : vector<8x32xf32>, vector<8x32xf32> -> vector<8x64xf32>
    %114 = arith.truncf %113 : vector<8x64xf32> to vector<8x64xbf16>
    %c0_52 = arith.constant 0 : index
    %c0_53 = arith.constant 0 : index
    %115 = vector.load %arg6[%c0_52, %c0_53] : memref<64x128xbf16, #tpu.memory_space<vmem>>, vector<64x128xbf16>
    %cst_54 = arith.constant dense<0.000000e+00> : vector<8x128xf32>
    %116 = tpu.matmul %114, %115, %cst_54 {dimension_numbers = #tpu.dot_dimension_numbers<[1], [0], [0], [1], [0, 0, 1, 1], [], []>} : vector<8x64xbf16>, vector<64x128xbf16>, vector<8x128xf32> -> vector<8x128xf32>
    %c0_55 = arith.constant 0 : index
    %c0_56 = arith.constant 0 : index
    %117 = vector.load %arg7[%c0_55, %c0_56] : memref<8x128xf32, #tpu.memory_space<vmem>>, vector<8x128xf32>
    %118 = arith.addf %116, %117 : vector<8x128xf32>
    %119 = arith.negf %118 : vector<8x128xf32>
    %120 = math.exp %119 : vector<8x128xf32>
    %cst_57 = arith.constant 1.000000e+00 : f32
    %121 = vector.broadcast %cst_57 : f32 to vector<8x128xf32>
    %122 = arith.addf %121, %120 : vector<8x128xf32>
    %123 = arith.divf %121, %122 : vector<8x128xf32>
    %124 = math.tanh %118 : vector<8x128xf32>
    %125 = vector.extract_strided_slice %123 {offsets = [0, 0], sizes = [8, 32], strides = [1, 1]} : vector<8x128xf32> to vector<8x32xf32>
    %126 = vector.extract_strided_slice %123 {offsets = [0, 32], sizes = [8, 32], strides = [1, 1]} : vector<8x128xf32> to vector<8x32xf32>
    %127 = vector.extract_strided_slice %124 {offsets = [0, 64], sizes = [8, 32], strides = [1, 1]} : vector<8x128xf32> to vector<8x32xf32>
    %128 = vector.extract_strided_slice %123 {offsets = [0, 96], sizes = [8, 32], strides = [1, 1]} : vector<8x128xf32> to vector<8x32xf32>
    %129 = arith.mulf %126, %53 : vector<8x32xf32>
    %130 = arith.mulf %125, %127 : vector<8x32xf32>
    %131 = arith.addf %129, %130 : vector<8x32xf32>
    %132 = math.tanh %131 : vector<8x32xf32>
    %133 = arith.mulf %128, %132 : vector<8x32xf32>
    %134 = vector.shape_cast %133 : vector<8x32xf32> to vector<8x1x32xf32>
    %c0_58 = arith.constant 0 : index
    %c0_59 = arith.constant 0 : index
    %c0_60 = arith.constant 0 : index
    %135 = vector.load %arg8[%c0_58, %c0_59, %c0_60] : memref<8x8x32xf32, #tpu.memory_space<vmem>>, vector<8x8x32xf32>
    %136 = vector.broadcast %134 : vector<8x1x32xf32> to vector<8x8x32xf32>
    %137 = arith.mulf %136, %135 : vector<8x8x32xf32>
    %cst_61 = arith.constant dense<0.000000e+00> : vector<8x8xf32>
    %138 = vector.multi_reduction <add>, %137, %cst_61 [2] : vector<8x8x32xf32> to vector<8x8xf32>
    %c0_62 = arith.constant 0 : index
    %c0_63 = arith.constant 0 : index
    %139 = vector.load %arg9[%c0_62, %c0_63] : memref<8x8xf32, #tpu.memory_space<vmem>>, vector<8x8xf32>
    %140 = arith.addf %138, %139 : vector<8x8xf32>
    %cst_64 = arith.constant dense<0xFF800000> : vector<8xf32>
    %141 = vector.multi_reduction <maximumf>, %140, %cst_64 [1] : vector<8x8xf32> to vector<8xf32>
    %142 = vector.shape_cast %141 : vector<8xf32> to vector<8x1xf32>
    %143 = vector.broadcast %142 : vector<8x1xf32> to vector<8x8xf32>
    %144 = arith.subf %140, %143 : vector<8x8xf32>
    %145 = math.exp %144 : vector<8x8xf32>
    %cst_65 = arith.constant dense<0.000000e+00> : vector<8xf32>
    %146 = vector.multi_reduction <add>, %145, %cst_65 [1] : vector<8x8xf32> to vector<8xf32>
    %147 = vector.shape_cast %146 : vector<8xf32> to vector<8x1xf32>
    %148 = tpu.reciprocal %147 : vector<8x1xf32> -> vector<8x1xf32>
    %149 = vector.broadcast %148 : vector<8x1xf32> to vector<8x8xf32>
    %150 = arith.mulf %145, %149 : vector<8x8xf32>
    %151 = vector.shape_cast %150 : vector<8x8xf32> to vector<8x8x1xf32>
    %c0_66 = arith.constant 0 : index
    %c0_67 = arith.constant 0 : index
    %c0_68 = arith.constant 0 : index
    %152 = vector.load %arg10[%c0_66, %c0_67, %c0_68] : memref<8x8x64xf32, #tpu.memory_space<vmem>>, vector<8x8x64xf32>
    %153 = vector.broadcast %151 : vector<8x8x1xf32> to vector<8x8x64xf32>
    %154 = arith.mulf %153, %152 : vector<8x8x64xf32>
    %cst_69 = arith.constant dense<0.000000e+00> : vector<8x64xf32>
    %155 = vector.multi_reduction <add>, %154, %cst_69 [1] : vector<8x8x64xf32> to vector<8x64xf32>
    %156 = tpu.concatenate %133, %155 in 1 : vector<8x32xf32>, vector<8x64xf32> -> vector<8x96xf32>
    %157 = arith.truncf %156 : vector<8x96xf32> to vector<8x96xbf16>
    %c0_70 = arith.constant 0 : index
    %c0_71 = arith.constant 0 : index
    %158 = vector.load %arg11[%c0_70, %c0_71] : memref<96x128xbf16, #tpu.memory_space<vmem>>, vector<96x128xbf16>
    %cst_72 = arith.constant dense<0.000000e+00> : vector<8x128xf32>
    %159 = tpu.matmul %157, %158, %cst_72 {dimension_numbers = #tpu.dot_dimension_numbers<[1], [0], [0], [1], [0, 0, 1, 1], [], []>} : vector<8x96xbf16>, vector<96x128xbf16>, vector<8x128xf32> -> vector<8x128xf32>
    %c0_73 = arith.constant 0 : index
    %c0_74 = arith.constant 0 : index
    %160 = vector.load %arg12[%c0_73, %c0_74] : memref<8x128xf32, #tpu.memory_space<vmem>>, vector<8x128xf32>
    %161 = arith.addf %159, %160 : vector<8x128xf32>
    %162 = math.tanh %161 : vector<8x128xf32>
    %163 = arith.index_cast %c1_i32 : i32 to index
    %c0_75 = arith.constant 0 : index
    %c0_76 = arith.constant 0 : index
    %164 = vector.load %arg13[%163, %c0_75, %c0_76] : memref<6x8x128xf32, #tpu.memory_space<vmem>>, vector<1x8x128xf32>
    %165 = vector.shape_cast %164 : vector<1x8x128xf32> to vector<8x128xf32>
    %166 = vector.shape_cast %162 : vector<8x128xf32> to vector<1x8x128xf32>
    tpu.vector_store %arg13[%163, %c0_75, %c0_76], %166 {strides = array<i32>} : memref<6x8x128xf32, #tpu.memory_space<vmem>>, vector<1x8x128xf32>,
    %c2_i32 = arith.constant 2 : i32
    %167 = arith.index_cast %c2_i32 : i32 to index
    %c0_77 = arith.constant 0 : index
    %c0_78 = arith.constant 0 : index
    %168 = vector.load %arg1[%167, %c0_77, %c0_78] : memref<6x8x64xf32, #tpu.memory_space<vmem>>, vector<1x8x64xf32>
    %169 = vector.shape_cast %168 : vector<1x8x64xf32> to vector<8x64xf32>
    %170 = tpu.concatenate %169, %112 in 1 : vector<8x64xf32>, vector<8x32xf32> -> vector<8x96xf32>
    %171 = arith.truncf %170 : vector<8x96xf32> to vector<8x96xbf16>
    %c0_79 = arith.constant 0 : index
    %c0_80 = arith.constant 0 : index
    %172 = vector.load %arg4[%c0_79, %c0_80] : memref<96x128xbf16, #tpu.memory_space<vmem>>, vector<96x128xbf16>
    %cst_81 = arith.constant dense<0.000000e+00> : vector<8x128xf32>
    %173 = tpu.matmul %171, %172, %cst_81 {dimension_numbers = #tpu.dot_dimension_numbers<[1], [0], [0], [1], [0, 0, 1, 1], [], []>} : vector<8x96xbf16>, vector<96x128xbf16>, vector<8x128xf32> -> vector<8x128xf32>
    %c0_82 = arith.constant 0 : index
    %c0_83 = arith.constant 0 : index
    %174 = vector.load %arg5[%c0_82, %c0_83] : memref<8x128xf32, #tpu.memory_space<vmem>>, vector<8x128xf32>
    %175 = arith.addf %173, %174 : vector<8x128xf32>
    %176 = arith.negf %175 : vector<8x128xf32>
    %177 = math.exp %176 : vector<8x128xf32>
    %cst_84 = arith.constant 1.000000e+00 : f32
    %178 = vector.broadcast %cst_84 : f32 to vector<8x128xf32>
    %179 = arith.addf %178, %177 : vector<8x128xf32>
    %180 = arith.divf %178, %179 : vector<8x128xf32>
    %181 = math.tanh %175 : vector<8x128xf32>
    %182 = vector.extract_strided_slice %180 {offsets = [0, 0], sizes = [8, 32], strides = [1, 1]} : vector<8x128xf32> to vector<8x32xf32>
    %183 = vector.extract_strided_slice %180 {offsets = [0, 32], sizes = [8, 32], strides = [1, 1]} : vector<8x128xf32> to vector<8x32xf32>
    %184 = vector.extract_strided_slice %181 {offsets = [0, 64], sizes = [8, 32], strides = [1, 1]} : vector<8x128xf32> to vector<8x32xf32>
    %185 = vector.extract_strided_slice %180 {offsets = [0, 96], sizes = [8, 32], strides = [1, 1]} : vector<8x128xf32> to vector<8x32xf32>
    %186 = arith.mulf %183, %110 : vector<8x32xf32>
    %187 = arith.mulf %182, %184 : vector<8x32xf32>
    %188 = arith.addf %186, %187 : vector<8x32xf32>
    %189 = math.tanh %188 : vector<8x32xf32>
    %190 = arith.mulf %185, %189 : vector<8x32xf32>
    %191 = tpu.concatenate %190, %133 in 1 : vector<8x32xf32>, vector<8x32xf32> -> vector<8x64xf32>
    %192 = arith.truncf %191 : vector<8x64xf32> to vector<8x64xbf16>
    %c0_85 = arith.constant 0 : index
    %c0_86 = arith.constant 0 : index
    %193 = vector.load %arg6[%c0_85, %c0_86] : memref<64x128xbf16, #tpu.memory_space<vmem>>, vector<64x128xbf16>
    %cst_87 = arith.constant dense<0.000000e+00> : vector<8x128xf32>
    %194 = tpu.matmul %192, %193, %cst_87 {dimension_numbers = #tpu.dot_dimension_numbers<[1], [0], [0], [1], [0, 0, 1, 1], [], []>} : vector<8x64xbf16>, vector<64x128xbf16>, vector<8x128xf32> -> vector<8x128xf32>
    %c0_88 = arith.constant 0 : index
    %c0_89 = arith.constant 0 : index
    %195 = vector.load %arg7[%c0_88, %c0_89] : memref<8x128xf32, #tpu.memory_space<vmem>>, vector<8x128xf32>
    %196 = arith.addf %194, %195 : vector<8x128xf32>
    %197 = arith.negf %196 : vector<8x128xf32>
    %198 = math.exp %197 : vector<8x128xf32>
    %cst_90 = arith.constant 1.000000e+00 : f32
    %199 = vector.broadcast %cst_90 : f32 to vector<8x128xf32>
    %200 = arith.addf %199, %198 : vector<8x128xf32>
    %201 = arith.divf %199, %200 : vector<8x128xf32>
    %202 = math.tanh %196 : vector<8x128xf32>
    %203 = vector.extract_strided_slice %201 {offsets = [0, 0], sizes = [8, 32], strides = [1, 1]} : vector<8x128xf32> to vector<8x32xf32>
    %204 = vector.extract_strided_slice %201 {offsets = [0, 32], sizes = [8, 32], strides = [1, 1]} : vector<8x128xf32> to vector<8x32xf32>
    %205 = vector.extract_strided_slice %202 {offsets = [0, 64], sizes = [8, 32], strides = [1, 1]} : vector<8x128xf32> to vector<8x32xf32>
    %206 = vector.extract_strided_slice %201 {offsets = [0, 96], sizes = [8, 32], strides = [1, 1]} : vector<8x128xf32> to vector<8x32xf32>
    %207 = arith.mulf %204, %131 : vector<8x32xf32>
    %208 = arith.mulf %203, %205 : vector<8x32xf32>
    %209 = arith.addf %207, %208 : vector<8x32xf32>
    %210 = math.tanh %209 : vector<8x32xf32>
    %211 = arith.mulf %206, %210 : vector<8x32xf32>
    %212 = vector.shape_cast %211 : vector<8x32xf32> to vector<8x1x32xf32>
    %c0_91 = arith.constant 0 : index
    %c0_92 = arith.constant 0 : index
    %c0_93 = arith.constant 0 : index
    %213 = vector.load %arg8[%c0_91, %c0_92, %c0_93] : memref<8x8x32xf32, #tpu.memory_space<vmem>>, vector<8x8x32xf32>
    %214 = vector.broadcast %212 : vector<8x1x32xf32> to vector<8x8x32xf32>
    %215 = arith.mulf %214, %213 : vector<8x8x32xf32>
    %cst_94 = arith.constant dense<0.000000e+00> : vector<8x8xf32>
    %216 = vector.multi_reduction <add>, %215, %cst_94 [2] : vector<8x8x32xf32> to vector<8x8xf32>
    %c0_95 = arith.constant 0 : index
    %c0_96 = arith.constant 0 : index
    %217 = vector.load %arg9[%c0_95, %c0_96] : memref<8x8xf32, #tpu.memory_space<vmem>>, vector<8x8xf32>
    %218 = arith.addf %216, %217 : vector<8x8xf32>
    %cst_97 = arith.constant dense<0xFF800000> : vector<8xf32>
    %219 = vector.multi_reduction <maximumf>, %218, %cst_97 [1] : vector<8x8xf32> to vector<8xf32>
    %220 = vector.shape_cast %219 : vector<8xf32> to vector<8x1xf32>
    %221 = vector.broadcast %220 : vector<8x1xf32> to vector<8x8xf32>
    %222 = arith.subf %218, %221 : vector<8x8xf32>
    %223 = math.exp %222 : vector<8x8xf32>
    %cst_98 = arith.constant dense<0.000000e+00> : vector<8xf32>
    %224 = vector.multi_reduction <add>, %223, %cst_98 [1] : vector<8x8xf32> to vector<8xf32>
    %225 = vector.shape_cast %224 : vector<8xf32> to vector<8x1xf32>
    %226 = tpu.reciprocal %225 : vector<8x1xf32> -> vector<8x1xf32>
    %227 = vector.broadcast %226 : vector<8x1xf32> to vector<8x8xf32>
    %228 = arith.mulf %223, %227 : vector<8x8xf32>
    %229 = vector.shape_cast %228 : vector<8x8xf32> to vector<8x8x1xf32>
    %c0_99 = arith.constant 0 : index
    %c0_100 = arith.constant 0 : index
    %c0_101 = arith.constant 0 : index
    %230 = vector.load %arg10[%c0_99, %c0_100, %c0_101] : memref<8x8x64xf32, #tpu.memory_space<vmem>>, vector<8x8x64xf32>
    %231 = vector.broadcast %229 : vector<8x8x1xf32> to vector<8x8x64xf32>
    %232 = arith.mulf %231, %230 : vector<8x8x64xf32>
    %cst_102 = arith.constant dense<0.000000e+00> : vector<8x64xf32>
    %233 = vector.multi_reduction <add>, %232, %cst_102 [1] : vector<8x8x64xf32> to vector<8x64xf32>
    %234 = tpu.concatenate %211, %233 in 1 : vector<8x32xf32>, vector<8x64xf32> -> vector<8x96xf32>
    %235 = arith.truncf %234 : vector<8x96xf32> to vector<8x96xbf16>
    %c0_103 = arith.constant 0 : index
    %c0_104 = arith.constant 0 : index
    %236 = vector.load %arg11[%c0_103, %c0_104] : memref<96x128xbf16, #tpu.memory_space<vmem>>, vector<96x128xbf16>
    %cst_105 = arith.constant dense<0.000000e+00> : vector<8x128xf32>
    %237 = tpu.matmul %235, %236, %cst_105 {dimension_numbers = #tpu.dot_dimension_numbers<[1], [0], [0], [1], [0, 0, 1, 1], [], []>} : vector<8x96xbf16>, vector<96x128xbf16>, vector<8x128xf32> -> vector<8x128xf32>
    %c0_106 = arith.constant 0 : index
    %c0_107 = arith.constant 0 : index
    %238 = vector.load %arg12[%c0_106, %c0_107] : memref<8x128xf32, #tpu.memory_space<vmem>>, vector<8x128xf32>
    %239 = arith.addf %237, %238 : vector<8x128xf32>
    %240 = math.tanh %239 : vector<8x128xf32>
    %241 = arith.index_cast %c2_i32 : i32 to index
    %c0_108 = arith.constant 0 : index
    %c0_109 = arith.constant 0 : index
    %242 = vector.load %arg13[%241, %c0_108, %c0_109] : memref<6x8x128xf32, #tpu.memory_space<vmem>>, vector<1x8x128xf32>
    %243 = vector.shape_cast %242 : vector<1x8x128xf32> to vector<8x128xf32>
    %244 = vector.shape_cast %240 : vector<8x128xf32> to vector<1x8x128xf32>
    tpu.vector_store %arg13[%241, %c0_108, %c0_109], %244 {strides = array<i32>} : memref<6x8x128xf32, #tpu.memory_space<vmem>>, vector<1x8x128xf32>,
    %c3_i32 = arith.constant 3 : i32
    %245 = arith.index_cast %c3_i32 : i32 to index
    %c0_110 = arith.constant 0 : index
    %c0_111 = arith.constant 0 : index
    %246 = vector.load %arg1[%245, %c0_110, %c0_111] : memref<6x8x64xf32, #tpu.memory_space<vmem>>, vector<1x8x64xf32>
    %247 = vector.shape_cast %246 : vector<1x8x64xf32> to vector<8x64xf32>
    %248 = tpu.concatenate %247, %190 in 1 : vector<8x64xf32>, vector<8x32xf32> -> vector<8x96xf32>
    %249 = arith.truncf %248 : vector<8x96xf32> to vector<8x96xbf16>
    %c0_112 = arith.constant 0 : index
    %c0_113 = arith.constant 0 : index
    %250 = vector.load %arg4[%c0_112, %c0_113] : memref<96x128xbf16, #tpu.memory_space<vmem>>, vector<96x128xbf16>
    %cst_114 = arith.constant dense<0.000000e+00> : vector<8x128xf32>
    %251 = tpu.matmul %249, %250, %cst_114 {dimension_numbers = #tpu.dot_dimension_numbers<[1], [0], [0], [1], [0, 0, 1, 1], [], []>} : vector<8x96xbf16>, vector<96x128xbf16>, vector<8x128xf32> -> vector<8x128xf32>
    %c0_115 = arith.constant 0 : index
    %c0_116 = arith.constant 0 : index
    %252 = vector.load %arg5[%c0_115, %c0_116] : memref<8x128xf32, #tpu.memory_space<vmem>>, vector<8x128xf32>
    %253 = arith.addf %251, %252 : vector<8x128xf32>
    %254 = arith.negf %253 : vector<8x128xf32>
    %255 = math.exp %254 : vector<8x128xf32>
    %cst_117 = arith.constant 1.000000e+00 : f32
    %256 = vector.broadcast %cst_117 : f32 to vector<8x128xf32>
    %257 = arith.addf %256, %255 : vector<8x128xf32>
    %258 = arith.divf %256, %257 : vector<8x128xf32>
    %259 = math.tanh %253 : vector<8x128xf32>
    %260 = vector.extract_strided_slice %258 {offsets = [0, 0], sizes = [8, 32], strides = [1, 1]} : vector<8x128xf32> to vector<8x32xf32>
    %261 = vector.extract_strided_slice %258 {offsets = [0, 32], sizes = [8, 32], strides = [1, 1]} : vector<8x128xf32> to vector<8x32xf32>
    %262 = vector.extract_strided_slice %259 {offsets = [0, 64], sizes = [8, 32], strides = [1, 1]} : vector<8x128xf32> to vector<8x32xf32>
    %263 = vector.extract_strided_slice %258 {offsets = [0, 96], sizes = [8, 32], strides = [1, 1]} : vector<8x128xf32> to vector<8x32xf32>
    %264 = arith.mulf %261, %188 : vector<8x32xf32>
    %265 = arith.mulf %260, %262 : vector<8x32xf32>
    %266 = arith.addf %264, %265 : vector<8x32xf32>
    %267 = math.tanh %266 : vector<8x32xf32>
    %268 = arith.mulf %263, %267 : vector<8x32xf32>
    %269 = tpu.concatenate %268, %211 in 1 : vector<8x32xf32>, vector<8x32xf32> -> vector<8x64xf32>
    %270 = arith.truncf %269 : vector<8x64xf32> to vector<8x64xbf16>
    %c0_118 = arith.constant 0 : index
    %c0_119 = arith.constant 0 : index
    %271 = vector.load %arg6[%c0_118, %c0_119] : memref<64x128xbf16, #tpu.memory_space<vmem>>, vector<64x128xbf16>
    %cst_120 = arith.constant dense<0.000000e+00> : vector<8x128xf32>
    %272 = tpu.matmul %270, %271, %cst_120 {dimension_numbers = #tpu.dot_dimension_numbers<[1], [0], [0], [1], [0, 0, 1, 1], [], []>} : vector<8x64xbf16>, vector<64x128xbf16>, vector<8x128xf32> -> vector<8x128xf32>
    %c0_121 = arith.constant 0 : index
    %c0_122 = arith.constant 0 : index
    %273 = vector.load %arg7[%c0_121, %c0_122] : memref<8x128xf32, #tpu.memory_space<vmem>>, vector<8x128xf32>
    %274 = arith.addf %272, %273 : vector<8x128xf32>
    %275 = arith.negf %274 : vector<8x128xf32>
    %276 = math.exp %275 : vector<8x128xf32>
    %cst_123 = arith.constant 1.000000e+00 : f32
    %277 = vector.broadcast %cst_123 : f32 to vector<8x128xf32>
    %278 = arith.addf %277, %276 : vector<8x128xf32>
    %279 = arith.divf %277, %278 : vector<8x128xf32>
    %280 = math.tanh %274 : vector<8x128xf32>
    %281 = vector.extract_strided_slice %279 {offsets = [0, 0], sizes = [8, 32], strides = [1, 1]} : vector<8x128xf32> to vector<8x32xf32>
    %282 = vector.extract_strided_slice %279 {offsets = [0, 32], sizes = [8, 32], strides = [1, 1]} : vector<8x128xf32> to vector<8x32xf32>
    %283 = vector.extract_strided_slice %280 {offsets = [0, 64], sizes = [8, 32], strides = [1, 1]} : vector<8x128xf32> to vector<8x32xf32>
    %284 = vector.extract_strided_slice %279 {offsets = [0, 96], sizes = [8, 32], strides = [1, 1]} : vector<8x128xf32> to vector<8x32xf32>
    %285 = arith.mulf %282, %209 : vector<8x32xf32>
    %286 = arith.mulf %281, %283 : vector<8x32xf32>
    %287 = arith.addf %285, %286 : vector<8x32xf32>
    %288 = math.tanh %287 : vector<8x32xf32>
    %289 = arith.mulf %284, %288 : vector<8x32xf32>
    %290 = vector.shape_cast %289 : vector<8x32xf32> to vector<8x1x32xf32>
    %c0_124 = arith.constant 0 : index
    %c0_125 = arith.constant 0 : index
    %c0_126 = arith.constant 0 : index
    %291 = vector.load %arg8[%c0_124, %c0_125, %c0_126] : memref<8x8x32xf32, #tpu.memory_space<vmem>>, vector<8x8x32xf32>
    %292 = vector.broadcast %290 : vector<8x1x32xf32> to vector<8x8x32xf32>
    %293 = arith.mulf %292, %291 : vector<8x8x32xf32>
    %cst_127 = arith.constant dense<0.000000e+00> : vector<8x8xf32>
    %294 = vector.multi_reduction <add>, %293, %cst_127 [2] : vector<8x8x32xf32> to vector<8x8xf32>
    %c0_128 = arith.constant 0 : index
    %c0_129 = arith.constant 0 : index
    %295 = vector.load %arg9[%c0_128, %c0_129] : memref<8x8xf32, #tpu.memory_space<vmem>>, vector<8x8xf32>
    %296 = arith.addf %294, %295 : vector<8x8xf32>
    %cst_130 = arith.constant dense<0xFF800000> : vector<8xf32>
    %297 = vector.multi_reduction <maximumf>, %296, %cst_130 [1] : vector<8x8xf32> to vector<8xf32>
    %298 = vector.shape_cast %297 : vector<8xf32> to vector<8x1xf32>
    %299 = vector.broadcast %298 : vector<8x1xf32> to vector<8x8xf32>
    %300 = arith.subf %296, %299 : vector<8x8xf32>
    %301 = math.exp %300 : vector<8x8xf32>
    %cst_131 = arith.constant dense<0.000000e+00> : vector<8xf32>
    %302 = vector.multi_reduction <add>, %301, %cst_131 [1] : vector<8x8xf32> to vector<8xf32>
    %303 = vector.shape_cast %302 : vector<8xf32> to vector<8x1xf32>
    %304 = tpu.reciprocal %303 : vector<8x1xf32> -> vector<8x1xf32>
    %305 = vector.broadcast %304 : vector<8x1xf32> to vector<8x8xf32>
    %306 = arith.mulf %301, %305 : vector<8x8xf32>
    %307 = vector.shape_cast %306 : vector<8x8xf32> to vector<8x8x1xf32>
    %c0_132 = arith.constant 0 : index
    %c0_133 = arith.constant 0 : index
    %c0_134 = arith.constant 0 : index
    %308 = vector.load %arg10[%c0_132, %c0_133, %c0_134] : memref<8x8x64xf32, #tpu.memory_space<vmem>>, vector<8x8x64xf32>
    %309 = vector.broadcast %307 : vector<8x8x1xf32> to vector<8x8x64xf32>
    %310 = arith.mulf %309, %308 : vector<8x8x64xf32>
    %cst_135 = arith.constant dense<0.000000e+00> : vector<8x64xf32>
    %311 = vector.multi_reduction <add>, %310, %cst_135 [1] : vector<8x8x64xf32> to vector<8x64xf32>
    %312 = tpu.concatenate %289, %311 in 1 : vector<8x32xf32>, vector<8x64xf32> -> vector<8x96xf32>
    %313 = arith.truncf %312 : vector<8x96xf32> to vector<8x96xbf16>
    %c0_136 = arith.constant 0 : index
    %c0_137 = arith.constant 0 : index
    %314 = vector.load %arg11[%c0_136, %c0_137] : memref<96x128xbf16, #tpu.memory_space<vmem>>, vector<96x128xbf16>
    %cst_138 = arith.constant dense<0.000000e+00> : vector<8x128xf32>
    %315 = tpu.matmul %313, %314, %cst_138 {dimension_numbers = #tpu.dot_dimension_numbers<[1], [0], [0], [1], [0, 0, 1, 1], [], []>} : vector<8x96xbf16>, vector<96x128xbf16>, vector<8x128xf32> -> vector<8x128xf32>
    %c0_139 = arith.constant 0 : index
    %c0_140 = arith.constant 0 : index
    %316 = vector.load %arg12[%c0_139, %c0_140] : memref<8x128xf32, #tpu.memory_space<vmem>>, vector<8x128xf32>
    %317 = arith.addf %315, %316 : vector<8x128xf32>
    %318 = math.tanh %317 : vector<8x128xf32>
    %319 = arith.index_cast %c3_i32 : i32 to index
    %c0_141 = arith.constant 0 : index
    %c0_142 = arith.constant 0 : index
    %320 = vector.load %arg13[%319, %c0_141, %c0_142] : memref<6x8x128xf32, #tpu.memory_space<vmem>>, vector<1x8x128xf32>
    %321 = vector.shape_cast %320 : vector<1x8x128xf32> to vector<8x128xf32>
    %322 = vector.shape_cast %318 : vector<8x128xf32> to vector<1x8x128xf32>
    tpu.vector_store %arg13[%319, %c0_141, %c0_142], %322 {strides = array<i32>} : memref<6x8x128xf32, #tpu.memory_space<vmem>>, vector<1x8x128xf32>,
    %c4_i32 = arith.constant 4 : i32
    %323 = arith.index_cast %c4_i32 : i32 to index
    %c0_143 = arith.constant 0 : index
    %c0_144 = arith.constant 0 : index
    %324 = vector.load %arg1[%323, %c0_143, %c0_144] : memref<6x8x64xf32, #tpu.memory_space<vmem>>, vector<1x8x64xf32>
    %325 = vector.shape_cast %324 : vector<1x8x64xf32> to vector<8x64xf32>
    %326 = tpu.concatenate %325, %268 in 1 : vector<8x64xf32>, vector<8x32xf32> -> vector<8x96xf32>
    %327 = arith.truncf %326 : vector<8x96xf32> to vector<8x96xbf16>
    %c0_145 = arith.constant 0 : index
    %c0_146 = arith.constant 0 : index
    %328 = vector.load %arg4[%c0_145, %c0_146] : memref<96x128xbf16, #tpu.memory_space<vmem>>, vector<96x128xbf16>
    %cst_147 = arith.constant dense<0.000000e+00> : vector<8x128xf32>
    %329 = tpu.matmul %327, %328, %cst_147 {dimension_numbers = #tpu.dot_dimension_numbers<[1], [0], [0], [1], [0, 0, 1, 1], [], []>} : vector<8x96xbf16>, vector<96x128xbf16>, vector<8x128xf32> -> vector<8x128xf32>
    %c0_148 = arith.constant 0 : index
    %c0_149 = arith.constant 0 : index
    %330 = vector.load %arg5[%c0_148, %c0_149] : memref<8x128xf32, #tpu.memory_space<vmem>>, vector<8x128xf32>
    %331 = arith.addf %329, %330 : vector<8x128xf32>
    %332 = arith.negf %331 : vector<8x128xf32>
    %333 = math.exp %332 : vector<8x128xf32>
    %cst_150 = arith.constant 1.000000e+00 : f32
    %334 = vector.broadcast %cst_150 : f32 to vector<8x128xf32>
    %335 = arith.addf %334, %333 : vector<8x128xf32>
    %336 = arith.divf %334, %335 : vector<8x128xf32>
    %337 = math.tanh %331 : vector<8x128xf32>
    %338 = vector.extract_strided_slice %336 {offsets = [0, 0], sizes = [8, 32], strides = [1, 1]} : vector<8x128xf32> to vector<8x32xf32>
    %339 = vector.extract_strided_slice %336 {offsets = [0, 32], sizes = [8, 32], strides = [1, 1]} : vector<8x128xf32> to vector<8x32xf32>
    %340 = vector.extract_strided_slice %337 {offsets = [0, 64], sizes = [8, 32], strides = [1, 1]} : vector<8x128xf32> to vector<8x32xf32>
    %341 = vector.extract_strided_slice %336 {offsets = [0, 96], sizes = [8, 32], strides = [1, 1]} : vector<8x128xf32> to vector<8x32xf32>
    %342 = arith.mulf %339, %266 : vector<8x32xf32>
    %343 = arith.mulf %338, %340 : vector<8x32xf32>
    %344 = arith.addf %342, %343 : vector<8x32xf32>
    %345 = math.tanh %344 : vector<8x32xf32>
    %346 = arith.mulf %341, %345 : vector<8x32xf32>
    %347 = tpu.concatenate %346, %289 in 1 : vector<8x32xf32>, vector<8x32xf32> -> vector<8x64xf32>
    %348 = arith.truncf %347 : vector<8x64xf32> to vector<8x64xbf16>
    %c0_151 = arith.constant 0 : index
    %c0_152 = arith.constant 0 : index
    %349 = vector.load %arg6[%c0_151, %c0_152] : memref<64x128xbf16, #tpu.memory_space<vmem>>, vector<64x128xbf16>
    %cst_153 = arith.constant dense<0.000000e+00> : vector<8x128xf32>
    %350 = tpu.matmul %348, %349, %cst_153 {dimension_numbers = #tpu.dot_dimension_numbers<[1], [0], [0], [1], [0, 0, 1, 1], [], []>} : vector<8x64xbf16>, vector<64x128xbf16>, vector<8x128xf32> -> vector<8x128xf32>
    %c0_154 = arith.constant 0 : index
    %c0_155 = arith.constant 0 : index
    %351 = vector.load %arg7[%c0_154, %c0_155] : memref<8x128xf32, #tpu.memory_space<vmem>>, vector<8x128xf32>
    %352 = arith.addf %350, %351 : vector<8x128xf32>
    %353 = arith.negf %352 : vector<8x128xf32>
    %354 = math.exp %353 : vector<8x128xf32>
    %cst_156 = arith.constant 1.000000e+00 : f32
    %355 = vector.broadcast %cst_156 : f32 to vector<8x128xf32>
    %356 = arith.addf %355, %354 : vector<8x128xf32>
    %357 = arith.divf %355, %356 : vector<8x128xf32>
    %358 = math.tanh %352 : vector<8x128xf32>
    %359 = vector.extract_strided_slice %357 {offsets = [0, 0], sizes = [8, 32], strides = [1, 1]} : vector<8x128xf32> to vector<8x32xf32>
    %360 = vector.extract_strided_slice %357 {offsets = [0, 32], sizes = [8, 32], strides = [1, 1]} : vector<8x128xf32> to vector<8x32xf32>
    %361 = vector.extract_strided_slice %358 {offsets = [0, 64], sizes = [8, 32], strides = [1, 1]} : vector<8x128xf32> to vector<8x32xf32>
    %362 = vector.extract_strided_slice %357 {offsets = [0, 96], sizes = [8, 32], strides = [1, 1]} : vector<8x128xf32> to vector<8x32xf32>
    %363 = arith.mulf %360, %287 : vector<8x32xf32>
    %364 = arith.mulf %359, %361 : vector<8x32xf32>
    %365 = arith.addf %363, %364 : vector<8x32xf32>
    %366 = math.tanh %365 : vector<8x32xf32>
    %367 = arith.mulf %362, %366 : vector<8x32xf32>
    %368 = vector.shape_cast %367 : vector<8x32xf32> to vector<8x1x32xf32>
    %c0_157 = arith.constant 0 : index
    %c0_158 = arith.constant 0 : index
    %c0_159 = arith.constant 0 : index
    %369 = vector.load %arg8[%c0_157, %c0_158, %c0_159] : memref<8x8x32xf32, #tpu.memory_space<vmem>>, vector<8x8x32xf32>
    %370 = vector.broadcast %368 : vector<8x1x32xf32> to vector<8x8x32xf32>
    %371 = arith.mulf %370, %369 : vector<8x8x32xf32>
    %cst_160 = arith.constant dense<0.000000e+00> : vector<8x8xf32>
    %372 = vector.multi_reduction <add>, %371, %cst_160 [2] : vector<8x8x32xf32> to vector<8x8xf32>
    %c0_161 = arith.constant 0 : index
    %c0_162 = arith.constant 0 : index
    %373 = vector.load %arg9[%c0_161, %c0_162] : memref<8x8xf32, #tpu.memory_space<vmem>>, vector<8x8xf32>
    %374 = arith.addf %372, %373 : vector<8x8xf32>
    %cst_163 = arith.constant dense<0xFF800000> : vector<8xf32>
    %375 = vector.multi_reduction <maximumf>, %374, %cst_163 [1] : vector<8x8xf32> to vector<8xf32>
    %376 = vector.shape_cast %375 : vector<8xf32> to vector<8x1xf32>
    %377 = vector.broadcast %376 : vector<8x1xf32> to vector<8x8xf32>
    %378 = arith.subf %374, %377 : vector<8x8xf32>
    %379 = math.exp %378 : vector<8x8xf32>
    %cst_164 = arith.constant dense<0.000000e+00> : vector<8xf32>
    %380 = vector.multi_reduction <add>, %379, %cst_164 [1] : vector<8x8xf32> to vector<8xf32>
    %381 = vector.shape_cast %380 : vector<8xf32> to vector<8x1xf32>
    %382 = tpu.reciprocal %381 : vector<8x1xf32> -> vector<8x1xf32>
    %383 = vector.broadcast %382 : vector<8x1xf32> to vector<8x8xf32>
    %384 = arith.mulf %379, %383 : vector<8x8xf32>
    %385 = vector.shape_cast %384 : vector<8x8xf32> to vector<8x8x1xf32>
    %c0_165 = arith.constant 0 : index
    %c0_166 = arith.constant 0 : index
    %c0_167 = arith.constant 0 : index
    %386 = vector.load %arg10[%c0_165, %c0_166, %c0_167] : memref<8x8x64xf32, #tpu.memory_space<vmem>>, vector<8x8x64xf32>
    %387 = vector.broadcast %385 : vector<8x8x1xf32> to vector<8x8x64xf32>
    %388 = arith.mulf %387, %386 : vector<8x8x64xf32>
    %cst_168 = arith.constant dense<0.000000e+00> : vector<8x64xf32>
    %389 = vector.multi_reduction <add>, %388, %cst_168 [1] : vector<8x8x64xf32> to vector<8x64xf32>
    %390 = tpu.concatenate %367, %389 in 1 : vector<8x32xf32>, vector<8x64xf32> -> vector<8x96xf32>
    %391 = arith.truncf %390 : vector<8x96xf32> to vector<8x96xbf16>
    %c0_169 = arith.constant 0 : index
    %c0_170 = arith.constant 0 : index
    %392 = vector.load %arg11[%c0_169, %c0_170] : memref<96x128xbf16, #tpu.memory_space<vmem>>, vector<96x128xbf16>
    %cst_171 = arith.constant dense<0.000000e+00> : vector<8x128xf32>
    %393 = tpu.matmul %391, %392, %cst_171 {dimension_numbers = #tpu.dot_dimension_numbers<[1], [0], [0], [1], [0, 0, 1, 1], [], []>} : vector<8x96xbf16>, vector<96x128xbf16>, vector<8x128xf32> -> vector<8x128xf32>
    %c0_172 = arith.constant 0 : index
    %c0_173 = arith.constant 0 : index
    %394 = vector.load %arg12[%c0_172, %c0_173] : memref<8x128xf32, #tpu.memory_space<vmem>>, vector<8x128xf32>
    %395 = arith.addf %393, %394 : vector<8x128xf32>
    %396 = math.tanh %395 : vector<8x128xf32>
    %397 = arith.index_cast %c4_i32 : i32 to index
    %c0_174 = arith.constant 0 : index
    %c0_175 = arith.constant 0 : index
    %398 = vector.load %arg13[%397, %c0_174, %c0_175] : memref<6x8x128xf32, #tpu.memory_space<vmem>>, vector<1x8x128xf32>
    %399 = vector.shape_cast %398 : vector<1x8x128xf32> to vector<8x128xf32>
    %400 = vector.shape_cast %396 : vector<8x128xf32> to vector<1x8x128xf32>
    tpu.vector_store %arg13[%397, %c0_174, %c0_175], %400 {strides = array<i32>} : memref<6x8x128xf32, #tpu.memory_space<vmem>>, vector<1x8x128xf32>,
    %c5_i32 = arith.constant 5 : i32
    %401 = arith.index_cast %c5_i32 : i32 to index
    %c0_176 = arith.constant 0 : index
    %c0_177 = arith.constant 0 : index
    %402 = vector.load %arg1[%401, %c0_176, %c0_177] : memref<6x8x64xf32, #tpu.memory_space<vmem>>, vector<1x8x64xf32>
    %403 = vector.shape_cast %402 : vector<1x8x64xf32> to vector<8x64xf32>
    %404 = tpu.concatenate %403, %346 in 1 : vector<8x64xf32>, vector<8x32xf32> -> vector<8x96xf32>
    %405 = arith.truncf %404 : vector<8x96xf32> to vector<8x96xbf16>
    %c0_178 = arith.constant 0 : index
    %c0_179 = arith.constant 0 : index
    %406 = vector.load %arg4[%c0_178, %c0_179] : memref<96x128xbf16, #tpu.memory_space<vmem>>, vector<96x128xbf16>
    %cst_180 = arith.constant dense<0.000000e+00> : vector<8x128xf32>
    %407 = tpu.matmul %405, %406, %cst_180 {dimension_numbers = #tpu.dot_dimension_numbers<[1], [0], [0], [1], [0, 0, 1, 1], [], []>} : vector<8x96xbf16>, vector<96x128xbf16>, vector<8x128xf32> -> vector<8x128xf32>
    %c0_181 = arith.constant 0 : index
    %c0_182 = arith.constant 0 : index
    %408 = vector.load %arg5[%c0_181, %c0_182] : memref<8x128xf32, #tpu.memory_space<vmem>>, vector<8x128xf32>
    %409 = arith.addf %407, %408 : vector<8x128xf32>
    %410 = arith.negf %409 : vector<8x128xf32>
    %411 = math.exp %410 : vector<8x128xf32>
    %cst_183 = arith.constant 1.000000e+00 : f32
    %412 = vector.broadcast %cst_183 : f32 to vector<8x128xf32>
    %413 = arith.addf %412, %411 : vector<8x128xf32>
    %414 = arith.divf %412, %413 : vector<8x128xf32>
    %415 = math.tanh %409 : vector<8x128xf32>
    %416 = vector.extract_strided_slice %414 {offsets = [0, 0], sizes = [8, 32], strides = [1, 1]} : vector<8x128xf32> to vector<8x32xf32>
    %417 = vector.extract_strided_slice %414 {offsets = [0, 32], sizes = [8, 32], strides = [1, 1]} : vector<8x128xf32> to vector<8x32xf32>
    %418 = vector.extract_strided_slice %415 {offsets = [0, 64], sizes = [8, 32], strides = [1, 1]} : vector<8x128xf32> to vector<8x32xf32>
    %419 = vector.extract_strided_slice %414 {offsets = [0, 96], sizes = [8, 32], strides = [1, 1]} : vector<8x128xf32> to vector<8x32xf32>
    %420 = arith.mulf %417, %344 : vector<8x32xf32>
    %421 = arith.mulf %416, %418 : vector<8x32xf32>
    %422 = arith.addf %420, %421 : vector<8x32xf32>
    %423 = math.tanh %422 : vector<8x32xf32>
    %424 = arith.mulf %419, %423 : vector<8x32xf32>
    %425 = tpu.concatenate %424, %367 in 1 : vector<8x32xf32>, vector<8x32xf32> -> vector<8x64xf32>
    %426 = arith.truncf %425 : vector<8x64xf32> to vector<8x64xbf16>
    %c0_184 = arith.constant 0 : index
    %c0_185 = arith.constant 0 : index
    %427 = vector.load %arg6[%c0_184, %c0_185] : memref<64x128xbf16, #tpu.memory_space<vmem>>, vector<64x128xbf16>
    %cst_186 = arith.constant dense<0.000000e+00> : vector<8x128xf32>
    %428 = tpu.matmul %426, %427, %cst_186 {dimension_numbers = #tpu.dot_dimension_numbers<[1], [0], [0], [1], [0, 0, 1, 1], [], []>} : vector<8x64xbf16>, vector<64x128xbf16>, vector<8x128xf32> -> vector<8x128xf32>
    %c0_187 = arith.constant 0 : index
    %c0_188 = arith.constant 0 : index
    %429 = vector.load %arg7[%c0_187, %c0_188] : memref<8x128xf32, #tpu.memory_space<vmem>>, vector<8x128xf32>
    %430 = arith.addf %428, %429 : vector<8x128xf32>
    %431 = arith.negf %430 : vector<8x128xf32>
    %432 = math.exp %431 : vector<8x128xf32>
    %cst_189 = arith.constant 1.000000e+00 : f32
    %433 = vector.broadcast %cst_189 : f32 to vector<8x128xf32>
    %434 = arith.addf %433, %432 : vector<8x128xf32>
    %435 = arith.divf %433, %434 : vector<8x128xf32>
    %436 = math.tanh %430 : vector<8x128xf32>
    %437 = vector.extract_strided_slice %435 {offsets = [0, 0], sizes = [8, 32], strides = [1, 1]} : vector<8x128xf32> to vector<8x32xf32>
    %438 = vector.extract_strided_slice %435 {offsets = [0, 32], sizes = [8, 32], strides = [1, 1]} : vector<8x128xf32> to vector<8x32xf32>
    %439 = vector.extract_strided_slice %436 {offsets = [0, 64], sizes = [8, 32], strides = [1, 1]} : vector<8x128xf32> to vector<8x32xf32>
    %440 = vector.extract_strided_slice %435 {offsets = [0, 96], sizes = [8, 32], strides = [1, 1]} : vector<8x128xf32> to vector<8x32xf32>
    %441 = arith.mulf %438, %365 : vector<8x32xf32>
    %442 = arith.mulf %437, %439 : vector<8x32xf32>
    %443 = arith.addf %441, %442 : vector<8x32xf32>
    %444 = math.tanh %443 : vector<8x32xf32>
    %445 = arith.mulf %440, %444 : vector<8x32xf32>
    %446 = vector.shape_cast %445 : vector<8x32xf32> to vector<8x1x32xf32>
    %c0_190 = arith.constant 0 : index
    %c0_191 = arith.constant 0 : index
    %c0_192 = arith.constant 0 : index
    %447 = vector.load %arg8[%c0_190, %c0_191, %c0_192] : memref<8x8x32xf32, #tpu.memory_space<vmem>>, vector<8x8x32xf32>
    %448 = vector.broadcast %446 : vector<8x1x32xf32> to vector<8x8x32xf32>
    %449 = arith.mulf %448, %447 : vector<8x8x32xf32>
    %cst_193 = arith.constant dense<0.000000e+00> : vector<8x8xf32>
    %450 = vector.multi_reduction <add>, %449, %cst_193 [2] : vector<8x8x32xf32> to vector<8x8xf32>
    %c0_194 = arith.constant 0 : index
    %c0_195 = arith.constant 0 : index
    %451 = vector.load %arg9[%c0_194, %c0_195] : memref<8x8xf32, #tpu.memory_space<vmem>>, vector<8x8xf32>
    %452 = arith.addf %450, %451 : vector<8x8xf32>
    %cst_196 = arith.constant dense<0xFF800000> : vector<8xf32>
    %453 = vector.multi_reduction <maximumf>, %452, %cst_196 [1] : vector<8x8xf32> to vector<8xf32>
    %454 = vector.shape_cast %453 : vector<8xf32> to vector<8x1xf32>
    %455 = vector.broadcast %454 : vector<8x1xf32> to vector<8x8xf32>
    %456 = arith.subf %452, %455 : vector<8x8xf32>
    %457 = math.exp %456 : vector<8x8xf32>
    %cst_197 = arith.constant dense<0.000000e+00> : vector<8xf32>
    %458 = vector.multi_reduction <add>, %457, %cst_197 [1] : vector<8x8xf32> to vector<8xf32>
    %459 = vector.shape_cast %458 : vector<8xf32> to vector<8x1xf32>
    %460 = tpu.reciprocal %459 : vector<8x1xf32> -> vector<8x1xf32>
    %461 = vector.broadcast %460 : vector<8x1xf32> to vector<8x8xf32>
    %462 = arith.mulf %457, %461 : vector<8x8xf32>
    %463 = vector.shape_cast %462 : vector<8x8xf32> to vector<8x8x1xf32>
    %c0_198 = arith.constant 0 : index
    %c0_199 = arith.constant 0 : index
    %c0_200 = arith.constant 0 : index
    %464 = vector.load %arg10[%c0_198, %c0_199, %c0_200] : memref<8x8x64xf32, #tpu.memory_space<vmem>>, vector<8x8x64xf32>
    %465 = vector.broadcast %463 : vector<8x8x1xf32> to vector<8x8x64xf32>
    %466 = arith.mulf %465, %464 : vector<8x8x64xf32>
    %cst_201 = arith.constant dense<0.000000e+00> : vector<8x64xf32>
    %467 = vector.multi_reduction <add>, %466, %cst_201 [1] : vector<8x8x64xf32> to vector<8x64xf32>
    %468 = tpu.concatenate %445, %467 in 1 : vector<8x32xf32>, vector<8x64xf32> -> vector<8x96xf32>
    %469 = arith.truncf %468 : vector<8x96xf32> to vector<8x96xbf16>
    %c0_202 = arith.constant 0 : index
    %c0_203 = arith.constant 0 : index
    %470 = vector.load %arg11[%c0_202, %c0_203] : memref<96x128xbf16, #tpu.memory_space<vmem>>, vector<96x128xbf16>
    %cst_204 = arith.constant dense<0.000000e+00> : vector<8x128xf32>
    %471 = tpu.matmul %469, %470, %cst_204 {dimension_numbers = #tpu.dot_dimension_numbers<[1], [0], [0], [1], [0, 0, 1, 1], [], []>} : vector<8x96xbf16>, vector<96x128xbf16>, vector<8x128xf32> -> vector<8x128xf32>
    %c0_205 = arith.constant 0 : index
    %c0_206 = arith.constant 0 : index
    %472 = vector.load %arg12[%c0_205, %c0_206] : memref<8x128xf32, #tpu.memory_space<vmem>>, vector<8x128xf32>
    %473 = arith.addf %471, %472 : vector<8x128xf32>
    %474 = math.tanh %473 : vector<8x128xf32>
    %475 = arith.index_cast %c5_i32 : i32 to index
    %c0_207 = arith.constant 0 : index
    %c0_208 = arith.constant 0 : index
    %476 = vector.load %arg13[%475, %c0_207, %c0_208] : memref<6x8x128xf32, #tpu.memory_space<vmem>>, vector<1x8x128xf32>
    %477 = vector.shape_cast %476 : vector<1x8x128xf32> to vector<8x128xf32>
    %478 = vector.shape_cast %474 : vector<8x128xf32> to vector<1x8x128xf32>
    tpu.vector_store %arg13[%475, %c0_207, %c0_208], %478 {strides = array<i32>} : memref<6x8x128xf32, #tpu.memory_space<vmem>>, vector<1x8x128xf32>,
    %c6_i32 = arith.constant 6 : i32
    %c0_209 = arith.constant 0 : index
    %c0_210 = arith.constant 0 : index
    %c0_211 = arith.constant 0 : index
    %479 = vector.load %arg14[%c0_209, %c0_210, %c0_211] : memref<2x8x32xf32, #tpu.memory_space<vmem>>, vector<1x8x32xf32>
    %480 = vector.shape_cast %479 : vector<1x8x32xf32> to vector<8x32xf32>
    %481 = vector.shape_cast %424 : vector<8x32xf32> to vector<1x8x32xf32>
    tpu.vector_store %arg14[%c0_209, %c0_210, %c0_211], %481 {strides = array<i32>} : memref<2x8x32xf32, #tpu.memory_space<vmem>>, vector<1x8x32xf32>,
    %c0_212 = arith.constant 0 : index
    %c0_213 = arith.constant 0 : index
    %c0_214 = arith.constant 0 : index
    %482 = vector.load %arg15[%c0_212, %c0_213, %c0_214] : memref<2x8x32xf32, #tpu.memory_space<vmem>>, vector<1x8x32xf32>
    %483 = vector.shape_cast %482 : vector<1x8x32xf32> to vector<8x32xf32>
    %484 = vector.shape_cast %422 : vector<8x32xf32> to vector<1x8x32xf32>
    tpu.vector_store %arg15[%c0_212, %c0_213, %c0_214], %484 {strides = array<i32>} : memref<2x8x32xf32, #tpu.memory_space<vmem>>, vector<1x8x32xf32>,
    %c1_215 = arith.constant 1 : index
    %c0_216 = arith.constant 0 : index
    %c0_217 = arith.constant 0 : index
    %485 = vector.load %arg14[%c1_215, %c0_216, %c0_217] : memref<2x8x32xf32, #tpu.memory_space<vmem>>, vector<1x8x32xf32>
    %486 = vector.shape_cast %485 : vector<1x8x32xf32> to vector<8x32xf32>
    %487 = vector.shape_cast %445 : vector<8x32xf32> to vector<1x8x32xf32>
    tpu.vector_store %arg14[%c1_215, %c0_216, %c0_217], %487 {strides = array<i32>} : memref<2x8x32xf32, #tpu.memory_space<vmem>>, vector<1x8x32xf32>,
    %c1_218 = arith.constant 1 : index
    %c0_219 = arith.constant 0 : index
    %c0_220 = arith.constant 0 : index
    %488 = vector.load %arg15[%c1_218, %c0_219, %c0_220] : memref<2x8x32xf32, #tpu.memory_space<vmem>>, vector<1x8x32xf32>
    %489 = vector.shape_cast %488 : vector<1x8x32xf32> to vector<8x32xf32>
    %490 = vector.shape_cast %443 : vector<8x32xf32> to vector<1x8x32xf32>
    tpu.vector_store %arg15[%c1_218, %c0_219, %c0_220], %490 {strides = array<i32>} : memref<2x8x32xf32, #tpu.memory_space<vmem>>, vector<1x8x32xf32>,
    return
  }
  func.func @transform_0(%arg0: i32) -> (i32, i32, i32) {
    %c0_i32 = arith.constant 0 : i32
    %c0_i32_0 = arith.constant 0 : i32
    %c0_i32_1 = arith.constant 0 : i32
    return %arg0, %c0_i32, %c0_i32_0 : i32, i32, i32
  }
  func.func @transform_1(%arg0: i32) -> (i32, i32, i32) {
    %c0_i32 = arith.constant 0 : i32
    %c0_i32_0 = arith.constant 0 : i32
    %c0_i32_1 = arith.constant 0 : i32
    %c0_i32_2 = arith.constant 0 : i32
    return %c0_i32, %c0_i32_0, %c0_i32_1 : i32, i32, i32
  }
  func.func @transform_2(%arg0: i32) -> (i32, i32, i32) {
    %c0_i32 = arith.constant 0 : i32
    %c0_i32_0 = arith.constant 0 : i32
    %c0_i32_1 = arith.constant 0 : i32
    %c0_i32_2 = arith.constant 0 : i32
    return %c0_i32, %c0_i32_0, %c0_i32_1 : i32, i32, i32
  }
  func.func @transform_3(%arg0: i32) -> (i32, i32) {
    %c0_i32 = arith.constant 0 : i32
    %c0_i32_0 = arith.constant 0 : i32
    %c0_i32_1 = arith.constant 0 : i32
    return %c0_i32, %c0_i32_0 : i32, i32
  }
  func.func @transform_4(%arg0: i32) -> (i32, i32) {
    %c0_i32 = arith.constant 0 : i32
    %c0_i32_0 = arith.constant 0 : i32
    %c0_i32_1 = arith.constant 0 : i32
    return %c0_i32, %c0_i32_0 : i32, i32
  }
  func.func @transform_5(%arg0: i32) -> (i32, i32) {
    %c0_i32 = arith.constant 0 : i32
    %c0_i32_0 = arith.constant 0 : i32
    %c0_i32_1 = arith.constant 0 : i32
    return %c0_i32, %c0_i32_0 : i32, i32
  }
  func.func @transform_6(%arg0: i32) -> (i32, i32) {
    %c0_i32 = arith.constant 0 : i32
    %c0_i32_0 = arith.constant 0 : i32
    %c0_i32_1 = arith.constant 0 : i32
    return %c0_i32, %c0_i32_0 : i32, i32
  }
  func.func @transform_7(%arg0: i32) -> (i32, i32, i32) {
    %c0_i32 = arith.constant 0 : i32
    %c0_i32_0 = arith.constant 0 : i32
    %c0_i32_1 = arith.constant 0 : i32
    %c0_i32_2 = arith.constant 0 : i32
    return %c0_i32, %c0_i32_0, %c0_i32_1 : i32, i32, i32
  }
  func.func @transform_8(%arg0: i32) -> (i32, i32) {
    %c0_i32 = arith.constant 0 : i32
    %c0_i32_0 = arith.constant 0 : i32
    %c0_i32_1 = arith.constant 0 : i32
    return %c0_i32, %c0_i32_0 : i32, i32
  }
  func.func @transform_9(%arg0: i32) -> (i32, i32, i32) {
    %c0_i32 = arith.constant 0 : i32
    %c0_i32_0 = arith.constant 0 : i32
    %c0_i32_1 = arith.constant 0 : i32
    %c0_i32_2 = arith.constant 0 : i32
    return %c0_i32, %c0_i32_0, %c0_i32_1 : i32, i32, i32
  }
  func.func @transform_10(%arg0: i32) -> (i32, i32) {
    %c0_i32 = arith.constant 0 : i32
    %c0_i32_0 = arith.constant 0 : i32
    %c0_i32_1 = arith.constant 0 : i32
    return %c0_i32, %c0_i32_0 : i32, i32
  }
  func.func @transform_11(%arg0: i32) -> (i32, i32) {
    %c0_i32 = arith.constant 0 : i32
    %c0_i32_0 = arith.constant 0 : i32
    %c0_i32_1 = arith.constant 0 : i32
    return %c0_i32, %c0_i32_0 : i32, i32
  }
  func.func @transform_12(%arg0: i32) -> (i32, i32, i32) {
    %c0_i32 = arith.constant 0 : i32
    %c0_i32_0 = arith.constant 0 : i32
    %c0_i32_1 = arith.constant 0 : i32
    return %arg0, %c0_i32, %c0_i32_0 : i32, i32, i32
  }
}

</mosaic_0001>

<llo_original>
// kernel: tpu_custom_call.1
$region0: #{tpu_custom_call.1}
  #allocation0 [shape = 'u32[]', space=smem, size = 0x4, offset = 0x4, fixed_abs, tag = 'smem constant byte address 0x4 - core index']
  #allocation1 [shape = 'u32[144,128]{1,0:T(1,128)}', space=vmem, size = 0x12000, scoped, tag = 'internal scratch']
  #allocation2 [shape = 'f32[2,8,32]{2,1,0:T(8,128)}', space=vmem, size = 0x2000, scoped, tag = 'scratch operand']
  #allocation3 [shape = 'f32[2,8,32]{2,1,0:T(8,128)}', space=vmem, size = 0x2000, scoped, tag = 'scratch operand']
  %s0 = inlined_call_operand.hbm [shape: f32[6,8,64], index: 0, kind: input, shape index: {}]
  %s1 = inlined_call_operand.hbm [shape: f32[2,8,32], index: 1, kind: input, shape index: {}]
  %s2 = inlined_call_operand.hbm [shape: f32[2,8,32], index: 2, kind: input, shape index: {}]
  %s3 = inlined_call_operand.hbm [shape: bf16[96,128], index: 3, kind: input, shape index: {}]
  %s4 = inlined_call_operand.hbm [shape: f32[8,128], index: 4, kind: input, shape index: {}]
  %s5 = inlined_call_operand.hbm [shape: bf16[64,128], index: 5, kind: input, shape index: {}]
  %s6 = inlined_call_operand.vmem [shape: f32[8,128], index: 6, kind: input, shape index: {}]
  %s7 = inlined_call_operand.hbm [shape: f32[8,8,32], index: 7, kind: input, shape index: {}]
  %s8 = inlined_call_operand.hbm [shape: f32[8,8], index: 8, kind: input, shape index: {}]
  %s9 = inlined_call_operand.hbm [shape: f32[8,8,64], index: 9, kind: input, shape index: {}]
  %s10 = inlined_call_operand.hbm [shape: bf16[96,128], index: 10, kind: input, shape index: {}]
  %s11 = inlined_call_operand.vmem [shape: f32[8,128], index: 11, kind: input, shape index: {}]
  %s12 = inlined_call_operand.hbm [shape: f32[6,8,128], index: 12, kind: output, shape index: {}]
  %s13 = sld [smem:[#allocation0]]
  $region102: #{tpu_custom_call.1} parent=0
    _
  %s15 = ssub.s32 1, %s13
  %s16 = scalar_select 0, %s15, %s13
  $region1: #{tpu_custom_call.1} parent=0
    #allocation4 [shape = 'u8[24576]{0}', space=vmem, size = 0x6000, scoped, tag = 'input window, operand 0, single buffered']
    #allocation5 [shape = 's32[1]{0}', space=sflag, size = 0x4, scoped, tag = 'scoped memory for tpu_custom_call.1']
    #allocation6 [shape = 's32[1]{0}', space=sflag, size = 0x4, scoped, tag = 'scoped memory for tpu_custom_call.1']
    #allocation7 [shape = 'u8[8192]{0}', space=vmem, size = 0x2000, scoped, tag = 'input window, operand 1, single buffered']
    #allocation8 [shape = 's32[1]{0}', space=sflag, size = 0x4, scoped, tag = 'scoped memory for tpu_custom_call.1']
    #allocation9 [shape = 'u8[8192]{0}', space=vmem, size = 0x2000, scoped, tag = 'input window, operand 2, single buffered']
    #allocation10 [shape = 'u8[24576]{0}', space=vmem, size = 0x6000, scoped, tag = 'input window, operand 3, single buffered']
    #allocation11 [shape = 's32[1]{0}', space=sflag, size = 0x4, scoped, tag = 'scoped memory for tpu_custom_call.1']
    #allocation12 [shape = 'u8[4096]{0}', space=vmem, size = 0x1000, scoped, tag = 'input window, operand 4, single buffered']
    #allocation13 [shape = 'u8[16384]{0}', space=vmem, size = 0x4000, scoped, tag = 'input window, operand 5, single buffered']
    #allocation14 [shape = 's32[1]{0}', space=sflag, size = 0x4, scoped, tag = 'scoped memory for tpu_custom_call.1']
    #allocation15 [shape = 'u8[32768]{0}', space=vmem, size = 0x8000, scoped, tag = 'input window, operand 7, single buffered']
    #allocation16 [shape = 'u8[4096]{0}', space=vmem, size = 0x1000, scoped, tag = 'input window, operand 8, single buffered']
    #allocation17 [shape = 's32[1]{0}', space=sflag, size = 0x4, scoped, tag = 'scoped memory for tpu_custom_call.1']
    #allocation18 [shape = 'u8[32768]{0}', space=vmem, size = 0x8000, scoped, tag = 'input window, operand 9, single buffered']
    #allocation19 [shape = 'u8[24576]{0}', space=vmem, size = 0x6000, scoped, tag = 'input window, operand 10, single buffered']
    #allocation20 [shape = 's32[1]{0}', space=sflag, size = 0x4, scoped, tag = 'scoped memory for tpu_custom_call.1']
    #allocation21 [shape = 'u8[24576]{0}', space=vmem, size = 0x6000, scoped, tag = 'output window, operand 0, single buffered']
    %17 = vsyncpa [#allocation5], 0
    %18 = vsyncpa [#allocation8], 0
    %19 = vsyncpa [#allocation11], 0
    %20 = vsyncpa [#allocation14], 0
    %21 = vsyncpa [#allocation17], 0
    %22 = vsyncpa [#allocation20], 0
    %23 = vsyncpa [#allocation6], 0
    // Predicated region
    $region2: #{tpu_custom_call.1} parent=1 // pred_check
      _
    $region3: #{tpu_custom_call.1} parent=1 // pred_check_branch
      %25 = sbr.rel (0) target = $region5
    $region4: #{tpu_custom_call.1} parent=1 // pred_region
      %s27 = ssub.s32 768, 768
      %28 = vsyncadd [#allocation5], %s27
      %s29 = sshll.u32 [#allocation4], 4
      %s30 = int_to_ptr.vmem [resolvable:$true] %s29
      %35 = dma.hbm_to_vmem [thread:$0]  %s0, 768, %s30, [#allocation5], 128, 128, 8
    $region5: #{tpu_custom_call.1} parent=1 // pred_fallthru
      _
    // Predicated region
    $region6: #{tpu_custom_call.1} parent=1 // pred_check
      _
    $region7: #{tpu_custom_call.1} parent=1 // pred_check_branch
      %37 = sbr.rel (0) target = $region9
    $region8: #{tpu_custom_call.1} parent=1 // pred_region
      %s39 = ssub.s32 256, 256
      %40 = vsyncadd [#allocation8], %s39
      %s41 = sshll.u32 [#allocation7], 4
      %s42 = int_to_ptr.vmem [resolvable:$true] %s41
      %47 = dma.hbm_to_vmem [thread:$0]  %s1, 256, %s42, [#allocation8], 128, 128, 8
    $region9: #{tpu_custom_call.1} parent=1 // pred_fallthru
      _
    // Predicated region
    $region10: #{tpu_custom_call.1} parent=1 // pred_check
      _
    $region11: #{tpu_custom_call.1} parent=1 // pred_check_branch
      %49 = sbr.rel (0) target = $region13
    $region12: #{tpu_custom_call.1} parent=1 // pred_region
      %s51 = ssub.s32 256, 256
      %52 = vsyncadd [#allocation8], %s51
      %s53 = sshll.u32 [#allocation9], 4
      %s54 = int_to_ptr.vmem [resolvable:$true] %s53
      %59 = dma.hbm_to_vmem [thread:$0]  %s2, 256, %s54, [#allocation8], 128, 128, 8
    $region13: #{tpu_custom_call.1} parent=1 // pred_fallthru
      _
    // Predicated region
    $region14: #{tpu_custom_call.1} parent=1 // pred_check
      _
    $region15: #{tpu_custom_call.1} parent=1 // pred_check_branch
      %61 = sbr.rel (0) target = $region17
    $region16: #{tpu_custom_call.1} parent=1 // pred_region
      %s63 = ssub.s32 768, 768
      %64 = vsyncadd [#allocation11], %s63
      %s65 = sshll.u32 [#allocation10], 4
      %s66 = int_to_ptr.vmem [resolvable:$true] %s65
      %71 = dma.hbm_to_vmem [thread:$0]  %s3, 768, %s66, [#allocation11], 64, 64, 4
    $region17: #{tpu_custom_call.1} parent=1 // pred_fallthru
      _
    // Predicated region
    $region18: #{tpu_custom_call.1} parent=1 // pred_check
      _
    $region19: #{tpu_custom_call.1} parent=1 // pred_check_branch
      %73 = sbr.rel (0) target = $region21
    $region20: #{tpu_custom_call.1} parent=1 // pred_region
      %s75 = ssub.s32 128, 128
      %76 = vsyncadd [#allocation11], %s75
      %s78 = sshll.u32 [#allocation12], 4
      %s79 = int_to_ptr.vmem [resolvable:$true] %s78
      %81 = dma.hbm_to_vmem [thread:$0]  %s4, 128, %s79, [#allocation11]
    $region21: #{tpu_custom_call.1} parent=1 // pred_fallthru
      _
    // Predicated region
    $region22: #{tpu_custom_call.1} parent=1 // pred_check
      _
    $region23: #{tpu_custom_call.1} parent=1 // pred_check_branch
      %83 = sbr.rel (0) target = $region25
    $region24: #{tpu_custom_call.1} parent=1 // pred_region
      %s85 = ssub.s32 512, 512
      %86 = vsyncadd [#allocation14], %s85
      %s87 = sshll.u32 [#allocation13], 4
      %s88 = int_to_ptr.vmem [resolvable:$true] %s87
      %93 = dma.hbm_to_vmem [thread:$0]  %s5, 512, %s88, [#allocation14], 64, 64, 4
    $region25: #{tpu_custom_call.1} parent=1 // pred_fallthru
      _
    // Predicated region
    $region26: #{tpu_custom_call.1} parent=1 // pred_check
      _
    $region27: #{tpu_custom_call.1} parent=1 // pred_check_branch
      %95 = sbr.rel (0) target = $region29
    $region28: #{tpu_custom_call.1} parent=1 // pred_region
      _
    $region29: #{tpu_custom_call.1} parent=1 // pred_fallthru
      _
    // Predicated region
    $region30: #{tpu_custom_call.1} parent=1 // pred_check
      _
    $region31: #{tpu_custom_call.1} parent=1 // pred_check_branch
      %97 = sbr.rel (0) target = $region33
    $region32: #{tpu_custom_call.1} parent=1 // pred_region
      %s99 = ssub.s32 1024, 1024
      %100 = vsyncadd [#allocation14], %s99
      %s101 = sshll.u32 [#allocation15], 4
      %s102 = int_to_ptr.vmem [resolvable:$true] %s101
      %107 = dma.hbm_to_vmem [thread:$0]  %s7, 1024, %s102, [#allocation14], 128, 128, 8
    $region33: #{tpu_custom_call.1} parent=1 // pred_fallthru
      _
    // Predicated region
    $region34: #{tpu_custom_call.1} parent=1 // pred_check
      _
    $region35: #{tpu_custom_call.1} parent=1 // pred_check_branch
      %109 = sbr.rel (0) target = $region37
    $region36: #{tpu_custom_call.1} parent=1 // pred_region
      %s111 = ssub.s32 128, 128
      %112 = vsyncadd [#allocation17], %s111
      %s114 = sshll.u32 [#allocation16], 4
      %s115 = int_to_ptr.vmem [resolvable:$true] %s114
      %117 = dma.hbm_to_vmem [thread:$0]  %s8, 128, %s115, [#allocation17]
    $region37: #{tpu_custom_call.1} parent=1 // pred_fallthru
      _
    // Predicated region
    $region38: #{tpu_custom_call.1} parent=1 // pred_check
      _
    $region39: #{tpu_custom_call.1} parent=1 // pred_check_branch
      %119 = sbr.rel (0) target = $region41
    $region40: #{tpu_custom_call.1} parent=1 // pred_region
      %s121 = ssub.s32 1024, 1024
      %122 = vsyncadd [#allocation17], %s121
      %s123 = sshll.u32 [#allocation18], 4
      %s124 = int_to_ptr.vmem [resolvable:$true] %s123
      %129 = dma.hbm_to_vmem [thread:$0]  %s9, 1024, %s124, [#allocation17], 128, 128, 8
    $region41: #{tpu_custom_call.1} parent=1 // pred_fallthru
      _
    // Predicated region
    $region42: #{tpu_custom_call.1} parent=1 // pred_check
      _
    $region43: #{tpu_custom_call.1} parent=1 // pred_check_branch
      %131 = sbr.rel (0) target = $region45
    $region44: #{tpu_custom_call.1} parent=1 // pred_region
      %s133 = ssub.s32 768, 768
      %134 = vsyncadd [#allocation20], %s133
      %s135 = sshll.u32 [#allocation19], 4
      %s136 = int_to_ptr.vmem [resolvable:$true] %s135
      %141 = dma.hbm_to_vmem [thread:$0]  %s10, 768, %s136, [#allocation20], 64, 64, 4
    $region45: #{tpu_custom_call.1} parent=1 // pred_fallthru
      _
    // Predicated region
    $region46: #{tpu_custom_call.1} parent=1 // pred_check
      _
    $region47: #{tpu_custom_call.1} parent=1 // pred_check_branch
      %143 = sbr.rel (0) target = $region49
    $region48: #{tpu_custom_call.1} parent=1 // pred_region
      _
    $region49: #{tpu_custom_call.1} parent=1 // pred_fallthru
      _
    // Predicated region
    $region50: #{tpu_custom_call.1} parent=1 // pred_check
      _
    $region51: #{tpu_custom_call.1} parent=1 // pred_check_branch
      %145 = sbr.rel (0) target = $region53
    $region52: #{tpu_custom_call.1} parent=1 // pred_region
      %146 = dma.done [#allocation5], 768
    $region53: #{tpu_custom_call.1} parent=1 // pred_fallthru
      _
    // Predicated region
    $region54: #{tpu_custom_call.1} parent=1 // pred_check
      _
    $region55: #{tpu_custom_call.1} parent=1 // pred_check_branch
      %148 = sbr.rel (0) target = $region57
    $region56: #{tpu_custom_call.1} parent=1 // pred_region
      %149 = dma.done [#allocation8], 256
    $region57: #{tpu_custom_call.1} parent=1 // pred_fallthru
      _
    // Predicated region
    $region58: #{tpu_custom_call.1} parent=1 // pred_check
      _
    $region59: #{tpu_custom_call.1} parent=1 // pred_check_branch
      %151 = sbr.rel (0) target = $region61
    $region60: #{tpu_custom_call.1} parent=1 // pred_region
      %152 = dma.done [#allocation8], 256
    $region61: #{tpu_custom_call.1} parent=1 // pred_fallthru
      _
    // Predicated region
    $region62: #{tpu_custom_call.1} parent=1 // pred_check
      _
    $region63: #{tpu_custom_call.1} parent=1 // pred_check_branch
      %154 = sbr.rel (0) target = $region65
    $region64: #{tpu_custom_call.1} parent=1 // pred_region
      %155 = dma.done [#allocation11], 768
    $region65: #{tpu_custom_call.1} parent=1 // pred_fallthru
      _
    // Predicated region
    $region66: #{tpu_custom_call.1} parent=1 // pred_check
      _
    $region67: #{tpu_custom_call.1} parent=1 // pred_check_branch
      %157 = sbr.rel (0) target = $region69
    $region68: #{tpu_custom_call.1} parent=1 // pred_region
      %158 = dma.done [#allocation11], 128
    $region69: #{tpu_custom_call.1} parent=1 // pred_fallthru
      _
    // Predicated region
    $region70: #{tpu_custom_call.1} parent=1 // pred_check
      _
    $region71: #{tpu_custom_call.1} parent=1 // pred_check_branch
      %160 = sbr.rel (0) target = $region73
    $region72: #{tpu_custom_call.1} parent=1 // pred_region
      %161 = dma.done [#allocation14], 512
    $region73: #{tpu_custom_call.1} parent=1 // pred_fallthru
      _
    // Predicated region
    $region74: #{tpu_custom_call.1} parent=1 // pred_check
      _
    $region75: #{tpu_custom_call.1} parent=1 // pred_check_branch
      %163 = sbr.rel (0) target = $region77
    $region76: #{tpu_custom_call.1} parent=1 // pred_region
      %164 = dma.done [#allocation14], 1024
    $region77: #{tpu_custom_call.1} parent=1 // pred_fallthru
      _
    // Predicated region
    $region78: #{tpu_custom_call.1} parent=1 // pred_check
      _
    $region79: #{tpu_custom_call.1} parent=1 // pred_check_branch
      %166 = sbr.rel (0) target = $region81
    $region80: #{tpu_custom_call.1} parent=1 // pred_region
      %167 = dma.done [#allocation17], 128
    $region81: #{tpu_custom_call.1} parent=1 // pred_fallthru
      _
    // Predicated region
    $region82: #{tpu_custom_call.1} parent=1 // pred_check
      _
    $region83: #{tpu_custom_call.1} parent=1 // pred_check_branch
      %169 = sbr.rel (0) target = $region85
    $region84: #{tpu_custom_call.1} parent=1 // pred_region
      %170 = dma.done [#allocation17], 1024
    $region85: #{tpu_custom_call.1} parent=1 // pred_fallthru
      _
    // Predicated region
    $region86: #{tpu_custom_call.1} parent=1 // pred_check
      _
    $region87: #{tpu_custom_call.1} parent=1 // pred_check_branch
      %172 = sbr.rel (0) target = $region89
    $region88: #{tpu_custom_call.1} parent=1 // pred_region
      %173 = dma.done [#allocation20], 768
    $region89: #{tpu_custom_call.1} parent=1 // pred_fallthru
      _
    %p175 = scmp.eq.s32.totalorder 0, 0
    // Predicated region
    $region90: #{tpu_custom_call.1} parent=1 // pred_check
      %p176 = pneg %p175
    $region91: #{tpu_custom_call.1} parent=1 // pred_check_branch
      %178 = sbr.rel (%p176) target = $region93
    $region92: #{tpu_custom_call.1} parent=1 // pred_region
      %v179 = vld [vmem:[#allocation7] sm:$0xff]
      %v180 = vld [vmem:[#allocation7 + $0x8] sm:$0xff]
      %vm181 = vcmask 261120
      %182 = vst.msk [vmem:[#allocation2] sm:$0xff] %vm181, %v179
      %183 = vst.msk [vmem:[#allocation2 + $0x8] sm:$0xff] %vm181, %v180
      %v184 = vld [vmem:[#allocation9] sm:$0xff]
      %v185 = vld [vmem:[#allocation9 + $0x8] sm:$0xff]
      %186 = vst.msk [vmem:[#allocation3] sm:$0xff] %vm181, %v184
      %187 = vst.msk [vmem:[#allocation3 + $0x8] sm:$0xff] %vm181, %v185
    $region93: #{tpu_custom_call.1} parent=1 // pred_fallthru
      _
    %v188 = vld [vmem:[#allocation2] sm:$0xff]
    %v189 = vld [vmem:[#allocation3] sm:$0xff]
    %s190 = scalar_lea.vmem [#allocation2], 8
    %v191 = vld [vmem:[%s190] sm:$0xff]
    %s192 = scalar_lea.vmem [#allocation3], 8
    %v193 = vld [vmem:[%s192] sm:$0xff]
    %v194 = vld [vmem:[#allocation4] sm:$0xff]
    %196 = vrot.lane.b32.xlu0 %v188, 64
    %v197 = vpop.permute.xlu0 %196
    %vm199 = vcmask 523264
    %v200 = vsel %vm199, %v194, %v197
    %v201 = vpack.c.bf16 %v200, %v200
    %v202 = vld [vmem:[#allocation10] sm:$0xf]
    %v203 = vld [vmem:[#allocation10 + $0x4] sm:$0xf]
    %v204 = vld [vmem:[#allocation10 + $0x8] sm:$0xf]
    %v205 = vld [vmem:[#allocation10 + $0xc] sm:$0xf]
    %v206 = vld [vmem:[#allocation10 + $0x10] sm:$0xf]
    %v207 = vld [vmem:[#allocation10 + $0x14] sm:$0xf]
    %v208 = vld [vmem:[#allocation10 + $0x18] sm:$0xf]
    %v209 = vld [vmem:[#allocation10 + $0x1c] sm:$0xf]
    %v210 = vld [vmem:[#allocation10 + $0x20] sm:$0xf]
    %v211 = vld [vmem:[#allocation10 + $0x24] sm:$0xf]
    %v212 = vld [vmem:[#allocation10 + $0x28] sm:$0xf]
    %v213 = vld [vmem:[#allocation10 + $0x2c] sm:$0xf]
    %v214 = vld [vmem:[#allocation12] sm:$0xff]
    %v227 = vunpack.c.l.b16 %v202
    %v228 = vunpack.c.l.b16 %v203
    %v229 = vunpack.c.l.b16 %v204
    %v230 = vunpack.c.l.b16 %v205
    %v231 = vunpack.c.l.b16 %v206
    %v232 = vunpack.c.l.b16 %v207
    %v233 = vunpack.c.l.b16 %v208
    %v234 = vunpack.c.l.b16 %v209
    %v235 = vunpack.c.l.b16 %v210
    %v236 = vunpack.c.l.b16 %v211
    %v237 = vunpack.c.l.b16 %v212
    %v238 = vunpack.c.l.b16 %v213
    %v239 = vpack.c.b16 %v228, %v227
    %v240 = vpack.c.b16 %v230, %v229
    %v241 = vpack.c.b16 %v232, %v231
    %v242 = vpack.c.b16 %v234, %v233
    %v243 = vpack.c.b16 %v236, %v235
    %v244 = vpack.c.b16 %v238, %v237
    %vm251 = vcmask 785408
    %v253 = vsel %vm251, %v201, 0
    %255 = vmatprep.subr.bf16.mxu0 0
    %256 = vmatpush1.bf16.msra.mxu0 0
    %257 = vmatprep.subr.bf16.mxu0 0
    %258 = vmatpush1.bf16.msra.mxu0 0
    %259 = vmatprep.subr.bf16.mxu0 0
    %260 = vmatpush1.bf16.msra.mxu0 %v244
    %261 = vmatprep.subr.bf16.mxu0 0
    %262 = vmatpush1.bf16.msra.mxu0 %v243
    %263 = vmatprep.subr.bf16.mxu0 0
    %264 = vmatpush1.bf16.msra.mxu0 %v242
    %265 = vmatprep.subr.bf16.mxu0 0
    %266 = vmatpush1.bf16.msra.mxu0 %v241
    %267 = vmatprep.subr.bf16.mxu0 0
    %268 = vmatpush1.bf16.msra.mxu0 %v240
    %269 = vmatprep.subr.bf16.mxu0 0
    %270 = vmatpush1.bf16.msra.mxu0 %v239
    %271 = vmatprep.subr.bf16.mxu0 0
    %272 = vmatpush2.bf16.msra.mxu0 0
    %273 = vmatprep.subr.bf16.mxu0 0
    %274 = vmatpush2.bf16.msra.mxu0 0
    %275 = vmatprep.subr.bf16.mxu0 0
    %276 = vmatpush2.bf16.msra.mxu0 0
    %277 = vmatprep.subr.bf16.mxu0 0
    %278 = vmatpush2.bf16.msra.mxu0 0
    %279 = vmatprep.subr.bf16.mxu0 0
    %280 = vmatpush2.bf16.msra.mxu0 0
    %281 = vmatprep.subr.bf16.mxu0 0
    %282 = vmatpush2.bf16.msra.mxu0 0
    %283 = vmatprep.subr.bf16.mxu0 0
    %284 = vmatpush2.bf16.msra.mxu0 0
    %285 = vmatprep.subr.bf16.mxu0 0
    %286 = vmatpush2.bf16.msra.mxu0 0
    %287 = vmatprep.mubr.bf16.mxu0 0
    %288 = vmatmul.mubr.bf16.gmra.mxu0 %v253
    %v289 = vpop.f32.mrf.mxu0
    %v290 = vadd.f32 %v214, %v289
    %v291 = vpop.f32.mrf.mxu0
    %v292 = vpop.f32.mrf.mxu0
    %v293 = vpop.f32.mrf.mxu0
    %294 = vdwg.mxu0
    %v295 = vxor.u32 %v290, 2147483648
    %v296 = vmul.f32 %v295, 1.442695
    %v297 = vpow.pop %v296
    %v298 = vadd.f32 %v297, 1.0
    %v299 = vrcp.pop %v298
    %v300 = vmul.f32 1.0, %v299
    %v301 = vtanh.pop %v290
    %303 = vrot.lane.b32.xlu0 %v189, 32
    %v304 = vpop.permute.xlu0 %303
    %v306 = vmul.f32 %v300, %v304
    %308 = vrot.lane.b32.xlu0 %v301, 64
    %v309 = vpop.permute.xlu0 %308
    %v311 = vmul.f32 %v300, %v309
    %313 = vrot.lane.b32.xlu0 %v311, 32
    %v314 = vpop.permute.xlu0 %313
    %v316 = vadd.f32 %v306, %v314
    %v317 = vtanh.pop %v316
    %319 = vrot.lane.b32.xlu0 %v317, 64
    %v320 = vpop.permute.xlu0 %319
    %v322 = vmul.f32 %v300, %v320
    %324 = vrot.lane.b32.xlu0 %v322, 32
    %v325 = vpop.permute.xlu0 %324
    %328 = vrot.lane.b32.xlu0 %v191, 32
    %v329 = vpop.permute.xlu0 %328
    %vm331 = vcmask 261120
    %v332 = vsel %vm331, %v325, %v329
    %v333 = vpack.c.bf16 %v332, %v332
    %v334 = vld [vmem:[#allocation13] sm:$0xf]
    %v335 = vld [vmem:[#allocation13 + $0x4] sm:$0xf]
    %v336 = vld [vmem:[#allocation13 + $0x8] sm:$0xf]
    %v337 = vld [vmem:[#allocation13 + $0xc] sm:$0xf]
    %v338 = vld [vmem:[#allocation13 + $0x10] sm:$0xf]
    %v339 = vld [vmem:[#allocation13 + $0x14] sm:$0xf]
    %v340 = vld [vmem:[#allocation13 + $0x18] sm:$0xf]
    %v341 = vld [vmem:[#allocation13 + $0x1c] sm:$0xf]
    %v342 = vld [vmem:[%s6] sm:$0xff]
    %v351 = vunpack.c.l.b16 %v334
    %v352 = vunpack.c.l.b16 %v335
    %v353 = vunpack.c.l.b16 %v336
    %v354 = vunpack.c.l.b16 %v337
    %v355 = vunpack.c.l.b16 %v338
    %v356 = vunpack.c.l.b16 %v339
    %v357 = vunpack.c.l.b16 %v340
    %v358 = vunpack.c.l.b16 %v341
    %v359 = vpack.c.b16 %v352, %v351
    %v360 = vpack.c.b16 %v354, %v353
    %v361 = vpack.c.b16 %v356, %v355
    %v362 = vpack.c.b16 %v358, %v357
    %v368 = vsel %vm199, %v333, 0
    %370 = vmatprep.subr.bf16.mxu0 0
    %371 = vmatpush1.bf16.msra.mxu0 0
    %372 = vmatprep.subr.bf16.mxu0 0
    %373 = vmatpush1.bf16.msra.mxu0 0
    %374 = vmatprep.subr.bf16.mxu0 0
    %375 = vmatpush1.bf16.msra.mxu0 0
    %376 = vmatprep.subr.bf16.mxu0 0
    %377 = vmatpush1.bf16.msra.mxu0 0
    %378 = vmatprep.subr.bf16.mxu0 0
    %379 = vmatpush1.bf16.msra.mxu0 %v362
    %380 = vmatprep.subr.bf16.mxu0 0
    %381 = vmatpush1.bf16.msra.mxu0 %v361
    %382 = vmatprep.subr.bf16.mxu0 0
    %383 = vmatpush1.bf16.msra.mxu0 %v360
    %384 = vmatprep.subr.bf16.mxu0 0
    %385 = vmatpush1.bf16.msra.mxu0 %v359
    %386 = vmatprep.subr.bf16.mxu0 0
    %387 = vmatpush2.bf16.msra.mxu0 0
    %388 = vmatprep.subr.bf16.mxu0 0
    %389 = vmatpush2.bf16.msra.mxu0 0
    %390 = vmatprep.subr.bf16.mxu0 0
    %391 = vmatpush2.bf16.msra.mxu0 0
    %392 = vmatprep.subr.bf16.mxu0 0
    %393 = vmatpush2.bf16.msra.mxu0 0
    %394 = vmatprep.subr.bf16.mxu0 0
    %395 = vmatpush2.bf16.msra.mxu0 0
    %396 = vmatprep.subr.bf16.mxu0 0
    %397 = vmatpush2.bf16.msra.mxu0 0
    %398 = vmatprep.subr.bf16.mxu0 0
    %399 = vmatpush2.bf16.msra.mxu0 0
    %400 = vmatprep.subr.bf16.mxu0 0
    %401 = vmatpush2.bf16.msra.mxu0 0
    %402 = vmatprep.mubr.bf16.mxu0 0
    %403 = vmatmul.mubr.bf16.gmra.mxu0 %v368
    %v404 = vpop.f32.mrf.mxu0
    %v405 = vadd.f32 %v342, %v404
    %v406 = vpop.f32.mrf.mxu0
    %v407 = vpop.f32.mrf.mxu0
    %v408 = vpop.f32.mrf.mxu0
    %409 = vdwg.mxu0
    %v410 = vxor.u32 %v405, 2147483648
    %v411 = vmul.f32 %v410, 1.442695
    %v412 = vpow.pop %v411
    %v413 = vadd.f32 %v412, 1.0
    %v414 = vrcp.pop %v413
    %v415 = vmul.f32 1.0, %v414
    %v416 = vtanh.pop %v405
    %418 = vrot.lane.b32.xlu0 %v193, 32
    %v419 = vpop.permute.xlu0 %418
    %v421 = vmul.f32 %v415, %v419
    %423 = vrot.lane.b32.xlu0 %v416, 64
    %v424 = vpop.permute.xlu0 %423
    %v426 = vmul.f32 %v415, %v424
    %428 = vrot.lane.b32.xlu0 %v426, 32
    %v429 = vpop.permute.xlu0 %428
    %v431 = vadd.f32 %v421, %v429
    %v432 = vtanh.pop %v431
    %434 = vrot.lane.b32.xlu0 %v432, 64
    %v435 = vpop.permute.xlu0 %434
    %v437 = vmul.f32 %v415, %v435
    %v439 = vcombine.high %v437, %v437
    %v441 = vunpack.c.l.s4 1966171168
    %v442 = vunpack.c.0.s8 %v441
    %v443 = vlaneseq
    %v444 = vshrl.u32 %v443, 7
    %v445 = vsub.s32 %v442, %v444
    %v446 = vrot.slane %v437, %v445
    %v448 = vunpack.c.l.s4 1966171168
    %v449 = vunpack.c.0.s8 %v448
    %v450 = vlaneseq
    %v451 = vshrl.u32 %v450, 7
    %v452 = vsub.s32 %v449, %v451
    %v453 = vrot.slane %v439, %v452
    %v454 = vcombine.high %v446, %v446
    %v455 = vcombine.high %v453, %v453
    %v457 = vunpack.c.l.s4 1966171168
    %v458 = vunpack.c.0.s8 %v457
    %v459 = vlaneseq
    %v460 = vshrl.u32 %v459, 7
    %v461 = vsub.s32 %v458, %v460
    %v462 = vrot.slane %v446, %v461
    %v464 = vunpack.c.l.s4 1966171168
    %v465 = vunpack.c.0.s8 %v464
    %v466 = vlaneseq
    %v467 = vshrl.u32 %v466, 7
    %v468 = vsub.s32 %v465, %v467
    %v469 = vrot.slane %v453, %v468
    %v471 = vunpack.c.l.s4 1966171168
    %v472 = vunpack.c.0.s8 %v471
    %v473 = vlaneseq
    %v474 = vshrl.u32 %v473, 7
    %v475 = vsub.s32 %v472, %v474
    %v476 = vrot.slane %v454, %v475
    %v478 = vunpack.c.l.s4 1966171168
    %v479 = vunpack.c.0.s8 %v478
    %v480 = vlaneseq
    %v481 = vshrl.u32 %v480, 7
    %v482 = vsub.s32 %v479, %v481
    %v483 = vrot.slane %v455, %v482
    %v484 = vcombine.high %v462, %v462
    %v485 = vcombine.high %v469, %v469
    %v486 = vcombine.high %v476, %v476
    %v487 = vcombine.high %v483, %v483
    %v488 = vld [vmem:[#allocation15] sm:$0xff]
    %v489 = vld [vmem:[#allocation15 + $0x8] sm:$0xff]
    %v490 = vld [vmem:[#allocation15 + $0x10] sm:$0xff]
    %v491 = vld [vmem:[#allocation15 + $0x18] sm:$0xff]
    %v492 = vld [vmem:[#allocation15 + $0x20] sm:$0xff]
    %v493 = vld [vmem:[#allocation15 + $0x28] sm:$0xff]
    %v494 = vld [vmem:[#allocation15 + $0x30] sm:$0xff]
    %v495 = vld [vmem:[#allocation15 + $0x38] sm:$0xff]
    %v496 = vlaneseq
    %v497 = vshrl.u32 %v496, 7
    %v498 = vsub.s32 0, %v497
    %v499 = vrot.slane %v462, %v498
    %v500 = vlaneseq
    %v501 = vshrl.u32 %v500, 7
    %v502 = vsub.s32 0, %v501
    %v503 = vrot.slane %v476, %v502
    %v504 = vlaneseq
    %v505 = vshrl.u32 %v504, 7
    %v506 = vsub.s32 0, %v505
    %v507 = vrot.slane %v484, %v506
    %v508 = vlaneseq
    %v509 = vshrl.u32 %v508, 7
    %v510 = vsub.s32 0, %v509
    %v511 = vrot.slane %v486, %v510
    %v512 = vlaneseq
    %v513 = vshrl.u32 %v512, 7
    %v514 = vsub.s32 0, %v513
    %v515 = vrot.slane %v469, %v514
    %v516 = vlaneseq
    %v517 = vshrl.u32 %v516, 7
    %v518 = vsub.s32 0, %v517
    %v519 = vrot.slane %v483, %v518
    %v520 = vlaneseq
    %v521 = vshrl.u32 %v520, 7
    %v522 = vsub.s32 0, %v521
    %v523 = vrot.slane %v485, %v522
    %v524 = vlaneseq
    %v525 = vshrl.u32 %v524, 7
    %v526 = vsub.s32 0, %v525
    %v527 = vrot.slane %v487, %v526
    %544 = vrot.lane.b32.xlu0 %v488, 96
    %v545 = vpop.permute.xlu0 %544
    %546 = vrot.lane.b32.xlu0 %v489, 96
    %v547 = vpop.permute.xlu0 %546
    %548 = vrot.lane.b32.xlu0 %v490, 96
    %v549 = vpop.permute.xlu0 %548
    %550 = vrot.lane.b32.xlu0 %v491, 96
    %v551 = vpop.permute.xlu0 %550
    %552 = vrot.lane.b32.xlu0 %v492, 96
    %v553 = vpop.permute.xlu0 %552
    %554 = vrot.lane.b32.xlu0 %v493, 96
    %v555 = vpop.permute.xlu0 %554
    %556 = vrot.lane.b32.xlu0 %v494, 96
    %v557 = vpop.permute.xlu0 %556
    %558 = vrot.lane.b32.xlu0 %v495, 96
    %v559 = vpop.permute.xlu0 %558
    %v568 = vmul.f32 %v499, %v545
    %v569 = vmul.f32 %v503, %v547
    %v570 = vmul.f32 %v507, %v549
    %v571 = vmul.f32 %v511, %v551
    %v572 = vmul.f32 %v515, %v553
    %v573 = vmul.f32 %v519, %v555
    %v574 = vmul.f32 %v523, %v557
    %v575 = vmul.f32 %v527, %v559
    %584 = vrot.lane.b32.xlu0 %v568, 32
    %v585 = vpop.permute.xlu0 %584
    %586 = vrot.lane.b32.xlu0 %v569, 32
    %v587 = vpop.permute.xlu0 %586
    %588 = vrot.lane.b32.xlu0 %v570, 32
    %v589 = vpop.permute.xlu0 %588
    %590 = vrot.lane.b32.xlu0 %v571, 32
    %v591 = vpop.permute.xlu0 %590
    %592 = vrot.lane.b32.xlu0 %v572, 32
    %v593 = vpop.permute.xlu0 %592
    %594 = vrot.lane.b32.xlu0 %v573, 32
    %v595 = vpop.permute.xlu0 %594
    %596 = vrot.lane.b32.xlu0 %v574, 32
    %v597 = vpop.permute.xlu0 %596
    %598 = vrot.lane.b32.xlu0 %v575, 32
    %v599 = vpop.permute.xlu0 %598
    %v608 = vsel %vm331, %v585, 0.0
    %609 = vadd.xlane.f32.xlu0 %v608
    %v610 = vpop.xlane.xlu0 %609
    %v611 = vsel %vm331, %v587, 0.0
    %612 = vadd.xlane.f32.xlu0 %v611
    %v613 = vpop.xlane.xlu0 %612
    %v614 = vsel %vm331, %v589, 0.0
    %615 = vadd.xlane.f32.xlu0 %v614
    %v616 = vpop.xlane.xlu0 %615
    %v617 = vsel %vm331, %v591, 0.0
    %618 = vadd.xlane.f32.xlu0 %v617
    %v619 = vpop.xlane.xlu0 %618
    %v620 = vsel %vm331, %v593, 0.0
    %621 = vadd.xlane.f32.xlu0 %v620
    %v622 = vpop.xlane.xlu0 %621
    %v623 = vsel %vm331, %v595, 0.0
    %624 = vadd.xlane.f32.xlu0 %v623
    %v625 = vpop.xlane.xlu0 %624
    %v626 = vsel %vm331, %v597, 0.0
    %627 = vadd.xlane.f32.xlu0 %v626
    %v628 = vpop.xlane.xlu0 %627
    %v629 = vsel %vm331, %v599, 0.0
    %630 = vadd.xlane.f32.xlu0 %v629
    %v631 = vpop.xlane.xlu0 %630
    %v632 = vld [vmem:[#allocation16] sm:$0xff]
    %v634 = vlaneseq
    %v635 = vshrl.u32 %v634, 7
    %v636 = vsub.s32 0, %v635
    %v637 = vrot.slane %v632, %v636
    %639 = vbcast.lane.b32.xlu0 %v637, 256
    %v640 = vpop.permute.xlu0 %639
    %v641 = vlaneseq
    %v642 = vshrl.u32 %v641, 7
    %v643 = vsub.s32 1, %v642
    %v644 = vrot.slane %v632, %v643
    %646 = vbcast.lane.b32.xlu0 %v644, 256
    %v647 = vpop.permute.xlu0 %646
    %v648 = vlaneseq
    %v649 = vshrl.u32 %v648, 7
    %v650 = vsub.s32 2, %v649
    %v651 = vrot.slane %v632, %v650
    %653 = vbcast.lane.b32.xlu0 %v651, 256
    %v654 = vpop.permute.xlu0 %653
    %v655 = vlaneseq
    %v656 = vshrl.u32 %v655, 7
    %v657 = vsub.s32 3, %v656
    %v658 = vrot.slane %v632, %v657
    %660 = vbcast.lane.b32.xlu0 %v658, 256
    %v661 = vpop.permute.xlu0 %660
    %v662 = vlaneseq
    %v663 = vshrl.u32 %v662, 7
    %v664 = vsub.s32 4, %v663
    %v665 = vrot.slane %v632, %v664
    %667 = vbcast.lane.b32.xlu0 %v665, 256
    %v668 = vpop.permute.xlu0 %667
    %v669 = vlaneseq
    %v670 = vshrl.u32 %v669, 7
    %v671 = vsub.s32 5, %v670
    %v672 = vrot.slane %v632, %v671
    %674 = vbcast.lane.b32.xlu0 %v672, 256
    %v675 = vpop.permute.xlu0 %674
    %v676 = vlaneseq
    %v677 = vshrl.u32 %v676, 7
    %v678 = vsub.s32 6, %v677
    %v679 = vrot.slane %v632, %v678
    %681 = vbcast.lane.b32.xlu0 %v679, 256
    %v682 = vpop.permute.xlu0 %681
    %v683 = vlaneseq
    %v684 = vshrl.u32 %v683, 7
    %v685 = vsub.s32 7, %v684
    %v686 = vrot.slane %v632, %v685
    %688 = vbcast.lane.b32.xlu0 %v686, 256
    %v689 = vpop.permute.xlu0 %688
    %v698 = vadd.f32 %v610, %v640
    %v699 = vadd.f32 %v613, %v647
    %v700 = vadd.f32 %v616, %v654
    %v701 = vadd.f32 %v619, %v661
    %v702 = vadd.f32 %v622, %v668
    %v703 = vadd.f32 %v625, %v675
    %v704 = vadd.f32 %v628, %v682
    %v705 = vadd.f32 %v631, %v689
    %714 = vset.pattern.permute.xlu0 0
    %715 = vperm.xlu0 %714, %v698
    %v716 = vpop.permute.xlu0 %715
    %717 = vset.pattern.permute.xlu0 0
    %718 = vperm.xlu0 %717, %v699
    %v719 = vpop.permute.xlu0 %718
    %720 = vset.pattern.permute.xlu0 0
    %721 = vperm.xlu0 %720, %v700
    %v722 = vpop.permute.xlu0 %721
    %723 = vset.pattern.permute.xlu0 0
    %724 = vperm.xlu0 %723, %v701
    %v725 = vpop.permute.xlu0 %724
    %726 = vset.pattern.permute.xlu0 0
    %727 = vperm.xlu0 %726, %v702
    %v728 = vpop.permute.xlu0 %727
    %729 = vset.pattern.permute.xlu0 0
    %730 = vperm.xlu0 %729, %v703
    %v731 = vpop.permute.xlu0 %730
    %732 = vset.pattern.permute.xlu0 0
    %733 = vperm.xlu0 %732, %v704
    %v734 = vpop.permute.xlu0 %733
    %735 = vset.pattern.permute.xlu0 0
    %736 = vperm.xlu0 %735, %v705
    %v737 = vpop.permute.xlu0 %736
    %v738 = vlaneseq
    %v739 = vand.u32 %v738, 127
    %v740 = vlaneseq
    %v741 = vshrl.u32 %v740, 7
    %v742 = vsub.s32 %v739, %v741
    %v743 = vrot.slane %v716, %v742
    %v744 = vlaneseq
    %v745 = vshrl.u32 %v744, 7
    %v746 = vsub.s32 %v739, %v745
    %v747 = vrot.slane %v719, %v746
    %v748 = vlaneseq
    %v749 = vshrl.u32 %v748, 7
    %v750 = vsub.s32 %v739, %v749
    %v751 = vrot.slane %v722, %v750
    %v752 = vlaneseq
    %v753 = vshrl.u32 %v752, 7
    %v754 = vsub.s32 %v739, %v753
    %v755 = vrot.slane %v725, %v754
    %v756 = vlaneseq
    %v757 = vshrl.u32 %v756, 7
    %v758 = vsub.s32 %v739, %v757
    %v759 = vrot.slane %v728, %v758
    %v760 = vlaneseq
    %v761 = vshrl.u32 %v760, 7
    %v762 = vsub.s32 %v739, %v761
    %v763 = vrot.slane %v731, %v762
    %v764 = vlaneseq
    %v765 = vshrl.u32 %v764, 7
    %v766 = vsub.s32 %v739, %v765
    %v767 = vrot.slane %v734, %v766
    %v768 = vlaneseq
    %v769 = vshrl.u32 %v768, 7
    %v770 = vsub.s32 %v739, %v769
    %v771 = vrot.slane %v737, %v770
    %vm772 = vcmask 1041409
    %v773 = vsel %vm772, %v747, %v743
    %vm774 = vcmask 1042434
    %v775 = vsel %vm774, %v751, %v773
    %vm776 = vcmask 1043459
    %v777 = vsel %vm776, %v755, %v775
    %vm778 = vcmask 1044484
    %v779 = vsel %vm778, %v759, %v777
    %vm780 = vcmask 1045509
    %v781 = vsel %vm780, %v763, %v779
    %vm782 = vcmask 1046534
    %v783 = vsel %vm782, %v767, %v781
    %vm784 = vcmask 1047559
    %v785 = vsel %vm784, %v771, %v783
    %vm787 = vcmask 64512
    %v788 = vsel %vm787, %v785, -inf
    %789 = vmax.xlane.f32.xlu0 %v788
    %v790 = vpop.xlane.xlu0 %789
    %v792 = vlaneseq
    %v793 = vshrl.u32 %v792, 7
    %v794 = vsub.s32 0, %v793
    %v795 = vrot.slane %v790, %v794
    %v796 = vlaneseq
    %v797 = vshrl.u32 %v796, 7
    %v798 = vsub.s32 1, %v797
    %v799 = vrot.slane %v790, %v798
    %v800 = vlaneseq
    %v801 = vshrl.u32 %v800, 7
    %v802 = vsub.s32 2, %v801
    %v803 = vrot.slane %v790, %v802
    %v804 = vlaneseq
    %v805 = vshrl.u32 %v804, 7
    %v806 = vsub.s32 3, %v805
    %v807 = vrot.slane %v790, %v806
    %v808 = vlaneseq
    %v809 = vshrl.u32 %v808, 7
    %v810 = vsub.s32 4, %v809
    %v811 = vrot.slane %v790, %v810
    %v812 = vlaneseq
    %v813 = vshrl.u32 %v812, 7
    %v814 = vsub.s32 5, %v813
    %v815 = vrot.slane %v790, %v814
    %v816 = vlaneseq
    %v817 = vshrl.u32 %v816, 7
    %v818 = vsub.s32 6, %v817
    %v819 = vrot.slane %v790, %v818
    %v820 = vlaneseq
    %v821 = vshrl.u32 %v820, 7
    %v822 = vsub.s32 7, %v821
    %v823 = vrot.slane %v790, %v822
    %v832 = vsub.f32 %v698, %v795
    %v833 = vsub.f32 %v699, %v799
    %v834 = vsub.f32 %v700, %v803
    %v835 = vsub.f32 %v701, %v807
    %v836 = vsub.f32 %v702, %v811
    %v837 = vsub.f32 %v703, %v815
    %v838 = vsub.f32 %v704, %v819
    %v839 = vsub.f32 %v705, %v823
    %v840 = vmul.f32 %v832, 1.442695
    %v841 = vpow.pop %v840
    %v842 = vmul.f32 %v833, 1.442695
    %v843 = vpow.pop %v842
    %v844 = vmul.f32 %v834, 1.442695
    %v845 = vpow.pop %v844
    %v846 = vmul.f32 %v835, 1.442695
    %v847 = vpow.pop %v846
    %v848 = vmul.f32 %v836, 1.442695
    %v849 = vpow.pop %v848
    %v850 = vmul.f32 %v837, 1.442695
    %v851 = vpow.pop %v850
    %v852 = vmul.f32 %v838, 1.442695
    %v853 = vpow.pop %v852
    %v854 = vmul.f32 %v839, 1.442695
    %v855 = vpow.pop %v854
    %864 = vset.pattern.permute.xlu0 0
    %865 = vperm.xlu0 %864, %v841
    %v866 = vpop.permute.xlu0 %865
    %867 = vset.pattern.permute.xlu0 0
    %868 = vperm.xlu0 %867, %v843
    %v869 = vpop.permute.xlu0 %868
    %870 = vset.pattern.permute.xlu0 0
    %871 = vperm.xlu0 %870, %v845
    %v872 = vpop.permute.xlu0 %871
    %873 = vset.pattern.permute.xlu0 0
    %874 = vperm.xlu0 %873, %v847
    %v875 = vpop.permute.xlu0 %874
    %876 = vset.pattern.permute.xlu0 0
    %877 = vperm.xlu0 %876, %v849
    %v878 = vpop.permute.xlu0 %877
    %879 = vset.pattern.permute.xlu0 0
    %880 = vperm.xlu0 %879, %v851
    %v881 = vpop.permute.xlu0 %880
    %882 = vset.pattern.permute.xlu0 0
    %883 = vperm.xlu0 %882, %v853
    %v884 = vpop.permute.xlu0 %883
    %885 = vset.pattern.permute.xlu0 0
    %886 = vperm.xlu0 %885, %v855
    %v887 = vpop.permute.xlu0 %886
    %v888 = vlaneseq
    %v889 = vshrl.u32 %v888, 7
    %v890 = vsub.s32 %v739, %v889
    %v891 = vrot.slane %v866, %v890
    %v892 = vlaneseq
    %v893 = vshrl.u32 %v892, 7
    %v894 = vsub.s32 %v739, %v893
    %v895 = vrot.slane %v869, %v894
    %v896 = vlaneseq
    %v897 = vshrl.u32 %v896, 7
    %v898 = vsub.s32 %v739, %v897
    %v899 = vrot.slane %v872, %v898
    %v900 = vlaneseq
    %v901 = vshrl.u32 %v900, 7
    %v902 = vsub.s32 %v739, %v901
    %v903 = vrot.slane %v875, %v902
    %v904 = vlaneseq
    %v905 = vshrl.u32 %v904, 7
    %v906 = vsub.s32 %v739, %v905
    %v907 = vrot.slane %v878, %v906
    %v908 = vlaneseq
    %v909 = vshrl.u32 %v908, 7
    %v910 = vsub.s32 %v739, %v909
    %v911 = vrot.slane %v881, %v910
    %v912 = vlaneseq
    %v913 = vshrl.u32 %v912, 7
    %v914 = vsub.s32 %v739, %v913
    %v915 = vrot.slane %v884, %v914
    %v916 = vlaneseq
    %v917 = vshrl.u32 %v916, 7
    %v918 = vsub.s32 %v739, %v917
    %v919 = vrot.slane %v887, %v918
    %v920 = vsel %vm772, %v895, %v891
    %v921 = vsel %vm774, %v899, %v920
    %v922 = vsel %vm776, %v903, %v921
    %v923 = vsel %vm778, %v907, %v922
    %v924 = vsel %vm780, %v911, %v923
    %v925 = vsel %vm782, %v915, %v924
    %v926 = vsel %vm784, %v919, %v925
    %v928 = vsel %vm787, %v926, 0.0
    %929 = vadd.xlane.f32.xlu0 %v928
    %v930 = vpop.xlane.xlu0 %929
    %v931 = vrcp.pop %v930
    %v933 = vlaneseq
    %v934 = vshrl.u32 %v933, 7
    %v935 = vsub.s32 0, %v934
    %v936 = vrot.slane %v931, %v935
    %v937 = vlaneseq
    %v938 = vshrl.u32 %v937, 7
    %v939 = vsub.s32 1, %v938
    %v940 = vrot.slane %v931, %v939
    %v941 = vlaneseq
    %v942 = vshrl.u32 %v941, 7
    %v943 = vsub.s32 2, %v942
    %v944 = vrot.slane %v931, %v943
    %v945 = vlaneseq
    %v946 = vshrl.u32 %v945, 7
    %v947 = vsub.s32 3, %v946
    %v948 = vrot.slane %v931, %v947
    %v949 = vlaneseq
    %v950 = vshrl.u32 %v949, 7
    %v951 = vsub.s32 4, %v950
    %v952 = vrot.slane %v931, %v951
    %v953 = vlaneseq
    %v954 = vshrl.u32 %v953, 7
    %v955 = vsub.s32 5, %v954
    %v956 = vrot.slane %v931, %v955
    %v957 = vlaneseq
    %v958 = vshrl.u32 %v957, 7
    %v959 = vsub.s32 6, %v958
    %v960 = vrot.slane %v931, %v959
    %v961 = vlaneseq
    %v962 = vshrl.u32 %v961, 7
    %v963 = vsub.s32 7, %v962
    %v964 = vrot.slane %v931, %v963
    %v973 = vmul.f32 %v841, %v936
    %v974 = vmul.f32 %v843, %v940
    %v975 = vmul.f32 %v845, %v944
    %v976 = vmul.f32 %v847, %v948
    %v977 = vmul.f32 %v849, %v952
    %v978 = vmul.f32 %v851, %v956
    %v979 = vmul.f32 %v853, %v960
    %v980 = vmul.f32 %v855, %v964
    %v981 = vld [vmem:[#allocation18] sm:$0xff]
    %v982 = vld [vmem:[#allocation18 + $0x8] sm:$0xff]
    %v983 = vld [vmem:[#allocation18 + $0x10] sm:$0xff]
    %v984 = vld [vmem:[#allocation18 + $0x18] sm:$0xff]
    %v985 = vld [vmem:[#allocation18 + $0x20] sm:$0xff]
    %v986 = vld [vmem:[#allocation18 + $0x28] sm:$0xff]
    %v987 = vld [vmem:[#allocation18 + $0x30] sm:$0xff]
    %v988 = vld [vmem:[#allocation18 + $0x38] sm:$0xff]
    %990 = vset.pattern.permute.xlu0 0
    %991 = vperm.xlu0 %990, %v973
    %v992 = vpop.permute.xlu0 %991
    %995 = vset.pattern.permute.xlu0 0
    %996 = vperm.xlu0 %995, %v974
    %v997 = vpop.permute.xlu0 %996
    %1000 = vset.pattern.permute.xlu0 0
    %1001 = vperm.xlu0 %1000, %v975
    %v1002 = vpop.permute.xlu0 %1001
    %1005 = vset.pattern.permute.xlu0 0
    %1006 = vperm.xlu0 %1005, %v976
    %v1007 = vpop.permute.xlu0 %1006
    %1010 = vset.pattern.permute.xlu0 0
    %1011 = vperm.xlu0 %1010, %v977
    %v1012 = vpop.permute.xlu0 %1011
    %1015 = vset.pattern.permute.xlu0 0
    %1016 = vperm.xlu0 %1015, %v978
    %v1017 = vpop.permute.xlu0 %1016
    %1020 = vset.pattern.permute.xlu0 0
    %1021 = vperm.xlu0 %1020, %v979
    %v1022 = vpop.permute.xlu0 %1021
    %1025 = vset.pattern.permute.xlu0 0
    %1026 = vperm.xlu0 %1025, %v980
    %v1027 = vpop.permute.xlu0 %1026
    %v1029 = vmul.f32 %v992, %v981
    %v1030 = vmul.f32 %v997, %v982
    %v1031 = vmul.f32 %v1002, %v983
    %v1032 = vmul.f32 %v1007, %v984
    %v1033 = vmul.f32 %v1012, %v985
    %v1034 = vmul.f32 %v1017, %v986
    %v1035 = vmul.f32 %v1022, %v987
    %v1036 = vmul.f32 %v1027, %v988
    %v1037 = vsel %vm199, %v1029, 0.0
    %v1038 = vrot.slane %v1037, 4
    %v1039 = vadd.f32 %v1037, %v1038
    %v1040 = vrot.slane %v1039, 2
    %v1041 = vadd.f32 %v1039, %v1040
    %v1042 = vrot.slane %v1041, 1
    %v1043 = vadd.f32 %v1041, %v1042
    %v1044 = vsel %vm199, %v1030, 0.0
    %v1045 = vrot.slane %v1044, 4
    %v1046 = vadd.f32 %v1044, %v1045
    %v1047 = vrot.slane %v1046, 2
    %v1048 = vadd.f32 %v1046, %v1047
    %v1049 = vrot.slane %v1048, 1
    %v1050 = vadd.f32 %v1048, %v1049
    %v1051 = vsel %vm199, %v1031, 0.0
    %v1052 = vrot.slane %v1051, 4
    %v1053 = vadd.f32 %v1051, %v1052
    %v1054 = vrot.slane %v1053, 2
    %v1055 = vadd.f32 %v1053, %v1054
    %v1056 = vrot.slane %v1055, 1
    %v1057 = vadd.f32 %v1055, %v1056
    %v1058 = vsel %vm199, %v1032, 0.0
    %v1059 = vrot.slane %v1058, 4
    %v1060 = vadd.f32 %v1058, %v1059
    %v1061 = vrot.slane %v1060, 2
    %v1062 = vadd.f32 %v1060, %v1061
    %v1063 = vrot.slane %v1062, 1
    %v1064 = vadd.f32 %v1062, %v1063
    %v1065 = vsel %vm199, %v1033, 0.0
    %v1066 = vrot.slane %v1065, 4
    %v1067 = vadd.f32 %v1065, %v1066
    %v1068 = vrot.slane %v1067, 2
    %v1069 = vadd.f32 %v1067, %v1068
    %v1070 = vrot.slane %v1069, 1
    %v1071 = vadd.f32 %v1069, %v1070
    %v1072 = vsel %vm199, %v1034, 0.0
    %v1073 = vrot.slane %v1072, 4
    %v1074 = vadd.f32 %v1072, %v1073
    %v1075 = vrot.slane %v1074, 2
    %v1076 = vadd.f32 %v1074, %v1075
    %v1077 = vrot.slane %v1076, 1
    %v1078 = vadd.f32 %v1076, %v1077
    %v1079 = vsel %vm199, %v1035, 0.0
    %v1080 = vrot.slane %v1079, 4
    %v1081 = vadd.f32 %v1079, %v1080
    %v1082 = vrot.slane %v1081, 2
    %v1083 = vadd.f32 %v1081, %v1082
    %v1084 = vrot.slane %v1083, 1
    %v1085 = vadd.f32 %v1083, %v1084
    %v1086 = vsel %vm199, %v1036, 0.0
    %v1087 = vrot.slane %v1086, 4
    %v1088 = vadd.f32 %v1086, %v1087
    %v1089 = vrot.slane %v1088, 2
    %v1090 = vadd.f32 %v1088, %v1089
    %v1091 = vrot.slane %v1090, 1
    %v1092 = vadd.f32 %v1090, %v1091
    %1093 = vrot.lane.b32.xlu0 %v437, 32
    %v1094 = vpop.permute.xlu0 %1093
    %v1104 = vsel %vm772, %v1050, %v1043
    %v1105 = vsel %vm774, %v1057, %v1104
    %v1106 = vsel %vm776, %v1064, %v1105
    %v1107 = vsel %vm778, %v1071, %v1106
    %v1108 = vsel %vm780, %v1078, %v1107
    %v1109 = vsel %vm782, %v1085, %v1108
    %v1110 = vsel %vm784, %v1092, %v1109
    %1111 = vrot.lane.b32.xlu0 %v1110, 32
    %v1112 = vpop.permute.xlu0 %1111
    %v1114 = vsel %vm331, %v1094, %v1112
    %v1115 = vpack.c.bf16 %v1114, %v1114
    %v1116 = vld [vmem:[#allocation19] sm:$0xf]
    %v1117 = vld [vmem:[#allocation19 + $0x4] sm:$0xf]
    %v1118 = vld [vmem:[#allocation19 + $0x8] sm:$0xf]
    %v1119 = vld [vmem:[#allocation19 + $0xc] sm:$0xf]
    %v1120 = vld [vmem:[#allocation19 + $0x10] sm:$0xf]
    %v1121 = vld [vmem:[#allocation19 + $0x14] sm:$0xf]
    %v1122 = vld [vmem:[#allocation19 + $0x18] sm:$0xf]
    %v1123 = vld [vmem:[#allocation19 + $0x1c] sm:$0xf]
    %v1124 = vld [vmem:[#allocation19 + $0x20] sm:$0xf]
    %v1125 = vld [vmem:[#allocation19 + $0x24] sm:$0xf]
    %v1126 = vld [vmem:[#allocation19 + $0x28] sm:$0xf]
    %v1127 = vld [vmem:[#allocation19 + $0x2c] sm:$0xf]
    %v1128 = vld [vmem:[%s11] sm:$0xff]
    %v1141 = vunpack.c.l.b16 %v1116
    %v1142 = vunpack.c.l.b16 %v1117
    %v1143 = vunpack.c.l.b16 %v1118
    %v1144 = vunpack.c.l.b16 %v1119
    %v1145 = vunpack.c.l.b16 %v1120
    %v1146 = vunpack.c.l.b16 %v1121
    %v1147 = vunpack.c.l.b16 %v1122
    %v1148 = vunpack.c.l.b16 %v1123
    %v1149 = vunpack.c.l.b16 %v1124
    %v1150 = vunpack.c.l.b16 %v1125
    %v1151 = vunpack.c.l.b16 %v1126
    %v1152 = vunpack.c.l.b16 %v1127
    %v1153 = vpack.c.b16 %v1142, %v1141
    %v1154 = vpack.c.b16 %v1144, %v1143
    %v1155 = vpack.c.b16 %v1146, %v1145
    %v1156 = vpack.c.b16 %v1148, %v1147
    %v1157 = vpack.c.b16 %v1150, %v1149
    %v1158 = vpack.c.b16 %v1152, %v1151
    %v1166 = vsel %vm251, %v1115, 0
    %1168 = vmatprep.subr.bf16.mxu0 0
    %1169 = vmatpush1.bf16.msra.mxu0 0
    %1170 = vmatprep.subr.bf16.mxu0 0
    %1171 = vmatpush1.bf16.msra.mxu0 0
    %1172 = vmatprep.subr.bf16.mxu0 0
    %1173 = vmatpush1.bf16.msra.mxu0 %v1158
    %1174 = vmatprep.subr.bf16.mxu0 0
    %1175 = vmatpush1.bf16.msra.mxu0 %v1157
    %1176 = vmatprep.subr.bf16.mxu0 0
    %1177 = vmatpush1.bf16.msra.mxu0 %v1156
    %1178 = vmatprep.subr.bf16.mxu0 0
    %1179 = vmatpush1.bf16.msra.mxu0 %v1155
    %1180 = vmatprep.subr.bf16.mxu0 0
    %1181 = vmatpush1.bf16.msra.mxu0 %v1154
    %1182 = vmatprep.subr.bf16.mxu0 0
    %1183 = vmatpush1.bf16.msra.mxu0 %v1153
    %1184 = vmatprep.subr.bf16.mxu0 0
    %1185 = vmatpush2.bf16.msra.mxu0 0
    %1186 = vmatprep.subr.bf16.mxu0 0
    %1187 = vmatpush2.bf16.msra.mxu0 0
    %1188 = vmatprep.subr.bf16.mxu0 0
    %1189 = vmatpush2.bf16.msra.mxu0 0
    %1190 = vmatprep.subr.bf16.mxu0 0
    %1191 = vmatpush2.bf16.msra.mxu0 0
    %1192 = vmatprep.subr.bf16.mxu0 0
    %1193 = vmatpush2.bf16.msra.mxu0 0
    %1194 = vmatprep.subr.bf16.mxu0 0
    %1195 = vmatpush2.bf16.msra.mxu0 0
    %1196 = vmatprep.subr.bf16.mxu0 0
    %1197 = vmatpush2.bf16.msra.mxu0 0
    %1198 = vmatprep.subr.bf16.mxu0 0
    %1199 = vmatpush2.bf16.msra.mxu0 0
    %1200 = vmatprep.mubr.bf16.mxu0 0
    %1201 = vmatmul.mubr.bf16.gmra.mxu0 %v1166
    %v1202 = vpop.f32.mrf.mxu0
    %v1203 = vadd.f32 %v1128, %v1202
    %v1204 = vpop.f32.mrf.mxu0
    %v1205 = vpop.f32.mrf.mxu0
    %v1206 = vpop.f32.mrf.mxu0
    %1207 = vdwg.mxu0
    %v1208 = vtanh.pop %v1203
    %1209 = vst [vmem:[#allocation21] sm:$0xff] %v1208
    %s1210 = scalar_lea.vmem [#allocation4], 8
    %v1211 = vld [vmem:[%s1210] sm:$0xff]
    %1212 = vrot.lane.b32.xlu0 %v322, 96
    %v1213 = vpop.permute.xlu0 %1212
    %v1215 = vsel %vm199, %v1211, %v1213
    %v1216 = vpack.c.bf16 %v1215, %v1215
    %v1217 = vld [vmem:[#allocation10] sm:$0xf]
    %v1218 = vld [vmem:[#allocation10 + $0x4] sm:$0xf]
    %v1219 = vld [vmem:[#allocation10 + $0x8] sm:$0xf]
    %v1220 = vld [vmem:[#allocation10 + $0xc] sm:$0xf]
    %v1221 = vld [vmem:[#allocation10 + $0x10] sm:$0xf]
    %v1222 = vld [vmem:[#allocation10 + $0x14] sm:$0xf]
    %v1223 = vld [vmem:[#allocation10 + $0x18] sm:$0xf]
    %v1224 = vld [vmem:[#allocation10 + $0x1c] sm:$0xf]
    %v1225 = vld [vmem:[#allocation10 + $0x20] sm:$0xf]
    %v1226 = vld [vmem:[#allocation10 + $0x24] sm:$0xf]
    %v1227 = vld [vmem:[#allocation10 + $0x28] sm:$0xf]
    %v1228 = vld [vmem:[#allocation10 + $0x2c] sm:$0xf]
    %v1229 = vld [vmem:[#allocation12] sm:$0xff]
    %v1242 = vunpack.c.l.b16 %v1217
    %v1243 = vunpack.c.l.b16 %v1218
    %v1244 = vunpack.c.l.b16 %v1219
    %v1245 = vunpack.c.l.b16 %v1220
    %v1246 = vunpack.c.l.b16 %v1221
    %v1247 = vunpack.c.l.b16 %v1222
    %v1248 = vunpack.c.l.b16 %v1223
    %v1249 = vunpack.c.l.b16 %v1224
    %v1250 = vunpack.c.l.b16 %v1225
    %v1251 = vunpack.c.l.b16 %v1226
    %v1252 = vunpack.c.l.b16 %v1227
    %v1253 = vunpack.c.l.b16 %v1228
    %v1254 = vpack.c.b16 %v1243, %v1242
    %v1255 = vpack.c.b16 %v1245, %v1244
    %v1256 = vpack.c.b16 %v1247, %v1246
    %v1257 = vpack.c.b16 %v1249, %v1248
    %v1258 = vpack.c.b16 %v1251, %v1250
    %v1259 = vpack.c.b16 %v1253, %v1252
    %v1267 = vsel %vm251, %v1216, 0
    %1269 = vmatprep.subr.bf16.mxu0 0
    %1270 = vmatpush1.bf16.msra.mxu0 0
    %1271 = vmatprep.subr.bf16.mxu0 0
    %1272 = vmatpush1.bf16.msra.mxu0 0
    %1273 = vmatprep.subr.bf16.mxu0 0
    %1274 = vmatpush1.bf16.msra.mxu0 %v1259
    %1275 = vmatprep.subr.bf16.mxu0 0
    %1276 = vmatpush1.bf16.msra.mxu0 %v1258
    %1277 = vmatprep.subr.bf16.mxu0 0
    %1278 = vmatpush1.bf16.msra.mxu0 %v1257
    %1279 = vmatprep.subr.bf16.mxu0 0
    %1280 = vmatpush1.bf16.msra.mxu0 %v1256
    %1281 = vmatprep.subr.bf16.mxu0 0
    %1282 = vmatpush1.bf16.msra.mxu0 %v1255
    %1283 = vmatprep.subr.bf16.mxu0 0
    %1284 = vmatpush1.bf16.msra.mxu0 %v1254
    %1285 = vmatprep.subr.bf16.mxu0 0
    %1286 = vmatpush2.bf16.msra.mxu0 0
    %1287 = vmatprep.subr.bf16.mxu0 0
    %1288 = vmatpush2.bf16.msra.mxu0 0
    %1289 = vmatprep.subr.bf16.mxu0 0
    %1290 = vmatpush2.bf16.msra.mxu0 0
    %1291 = vmatprep.subr.bf16.mxu0 0
    %1292 = vmatpush2.bf16.msra.mxu0 0
    %1293 = vmatprep.subr.bf16.mxu0 0
    %1294 = vmatpush2.bf16.msra.mxu0 0
    %1295 = vmatprep.subr.bf16.mxu0 0
    %1296 = vmatpush2.bf16.msra.mxu0 0
    %1297 = vmatprep.subr.bf16.mxu0 0
    %1298 = vmatpush2.bf16.msra.mxu0 0
    %1299 = vmatprep.subr.bf16.mxu0 0
    %1300 = vmatpush2.bf16.msra.mxu0 0
    %1301 = vmatprep.mubr.bf16.mxu0 0
    %1302 = vmatmul.mubr.bf16.gmra.mxu0 %v1267
    %v1303 = vpop.f32.mrf.mxu0
    %v1304 = vadd.f32 %v1229, %v1303
    %v1305 = vpop.f32.mrf.mxu0
    %v1306 = vpop.f32.mrf.mxu0
    %v1307 = vpop.f32.mrf.mxu0
    %1308 = vdwg.mxu0
    %v1309 = vxor.u32 %v1304, 2147483648
    %v1310 = vmul.f32 %v1309, 1.442695
    %v1311 = vpow.pop %v1310
    %v1312 = vadd.f32 %v1311, 1.0
    %v1313 = vrcp.pop %v1312
    %v1314 = vmul.f32 1.0, %v1313
    %v1315 = vtanh.pop %v1304
    %v1316 = vmul.f32 %v1314, %v316
    %1318 = vrot.lane.b32.xlu0 %v1315, 64
    %v1319 = vpop.permute.xlu0 %1318
    %v1321 = vmul.f32 %v1314, %v1319
    %1323 = vrot.lane.b32.xlu0 %v1321, 32
    %v1324 = vpop.permute.xlu0 %1323
    %v1326 = vadd.f32 %v1316, %v1324
    %v1327 = vtanh.pop %v1326
    %1329 = vrot.lane.b32.xlu0 %v1327, 64
    %v1330 = vpop.permute.xlu0 %1329
    %v1332 = vmul.f32 %v1314, %v1330
    %1334 = vrot.lane.b32.xlu0 %v1332, 32
    %v1335 = vpop.permute.xlu0 %1334
    %1337 = vrot.lane.b32.xlu0 %v437, 64
    %v1338 = vpop.permute.xlu0 %1337
    %v1340 = vsel %vm331, %v1335, %v1338
    %v1341 = vpack.c.bf16 %v1340, %v1340
    %v1342 = vld [vmem:[#allocation13] sm:$0xf]
    %v1343 = vld [vmem:[#allocation13 + $0x4] sm:$0xf]
    %v1344 = vld [vmem:[#allocation13 + $0x8] sm:$0xf]
    %v1345 = vld [vmem:[#allocation13 + $0xc] sm:$0xf]
    %v1346 = vld [vmem:[#allocation13 + $0x10] sm:$0xf]
    %v1347 = vld [vmem:[#allocation13 + $0x14] sm:$0xf]
    %v1348 = vld [vmem:[#allocation13 + $0x18] sm:$0xf]
    %v1349 = vld [vmem:[#allocation13 + $0x1c] sm:$0xf]
    %v1350 = vld [vmem:[%s6] sm:$0xff]
    %v1359 = vunpack.c.l.b16 %v1342
    %v1360 = vunpack.c.l.b16 %v1343
    %v1361 = vunpack.c.l.b16 %v1344
    %v1362 = vunpack.c.l.b16 %v1345
    %v1363 = vunpack.c.l.b16 %v1346
    %v1364 = vunpack.c.l.b16 %v1347
    %v1365 = vunpack.c.l.b16 %v1348
    %v1366 = vunpack.c.l.b16 %v1349
    %v1367 = vpack.c.b16 %v1360, %v1359
    %v1368 = vpack.c.b16 %v1362, %v1361
    %v1369 = vpack.c.b16 %v1364, %v1363
    %v1370 = vpack.c.b16 %v1366, %v1365
    %v1376 = vsel %vm199, %v1341, 0
    %1378 = vmatprep.subr.bf16.mxu0 0
    %1379 = vmatpush1.bf16.msra.mxu0 0
    %1380 = vmatprep.subr.bf16.mxu0 0
    %1381 = vmatpush1.bf16.msra.mxu0 0
    %1382 = vmatprep.subr.bf16.mxu0 0
    %1383 = vmatpush1.bf16.msra.mxu0 0
    %1384 = vmatprep.subr.bf16.mxu0 0
    %1385 = vmatpush1.bf16.msra.mxu0 0
    %1386 = vmatprep.subr.bf16.mxu0 0
    %1387 = vmatpush1.bf16.msra.mxu0 %v1370
    %1388 = vmatprep.subr.bf16.mxu0 0
    %1389 = vmatpush1.bf16.msra.mxu0 %v1369
    %1390 = vmatprep.subr.bf16.mxu0 0
    %1391 = vmatpush1.bf16.msra.mxu0 %v1368
    %1392 = vmatprep.subr.bf16.mxu0 0
    %1393 = vmatpush1.bf16.msra.mxu0 %v1367
    %1394 = vmatprep.subr.bf16.mxu0 0
    %1395 = vmatpush2.bf16.msra.mxu0 0
    %1396 = vmatprep.subr.bf16.mxu0 0
    %1397 = vmatpush2.bf16.msra.mxu0 0
    %1398 = vmatprep.subr.bf16.mxu0 0
    %1399 = vmatpush2.bf16.msra.mxu0 0
    %1400 = vmatprep.subr.bf16.mxu0 0
    %1401 = vmatpush2.bf16.msra.mxu0 0
    %1402 = vmatprep.subr.bf16.mxu0 0
    %1403 = vmatpush2.bf16.msra.mxu0 0
    %1404 = vmatprep.subr.bf16.mxu0 0
    %1405 = vmatpush2.bf16.msra.mxu0 0
    %1406 = vmatprep.subr.bf16.mxu0 0
    %1407 = vmatpush2.bf16.msra.mxu0 0
    %1408 = vmatprep.subr.bf16.mxu0 0
    %1409 = vmatpush2.bf16.msra.mxu0 0
    %1410 = vmatprep.mubr.bf16.mxu0 0
    %1411 = vmatmul.mubr.bf16.gmra.mxu0 %v1376
    %v1412 = vpop.f32.mrf.mxu0
    %v1413 = vadd.f32 %v1350, %v1412
    %v1414 = vpop.f32.mrf.mxu0
    %v1415 = vpop.f32.mrf.mxu0
    %v1416 = vpop.f32.mrf.mxu0
    %1417 = vdwg.mxu0
    %v1418 = vxor.u32 %v1413, 2147483648
    %v1419 = vmul.f32 %v1418, 1.442695
    %v1420 = vpow.pop %v1419
    %v1421 = vadd.f32 %v1420, 1.0
    %v1422 = vrcp.pop %v1421
    %v1423 = vmul.f32 1.0, %v1422
    %v1424 = vtanh.pop %v1413
    %v1425 = vmul.f32 %v1423, %v431
    %1427 = vrot.lane.b32.xlu0 %v1424, 64
    %v1428 = vpop.permute.xlu0 %1427
    %v1430 = vmul.f32 %v1423, %v1428
    %1432 = vrot.lane.b32.xlu0 %v1430, 32
    %v1433 = vpop.permute.xlu0 %1432
    %v1435 = vadd.f32 %v1425, %v1433
    %v1436 = vtanh.pop %v1435
    %1438 = vrot.lane.b32.xlu0 %v1436, 64
    %v1439 = vpop.permute.xlu0 %1438
    %v1441 = vmul.f32 %v1423, %v1439
    %v1443 = vcombine.high %v1441, %v1441
    %v1445 = vunpack.c.l.s4 1966171168
    %v1446 = vunpack.c.0.s8 %v1445
    %v1447 = vlaneseq
    %v1448 = vshrl.u32 %v1447, 7
    %v1449 = vsub.s32 %v1446, %v1448
    %v1450 = vrot.slane %v1441, %v1449
    %v1452 = vunpack.c.l.s4 1966171168
    %v1453 = vunpack.c.0.s8 %v1452
    %v1454 = vlaneseq
    %v1455 = vshrl.u32 %v1454, 7
    %v1456 = vsub.s32 %v1453, %v1455
    %v1457 = vrot.slane %v1443, %v1456
    %v1458 = vcombine.high %v1450, %v1450
    %v1459 = vcombine.high %v1457, %v1457
    %v1461 = vunpack.c.l.s4 1966171168
    %v1462 = vunpack.c.0.s8 %v1461
    %v1463 = vlaneseq
    %v1464 = vshrl.u32 %v1463, 7
    %v1465 = vsub.s32 %v1462, %v1464
    %v1466 = vrot.slane %v1450, %v1465
    %v1468 = vunpack.c.l.s4 1966171168
    %v1469 = vunpack.c.0.s8 %v1468
    %v1470 = vlaneseq
    %v1471 = vshrl.u32 %v1470, 7
    %v1472 = vsub.s32 %v1469, %v1471
    %v1473 = vrot.slane %v1457, %v1472
    %v1475 = vunpack.c.l.s4 1966171168
    %v1476 = vunpack.c.0.s8 %v1475
    %v1477 = vlaneseq
    %v1478 = vshrl.u32 %v1477, 7
    %v1479 = vsub.s32 %v1476, %v1478
    %v1480 = vrot.slane %v1458, %v1479
    %v1482 = vunpack.c.l.s4 1966171168
    %v1483 = vunpack.c.0.s8 %v1482
    %v1484 = vlaneseq
    %v1485 = vshrl.u32 %v1484, 7
    %v1486 = vsub.s32 %v1483, %v1485
    %v1487 = vrot.slane %v1459, %v1486
    %v1488 = vcombine.high %v1466, %v1466
    %v1489 = vcombine.high %v1473, %v1473
    %v1490 = vcombine.high %v1480, %v1480
    %v1491 = vcombine.high %v1487, %v1487
    %v1492 = vld [vmem:[#allocation15] sm:$0xff]
    %v1493 = vld [vmem:[#allocation15 + $0x8] sm:$0xff]
    %v1494 = vld [vmem:[#allocation15 + $0x10] sm:$0xff]
    %v1495 = vld [vmem:[#allocation15 + $0x18] sm:$0xff]
    %v1496 = vld [vmem:[#allocation15 + $0x20] sm:$0xff]
    %v1497 = vld [vmem:[#allocation15 + $0x28] sm:$0xff]
    %v1498 = vld [vmem:[#allocation15 + $0x30] sm:$0xff]
    %v1499 = vld [vmem:[#allocation15 + $0x38] sm:$0xff]
    %v1500 = vlaneseq
    %v1501 = vshrl.u32 %v1500, 7
    %v1502 = vsub.s32 0, %v1501
    %v1503 = vrot.slane %v1466, %v1502
    %v1504 = vlaneseq
    %v1505 = vshrl.u32 %v1504, 7
    %v1506 = vsub.s32 0, %v1505
    %v1507 = vrot.slane %v1480, %v1506
    %v1508 = vlaneseq
    %v1509 = vshrl.u32 %v1508, 7
    %v1510 = vsub.s32 0, %v1509
    %v1511 = vrot.slane %v1488, %v1510
    %v1512 = vlaneseq
    %v1513 = vshrl.u32 %v1512, 7
    %v1514 = vsub.s32 0, %v1513
    %v1515 = vrot.slane %v1490, %v1514
    %v1516 = vlaneseq
    %v1517 = vshrl.u32 %v1516, 7
    %v1518 = vsub.s32 0, %v1517
    %v1519 = vrot.slane %v1473, %v1518
    %v1520 = vlaneseq
    %v1521 = vshrl.u32 %v1520, 7
    %v1522 = vsub.s32 0, %v1521
    %v1523 = vrot.slane %v1487, %v1522
    %v1524 = vlaneseq
    %v1525 = vshrl.u32 %v1524, 7
    %v1526 = vsub.s32 0, %v1525
    %v1527 = vrot.slane %v1489, %v1526
    %v1528 = vlaneseq
    %v1529 = vshrl.u32 %v1528, 7
    %v1530 = vsub.s32 0, %v1529
    %v1531 = vrot.slane %v1491, %v1530
    %1548 = vrot.lane.b32.xlu0 %v1492, 96
    %v1549 = vpop.permute.xlu0 %1548
    %1550 = vrot.lane.b32.xlu0 %v1493, 96
    %v1551 = vpop.permute.xlu0 %1550
    %1552 = vrot.lane.b32.xlu0 %v1494, 96
    %v1553 = vpop.permute.xlu0 %1552
    %1554 = vrot.lane.b32.xlu0 %v1495, 96
    %v1555 = vpop.permute.xlu0 %1554
    %1556 = vrot.lane.b32.xlu0 %v1496, 96
    %v1557 = vpop.permute.xlu0 %1556
    %1558 = vrot.lane.b32.xlu0 %v1497, 96
    %v1559 = vpop.permute.xlu0 %1558
    %1560 = vrot.lane.b32.xlu0 %v1498, 96
    %v1561 = vpop.permute.xlu0 %1560
    %1562 = vrot.lane.b32.xlu0 %v1499, 96
    %v1563 = vpop.permute.xlu0 %1562
    %v1572 = vmul.f32 %v1503, %v1549
    %v1573 = vmul.f32 %v1507, %v1551
    %v1574 = vmul.f32 %v1511, %v1553
    %v1575 = vmul.f32 %v1515, %v1555
    %v1576 = vmul.f32 %v1519, %v1557
    %v1577 = vmul.f32 %v1523, %v1559
    %v1578 = vmul.f32 %v1527, %v1561
    %v1579 = vmul.f32 %v1531, %v1563
    %1588 = vrot.lane.b32.xlu0 %v1572, 32
    %v1589 = vpop.permute.xlu0 %1588
    %1590 = vrot.lane.b32.xlu0 %v1573, 32
    %v1591 = vpop.permute.xlu0 %1590
    %1592 = vrot.lane.b32.xlu0 %v1574, 32
    %v1593 = vpop.permute.xlu0 %1592
    %1594 = vrot.lane.b32.xlu0 %v1575, 32
    %v1595 = vpop.permute.xlu0 %1594
    %1596 = vrot.lane.b32.xlu0 %v1576, 32
    %v1597 = vpop.permute.xlu0 %1596
    %1598 = vrot.lane.b32.xlu0 %v1577, 32
    %v1599 = vpop.permute.xlu0 %1598
    %1600 = vrot.lane.b32.xlu0 %v1578, 32
    %v1601 = vpop.permute.xlu0 %1600
    %1602 = vrot.lane.b32.xlu0 %v1579, 32
    %v1603 = vpop.permute.xlu0 %1602
    %v1612 = vsel %vm331, %v1589, 0.0
    %1613 = vadd.xlane.f32.xlu0 %v1612
    %v1614 = vpop.xlane.xlu0 %1613
    %v1615 = vsel %vm331, %v1591, 0.0
    %1616 = vadd.xlane.f32.xlu0 %v1615
    %v1617 = vpop.xlane.xlu0 %1616
    %v1618 = vsel %vm331, %v1593, 0.0
    %1619 = vadd.xlane.f32.xlu0 %v1618
    %v1620 = vpop.xlane.xlu0 %1619
    %v1621 = vsel %vm331, %v1595, 0.0
    %1622 = vadd.xlane.f32.xlu0 %v1621
    %v1623 = vpop.xlane.xlu0 %1622
    %v1624 = vsel %vm331, %v1597, 0.0
    %1625 = vadd.xlane.f32.xlu0 %v1624
    %v1626 = vpop.xlane.xlu0 %1625
    %v1627 = vsel %vm331, %v1599, 0.0
    %1628 = vadd.xlane.f32.xlu0 %v1627
    %v1629 = vpop.xlane.xlu0 %1628
    %v1630 = vsel %vm331, %v1601, 0.0
    %1631 = vadd.xlane.f32.xlu0 %v1630
    %v1632 = vpop.xlane.xlu0 %1631
    %v1633 = vsel %vm331, %v1603, 0.0
    %1634 = vadd.xlane.f32.xlu0 %v1633
    %v1635 = vpop.xlane.xlu0 %1634
    %v1636 = vld [vmem:[#allocation16] sm:$0xff]
    %v1638 = vlaneseq
    %v1639 = vshrl.u32 %v1638, 7
    %v1640 = vsub.s32 0, %v1639
    %v1641 = vrot.slane %v1636, %v1640
    %1643 = vbcast.lane.b32.xlu0 %v1641, 256
    %v1644 = vpop.permute.xlu0 %1643
    %v1645 = vlaneseq
    %v1646 = vshrl.u32 %v1645, 7
    %v1647 = vsub.s32 1, %v1646
    %v1648 = vrot.slane %v1636, %v1647
    %1650 = vbcast.lane.b32.xlu0 %v1648, 256
    %v1651 = vpop.permute.xlu0 %1650
    %v1652 = vlaneseq
    %v1653 = vshrl.u32 %v1652, 7
    %v1654 = vsub.s32 2, %v1653
    %v1655 = vrot.slane %v1636, %v1654
    %1657 = vbcast.lane.b32.xlu0 %v1655, 256
    %v1658 = vpop.permute.xlu0 %1657
    %v1659 = vlaneseq
    %v1660 = vshrl.u32 %v1659, 7
    %v1661 = vsub.s32 3, %v1660
    %v1662 = vrot.slane %v1636, %v1661
    %1664 = vbcast.lane.b32.xlu0 %v1662, 256
    %v1665 = vpop.permute.xlu0 %1664
    %v1666 = vlaneseq
    %v1667 = vshrl.u32 %v1666, 7
    %v1668 = vsub.s32 4, %v1667
    %v1669 = vrot.slane %v1636, %v1668
    %1671 = vbcast.lane.b32.xlu0 %v1669, 256
    %v1672 = vpop.permute.xlu0 %1671
    %v1673 = vlaneseq
    %v1674 = vshrl.u32 %v1673, 7
    %v1675 = vsub.s32 5, %v1674
    %v1676 = vrot.slane %v1636, %v1675
    %1678 = vbcast.lane.b32.xlu0 %v1676, 256
    %v1679 = vpop.permute.xlu0 %1678
    %v1680 = vlaneseq
    %v1681 = vshrl.u32 %v1680, 7
    %v1682 = vsub.s32 6, %v1681
    %v1683 = vrot.slane %v1636, %v1682
    %1685 = vbcast.lane.b32.xlu0 %v1683, 256
    %v1686 = vpop.permute.xlu0 %1685
    %v1687 = vlaneseq
    %v1688 = vshrl.u32 %v1687, 7
    %v1689 = vsub.s32 7, %v1688
    %v1690 = vrot.slane %v1636, %v1689
    %1692 = vbcast.lane.b32.xlu0 %v1690, 256
    %v1693 = vpop.permute.xlu0 %1692
    %v1702 = vadd.f32 %v1614, %v1644
    %v1703 = vadd.f32 %v1617, %v1651
    %v1704 = vadd.f32 %v1620, %v1658
    %v1705 = vadd.f32 %v1623, %v1665
    %v1706 = vadd.f32 %v1626, %v1672
    %v1707 = vadd.f32 %v1629, %v1679
    %v1708 = vadd.f32 %v1632, %v1686
    %v1709 = vadd.f32 %v1635, %v1693
    %1718 = vset.pattern.permute.xlu0 0
    %1719 = vperm.xlu0 %1718, %v1702
    %v1720 = vpop.permute.xlu0 %1719
    %1721 = vset.pattern.permute.xlu0 0
    %1722 = vperm.xlu0 %1721, %v1703
    %v1723 = vpop.permute.xlu0 %1722
    %1724 = vset.pattern.permute.xlu0 0
    %1725 = vperm.xlu0 %1724, %v1704
    %v1726 = vpop.permute.xlu0 %1725
    %1727 = vset.pattern.permute.xlu0 0
    %1728 = vperm.xlu0 %1727, %v1705
    %v1729 = vpop.permute.xlu0 %1728
    %1730 = vset.pattern.permute.xlu0 0
    %1731 = vperm.xlu0 %1730, %v1706
    %v1732 = vpop.permute.xlu0 %1731
    %1733 = vset.pattern.permute.xlu0 0
    %1734 = vperm.xlu0 %1733, %v1707
    %v1735 = vpop.permute.xlu0 %1734
    %1736 = vset.pattern.permute.xlu0 0
    %1737 = vperm.xlu0 %1736, %v1708
    %v1738 = vpop.permute.xlu0 %1737
    %1739 = vset.pattern.permute.xlu0 0
    %1740 = vperm.xlu0 %1739, %v1709
    %v1741 = vpop.permute.xlu0 %1740
    %v1742 = vlaneseq
    %v1743 = vshrl.u32 %v1742, 7
    %v1744 = vsub.s32 %v739, %v1743
    %v1745 = vrot.slane %v1720, %v1744
    %v1746 = vlaneseq
    %v1747 = vshrl.u32 %v1746, 7
    %v1748 = vsub.s32 %v739, %v1747
    %v1749 = vrot.slane %v1723, %v1748
    %v1750 = vlaneseq
    %v1751 = vshrl.u32 %v1750, 7
    %v1752 = vsub.s32 %v739, %v1751
    %v1753 = vrot.slane %v1726, %v1752
    %v1754 = vlaneseq
    %v1755 = vshrl.u32 %v1754, 7
    %v1756 = vsub.s32 %v739, %v1755
    %v1757 = vrot.slane %v1729, %v1756
    %v1758 = vlaneseq
    %v1759 = vshrl.u32 %v1758, 7
    %v1760 = vsub.s32 %v739, %v1759
    %v1761 = vrot.slane %v1732, %v1760
    %v1762 = vlaneseq
    %v1763 = vshrl.u32 %v1762, 7
    %v1764 = vsub.s32 %v739, %v1763
    %v1765 = vrot.slane %v1735, %v1764
    %v1766 = vlaneseq
    %v1767 = vshrl.u32 %v1766, 7
    %v1768 = vsub.s32 %v739, %v1767
    %v1769 = vrot.slane %v1738, %v1768
    %v1770 = vlaneseq
    %v1771 = vshrl.u32 %v1770, 7
    %v1772 = vsub.s32 %v739, %v1771
    %v1773 = vrot.slane %v1741, %v1772
    %v1774 = vsel %vm772, %v1749, %v1745
    %v1775 = vsel %vm774, %v1753, %v1774
    %v1776 = vsel %vm776, %v1757, %v1775
    %v1777 = vsel %vm778, %v1761, %v1776
    %v1778 = vsel %vm780, %v1765, %v1777
    %v1779 = vsel %vm782, %v1769, %v1778
    %v1780 = vsel %vm784, %v1773, %v1779
    %v1782 = vsel %vm787, %v1780, -inf
    %1783 = vmax.xlane.f32.xlu0 %v1782
    %v1784 = vpop.xlane.xlu0 %1783
    %v1786 = vlaneseq
    %v1787 = vshrl.u32 %v1786, 7
    %v1788 = vsub.s32 0, %v1787
    %v1789 = vrot.slane %v1784, %v1788
    %v1790 = vlaneseq
    %v1791 = vshrl.u32 %v1790, 7
    %v1792 = vsub.s32 1, %v1791
    %v1793 = vrot.slane %v1784, %v1792
    %v1794 = vlaneseq
    %v1795 = vshrl.u32 %v1794, 7
    %v1796 = vsub.s32 2, %v1795
    %v1797 = vrot.slane %v1784, %v1796
    %v1798 = vlaneseq
    %v1799 = vshrl.u32 %v1798, 7
    %v1800 = vsub.s32 3, %v1799
    %v1801 = vrot.slane %v1784, %v1800
    %v1802 = vlaneseq
    %v1803 = vshrl.u32 %v1802, 7
    %v1804 = vsub.s32 4, %v1803
    %v1805 = vrot.slane %v1784, %v1804
    %v1806 = vlaneseq
    %v1807 = vshrl.u32 %v1806, 7
    %v1808 = vsub.s32 5, %v1807
    %v1809 = vrot.slane %v1784, %v1808
    %v1810 = vlaneseq
    %v1811 = vshrl.u32 %v1810, 7
    %v1812 = vsub.s32 6, %v1811
    %v1813 = vrot.slane %v1784, %v1812
    %v1814 = vlaneseq
    %v1815 = vshrl.u32 %v1814, 7
    %v1816 = vsub.s32 7, %v1815
    %v1817 = vrot.slane %v1784, %v1816
    %v1826 = vsub.f32 %v1702, %v1789
    %v1827 = vsub.f32 %v1703, %v1793
    %v1828 = vsub.f32 %v1704, %v1797
    %v1829 = vsub.f32 %v1705, %v1801
    %v1830 = vsub.f32 %v1706, %v1805
    %v1831 = vsub.f32 %v1707, %v1809
    %v1832 = vsub.f32 %v1708, %v1813
    %v1833 = vsub.f32 %v1709, %v1817
    %v1834 = vmul.f32 %v1826, 1.442695
    %v1835 = vpow.pop %v1834
    %v1836 = vmul.f32 %v1827, 1.442695
    %v1837 = vpow.pop %v1836
    %v1838 = vmul.f32 %v1828, 1.442695
    %v1839 = vpow.pop %v1838
    %v1840 = vmul.f32 %v1829, 1.442695
    %v1841 = vpow.pop %v1840
    %v1842 = vmul.f32 %v1830, 1.442695
    %v1843 = vpow.pop %v1842
    %v1844 = vmul.f32 %v1831, 1.442695
    %v1845 = vpow.pop %v1844
    %v1846 = vmul.f32 %v1832, 1.442695
    %v1847 = vpow.pop %v1846
    %v1848 = vmul.f32 %v1833, 1.442695
    %v1849 = vpow.pop %v1848
    %1858 = vset.pattern.permute.xlu0 0
    %1859 = vperm.xlu0 %1858, %v1835
    %v1860 = vpop.permute.xlu0 %1859
    %1861 = vset.pattern.permute.xlu0 0
    %1862 = vperm.xlu0 %1861, %v1837
    %v1863 = vpop.permute.xlu0 %1862
    %1864 = vset.pattern.permute.xlu0 0
    %1865 = vperm.xlu0 %1864, %v1839
    %v1866 = vpop.permute.xlu0 %1865
    %1867 = vset.pattern.permute.xlu0 0
    %1868 = vperm.xlu0 %1867, %v1841
    %v1869 = vpop.permute.xlu0 %1868
    %1870 = vset.pattern.permute.xlu0 0
    %1871 = vperm.xlu0 %1870, %v1843
    %v1872 = vpop.permute.xlu0 %1871
    %1873 = vset.pattern.permute.xlu0 0
    %1874 = vperm.xlu0 %1873, %v1845
    %v1875 = vpop.permute.xlu0 %1874
    %1876 = vset.pattern.permute.xlu0 0
    %1877 = vperm.xlu0 %1876, %v1847
    %v1878 = vpop.permute.xlu0 %1877
    %1879 = vset.pattern.permute.xlu0 0
    %1880 = vperm.xlu0 %1879, %v1849
    %v1881 = vpop.permute.xlu0 %1880
    %v1882 = vlaneseq
    %v1883 = vshrl.u32 %v1882, 7
    %v1884 = vsub.s32 %v739, %v1883
    %v1885 = vrot.slane %v1860, %v1884
    %v1886 = vlaneseq
    %v1887 = vshrl.u32 %v1886, 7
    %v1888 = vsub.s32 %v739, %v1887
    %v1889 = vrot.slane %v1863, %v1888
    %v1890 = vlaneseq
    %v1891 = vshrl.u32 %v1890, 7
    %v1892 = vsub.s32 %v739, %v1891
    %v1893 = vrot.slane %v1866, %v1892
    %v1894 = vlaneseq
    %v1895 = vshrl.u32 %v1894, 7
    %v1896 = vsub.s32 %v739, %v1895
    %v1897 = vrot.slane %v1869, %v1896
    %v1898 = vlaneseq
    %v1899 = vshrl.u32 %v1898, 7
    %v1900 = vsub.s32 %v739, %v1899
    %v1901 = vrot.slane %v1872, %v1900
    %v1902 = vlaneseq
    %v1903 = vshrl.u32 %v1902, 7
    %v1904 = vsub.s32 %v739, %v1903
    %v1905 = vrot.slane %v1875, %v1904
    %v1906 = vlaneseq
    %v1907 = vshrl.u32 %v1906, 7
    %v1908 = vsub.s32 %v739, %v1907
    %v1909 = vrot.slane %v1878, %v1908
    %v1910 = vlaneseq
    %v1911 = vshrl.u32 %v1910, 7
    %v1912 = vsub.s32 %v739, %v1911
    %v1913 = vrot.slane %v1881, %v1912
    %v1914 = vsel %vm772, %v1889, %v1885
    %v1915 = vsel %vm774, %v1893, %v1914
    %v1916 = vsel %vm776, %v1897, %v1915
    %v1917 = vsel %vm778, %v1901, %v1916
    %v1918 = vsel %vm780, %v1905, %v1917
    %v1919 = vsel %vm782, %v1909, %v1918
    %v1920 = vsel %vm784, %v1913, %v1919
    %v1922 = vsel %vm787, %v1920, 0.0
    %1923 = vadd.xlane.f32.xlu0 %v1922
    %v1924 = vpop.xlane.xlu0 %1923
    %v1925 = vrcp.pop %v1924
    %v1927 = vlaneseq
    %v1928 = vshrl.u32 %v1927, 7
    %v1929 = vsub.s32 0, %v1928
    %v1930 = vrot.slane %v1925, %v1929
    %v1931 = vlaneseq
    %v1932 = vshrl.u32 %v1931, 7
    %v1933 = vsub.s32 1, %v1932
    %v1934 = vrot.slane %v1925, %v1933
    %v1935 = vlaneseq
    %v1936 = vshrl.u32 %v1935, 7
    %v1937 = vsub.s32 2, %v1936
    %v1938 = vrot.slane %v1925, %v1937
    %v1939 = vlaneseq
    %v1940 = vshrl.u32 %v1939, 7
    %v1941 = vsub.s32 3, %v1940
    %v1942 = vrot.slane %v1925, %v1941
    %v1943 = vlaneseq
    %v1944 = vshrl.u32 %v1943, 7
    %v1945 = vsub.s32 4, %v1944
    %v1946 = vrot.slane %v1925, %v1945
    %v1947 = vlaneseq
    %v1948 = vshrl.u32 %v1947, 7
    %v1949 = vsub.s32 5, %v1948
    %v1950 = vrot.slane %v1925, %v1949
    %v1951 = vlaneseq
    %v1952 = vshrl.u32 %v1951, 7
    %v1953 = vsub.s32 6, %v1952
    %v1954 = vrot.slane %v1925, %v1953
    %v1955 = vlaneseq
    %v1956 = vshrl.u32 %v1955, 7
    %v1957 = vsub.s32 7, %v1956
    %v1958 = vrot.slane %v1925, %v1957
    %v1967 = vmul.f32 %v1835, %v1930
    %v1968 = vmul.f32 %v1837, %v1934
    %v1969 = vmul.f32 %v1839, %v1938
    %v1970 = vmul.f32 %v1841, %v1942
    %v1971 = vmul.f32 %v1843, %v1946
    %v1972 = vmul.f32 %v1845, %v1950
    %v1973 = vmul.f32 %v1847, %v1954
    %v1974 = vmul.f32 %v1849, %v1958
    %v1975 = vld [vmem:[#allocation18] sm:$0xff]
    %v1976 = vld [vmem:[#allocation18 + $0x8] sm:$0xff]
    %v1977 = vld [vmem:[#allocation18 + $0x10] sm:$0xff]
    %v1978 = vld [vmem:[#allocation18 + $0x18] sm:$0xff]
    %v1979 = vld [vmem:[#allocation18 + $0x20] sm:$0xff]
    %v1980 = vld [vmem:[#allocation18 + $0x28] sm:$0xff]
    %v1981 = vld [vmem:[#allocation18 + $0x30] sm:$0xff]
    %v1982 = vld [vmem:[#allocation18 + $0x38] sm:$0xff]
    %1984 = vset.pattern.permute.xlu0 0
    %1985 = vperm.xlu0 %1984, %v1967
    %v1986 = vpop.permute.xlu0 %1985
    %1989 = vset.pattern.permute.xlu0 0
    %1990 = vperm.xlu0 %1989, %v1968
    %v1991 = vpop.permute.xlu0 %1990
    %1994 = vset.pattern.permute.xlu0 0
    %1995 = vperm.xlu0 %1994, %v1969
    %v1996 = vpop.permute.xlu0 %1995
    %1999 = vset.pattern.permute.xlu0 0
    %2000 = vperm.xlu0 %1999, %v1970
    %v2001 = vpop.permute.xlu0 %2000
    %2004 = vset.pattern.permute.xlu0 0
    %2005 = vperm.xlu0 %2004, %v1971
    %v2006 = vpop.permute.xlu0 %2005
    %2009 = vset.pattern.permute.xlu0 0
    %2010 = vperm.xlu0 %2009, %v1972
    %v2011 = vpop.permute.xlu0 %2010
    %2014 = vset.pattern.permute.xlu0 0
    %2015 = vperm.xlu0 %2014, %v1973
    %v2016 = vpop.permute.xlu0 %2015
    %2019 = vset.pattern.permute.xlu0 0
    %2020 = vperm.xlu0 %2019, %v1974
    %v2021 = vpop.permute.xlu0 %2020
    %v2023 = vmul.f32 %v1986, %v1975
    %v2024 = vmul.f32 %v1991, %v1976
    %v2025 = vmul.f32 %v1996, %v1977
    %v2026 = vmul.f32 %v2001, %v1978
    %v2027 = vmul.f32 %v2006, %v1979
    %v2028 = vmul.f32 %v2011, %v1980
    %v2029 = vmul.f32 %v2016, %v1981
    %v2030 = vmul.f32 %v2021, %v1982
    %v2031 = vsel %vm199, %v2023, 0.0
    %v2032 = vrot.slane %v2031, 4
    %v2033 = vadd.f32 %v2031, %v2032
    %v2034 = vrot.slane %v2033, 2
    %v2035 = vadd.f32 %v2033, %v2034
    %v2036 = vrot.slane %v2035, 1
    %v2037 = vadd.f32 %v2035, %v2036
    %v2038 = vsel %vm199, %v2024, 0.0
    %v2039 = vrot.slane %v2038, 4
    %v2040 = vadd.f32 %v2038, %v2039
    %v2041 = vrot.slane %v2040, 2
    %v2042 = vadd.f32 %v2040, %v2041
    %v2043 = vrot.slane %v2042, 1
    %v2044 = vadd.f32 %v2042, %v2043
    %v2045 = vsel %vm199, %v2025, 0.0
    %v2046 = vrot.slane %v2045, 4
    %v2047 = vadd.f32 %v2045, %v2046
    %v2048 = vrot.slane %v2047, 2
    %v2049 = vadd.f32 %v2047, %v2048
    %v2050 = vrot.slane %v2049, 1
    %v2051 = vadd.f32 %v2049, %v2050
    %v2052 = vsel %vm199, %v2026, 0.0
    %v2053 = vrot.slane %v2052, 4
    %v2054 = vadd.f32 %v2052, %v2053
    %v2055 = vrot.slane %v2054, 2
    %v2056 = vadd.f32 %v2054, %v2055
    %v2057 = vrot.slane %v2056, 1
    %v2058 = vadd.f32 %v2056, %v2057
    %v2059 = vsel %vm199, %v2027, 0.0
    %v2060 = vrot.slane %v2059, 4
    %v2061 = vadd.f32 %v2059, %v2060
    %v2062 = vrot.slane %v2061, 2
    %v2063 = vadd.f32 %v2061, %v2062
    %v2064 = vrot.slane %v2063, 1
    %v2065 = vadd.f32 %v2063, %v2064
    %v2066 = vsel %vm199, %v2028, 0.0
    %v2067 = vrot.slane %v2066, 4
    %v2068 = vadd.f32 %v2066, %v2067
    %v2069 = vrot.slane %v2068, 2
    %v2070 = vadd.f32 %v2068, %v2069
    %v2071 = vrot.slane %v2070, 1
    %v2072 = vadd.f32 %v2070, %v2071
    %v2073 = vsel %vm199, %v2029, 0.0
    %v2074 = vrot.slane %v2073, 4
    %v2075 = vadd.f32 %v2073, %v2074
    %v2076 = vrot.slane %v2075, 2
    %v2077 = vadd.f32 %v2075, %v2076
    %v2078 = vrot.slane %v2077, 1
    %v2079 = vadd.f32 %v2077, %v2078
    %v2080 = vsel %vm199, %v2030, 0.0
    %v2081 = vrot.slane %v2080, 4
    %v2082 = vadd.f32 %v2080, %v2081
    %v2083 = vrot.slane %v2082, 2
    %v2084 = vadd.f32 %v2082, %v2083
    %v2085 = vrot.slane %v2084, 1
    %v2086 = vadd.f32 %v2084, %v2085
    %2087 = vrot.lane.b32.xlu0 %v1441, 32
    %v2088 = vpop.permute.xlu0 %2087
    %v2098 = vsel %vm772, %v2044, %v2037
    %v2099 = vsel %vm774, %v2051, %v2098
    %v2100 = vsel %vm776, %v2058, %v2099
    %v2101 = vsel %vm778, %v2065, %v2100
    %v2102 = vsel %vm780, %v2072, %v2101
    %v2103 = vsel %vm782, %v2079, %v2102
    %v2104 = vsel %vm784, %v2086, %v2103
    %2105 = vrot.lane.b32.xlu0 %v2104, 32
    %v2106 = vpop.permute.xlu0 %2105
    %v2108 = vsel %vm331, %v2088, %v2106
    %v2109 = vpack.c.bf16 %v2108, %v2108
    %v2110 = vld [vmem:[#allocation19] sm:$0xf]
    %v2111 = vld [vmem:[#allocation19 + $0x4] sm:$0xf]
    %v2112 = vld [vmem:[#allocation19 + $0x8] sm:$0xf]
    %v2113 = vld [vmem:[#allocation19 + $0xc] sm:$0xf]
    %v2114 = vld [vmem:[#allocation19 + $0x10] sm:$0xf]
    %v2115 = vld [vmem:[#allocation19 + $0x14] sm:$0xf]
    %v2116 = vld [vmem:[#allocation19 + $0x18] sm:$0xf]
    %v2117 = vld [vmem:[#allocation19 + $0x1c] sm:$0xf]
    %v2118 = vld [vmem:[#allocation19 + $0x20] sm:$0xf]
    %v2119 = vld [vmem:[#allocation19 + $0x24] sm:$0xf]
    %v2120 = vld [vmem:[#allocation19 + $0x28] sm:$0xf]
    %v2121 = vld [vmem:[#allocation19 + $0x2c] sm:$0xf]
    %v2122 = vld [vmem:[%s11] sm:$0xff]
    %v2135 = vunpack.c.l.b16 %v2110
    %v2136 = vunpack.c.l.b16 %v2111
    %v2137 = vunpack.c.l.b16 %v2112
    %v2138 = vunpack.c.l.b16 %v2113
    %v2139 = vunpack.c.l.b16 %v2114
    %v2140 = vunpack.c.l.b16 %v2115
    %v2141 = vunpack.c.l.b16 %v2116
    %v2142 = vunpack.c.l.b16 %v2117
    %v2143 = vunpack.c.l.b16 %v2118
    %v2144 = vunpack.c.l.b16 %v2119
    %v2145 = vunpack.c.l.b16 %v2120
    %v2146 = vunpack.c.l.b16 %v2121
    %v2147 = vpack.c.b16 %v2136, %v2135
    %v2148 = vpack.c.b16 %v2138, %v2137
    %v2149 = vpack.c.b16 %v2140, %v2139
    %v2150 = vpack.c.b16 %v2142, %v2141
    %v2151 = vpack.c.b16 %v2144, %v2143
    %v2152 = vpack.c.b16 %v2146, %v2145
    %v2160 = vsel %vm251, %v2109, 0
    %2162 = vmatprep.subr.bf16.mxu0 0
    %2163 = vmatpush1.bf16.msra.mxu0 0
    %2164 = vmatprep.subr.bf16.mxu0 0
    %2165 = vmatpush1.bf16.msra.mxu0 0
    %2166 = vmatprep.subr.bf16.mxu0 0
    %2167 = vmatpush1.bf16.msra.mxu0 %v2152
    %2168 = vmatprep.subr.bf16.mxu0 0
    %2169 = vmatpush1.bf16.msra.mxu0 %v2151
    %2170 = vmatprep.subr.bf16.mxu0 0
    %2171 = vmatpush1.bf16.msra.mxu0 %v2150
    %2172 = vmatprep.subr.bf16.mxu0 0
    %2173 = vmatpush1.bf16.msra.mxu0 %v2149
    %2174 = vmatprep.subr.bf16.mxu0 0
    %2175 = vmatpush1.bf16.msra.mxu0 %v2148
    %2176 = vmatprep.subr.bf16.mxu0 0
    %2177 = vmatpush1.bf16.msra.mxu0 %v2147
    %2178 = vmatprep.subr.bf16.mxu0 0
    %2179 = vmatpush2.bf16.msra.mxu0 0
    %2180 = vmatprep.subr.bf16.mxu0 0
    %2181 = vmatpush2.bf16.msra.mxu0 0
    %2182 = vmatprep.subr.bf16.mxu0 0
    %2183 = vmatpush2.bf16.msra.mxu0 0
    %2184 = vmatprep.subr.bf16.mxu0 0
    %2185 = vmatpush2.bf16.msra.mxu0 0
    %2186 = vmatprep.subr.bf16.mxu0 0
    %2187 = vmatpush2.bf16.msra.mxu0 0
    %2188 = vmatprep.subr.bf16.mxu0 0
    %2189 = vmatpush2.bf16.msra.mxu0 0
    %2190 = vmatprep.subr.bf16.mxu0 0
    %2191 = vmatpush2.bf16.msra.mxu0 0
    %2192 = vmatprep.subr.bf16.mxu0 0
    %2193 = vmatpush2.bf16.msra.mxu0 0
    %2194 = vmatprep.mubr.bf16.mxu0 0
    %2195 = vmatmul.mubr.bf16.gmra.mxu0 %v2160
    %v2196 = vpop.f32.mrf.mxu0
    %v2197 = vadd.f32 %v2122, %v2196
    %v2198 = vpop.f32.mrf.mxu0
    %v2199 = vpop.f32.mrf.mxu0
    %v2200 = vpop.f32.mrf.mxu0
    %2201 = vdwg.mxu0
    %v2202 = vtanh.pop %v2197
    %s2203 = scalar_lea.vmem [#allocation21], 8
    %2204 = vst [vmem:[%s2203] sm:$0xff] %v2202
    %s2205 = scalar_lea.vmem [#allocation4], 16
    %v2206 = vld [vmem:[%s2205] sm:$0xff]
    %2207 = vrot.lane.b32.xlu0 %v1332, 96
    %v2208 = vpop.permute.xlu0 %2207
    %v2210 = vsel %vm199, %v2206, %v2208
    %v2211 = vpack.c.bf16 %v2210, %v2210
    %v2212 = vld [vmem:[#allocation10] sm:$0xf]
    %v2213 = vld [vmem:[#allocation10 + $0x4] sm:$0xf]
    %v2214 = vld [vmem:[#allocation10 + $0x8] sm:$0xf]
    %v2215 = vld [vmem:[#allocation10 + $0xc] sm:$0xf]
    %v2216 = vld [vmem:[#allocation10 + $0x10] sm:$0xf]
    %v2217 = vld [vmem:[#allocation10 + $0x14] sm:$0xf]
    %v2218 = vld [vmem:[#allocation10 + $0x18] sm:$0xf]
    %v2219 = vld [vmem:[#allocation10 + $0x1c] sm:$0xf]
    %v2220 = vld [vmem:[#allocation10 + $0x20] sm:$0xf]
    %v2221 = vld [vmem:[#allocation10 + $0x24] sm:$0xf]
    %v2222 = vld [vmem:[#allocation10 + $0x28] sm:$0xf]
    %v2223 = vld [vmem:[#allocation10 + $0x2c] sm:$0xf]
    %v2224 = vld [vmem:[#allocation12] sm:$0xff]
    %v2237 = vunpack.c.l.b16 %v2212
    %v2238 = vunpack.c.l.b16 %v2213
    %v2239 = vunpack.c.l.b16 %v2214
    %v2240 = vunpack.c.l.b16 %v2215
    %v2241 = vunpack.c.l.b16 %v2216
    %v2242 = vunpack.c.l.b16 %v2217
    %v2243 = vunpack.c.l.b16 %v2218
    %v2244 = vunpack.c.l.b16 %v2219
    %v2245 = vunpack.c.l.b16 %v2220
    %v2246 = vunpack.c.l.b16 %v2221
    %v2247 = vunpack.c.l.b16 %v2222
    %v2248 = vunpack.c.l.b16 %v2223
    %v2249 = vpack.c.b16 %v2238, %v2237
    %v2250 = vpack.c.b16 %v2240, %v2239
    %v2251 = vpack.c.b16 %v2242, %v2241
    %v2252 = vpack.c.b16 %v2244, %v2243
    %v2253 = vpack.c.b16 %v2246, %v2245
    %v2254 = vpack.c.b16 %v2248, %v2247
    %v2262 = vsel %vm251, %v2211, 0
    %2264 = vmatprep.subr.bf16.mxu0 0
    %2265 = vmatpush1.bf16.msra.mxu0 0
    %2266 = vmatprep.subr.bf16.mxu0 0
    %2267 = vmatpush1.bf16.msra.mxu0 0
    %2268 = vmatprep.subr.bf16.mxu0 0
    %2269 = vmatpush1.bf16.msra.mxu0 %v2254
    %2270 = vmatprep.subr.bf16.mxu0 0
    %2271 = vmatpush1.bf16.msra.mxu0 %v2253
    %2272 = vmatprep.subr.bf16.mxu0 0
    %2273 = vmatpush1.bf16.msra.mxu0 %v2252
    %2274 = vmatprep.subr.bf16.mxu0 0
    %2275 = vmatpush1.bf16.msra.mxu0 %v2251
    %2276 = vmatprep.subr.bf16.mxu0 0
    %2277 = vmatpush1.bf16.msra.mxu0 %v2250
    %2278 = vmatprep.subr.bf16.mxu0 0
    %2279 = vmatpush1.bf16.msra.mxu0 %v2249
    %2280 = vmatprep.subr.bf16.mxu0 0
    %2281 = vmatpush2.bf16.msra.mxu0 0
    %2282 = vmatprep.subr.bf16.mxu0 0
    %2283 = vmatpush2.bf16.msra.mxu0 0
    %2284 = vmatprep.subr.bf16.mxu0 0
    %2285 = vmatpush2.bf16.msra.mxu0 0
    %2286 = vmatprep.subr.bf16.mxu0 0
    %2287 = vmatpush2.bf16.msra.mxu0 0
    %2288 = vmatprep.subr.bf16.mxu0 0
    %2289 = vmatpush2.bf16.msra.mxu0 0
    %2290 = vmatprep.subr.bf16.mxu0 0
    %2291 = vmatpush2.bf16.msra.mxu0 0
    %2292 = vmatprep.subr.bf16.mxu0 0
    %2293 = vmatpush2.bf16.msra.mxu0 0
    %2294 = vmatprep.subr.bf16.mxu0 0
    %2295 = vmatpush2.bf16.msra.mxu0 0
    %2296 = vmatprep.mubr.bf16.mxu0 0
    %2297 = vmatmul.mubr.bf16.gmra.mxu0 %v2262
    %v2298 = vpop.f32.mrf.mxu0
    %v2299 = vadd.f32 %v2224, %v2298
    %v2300 = vpop.f32.mrf.mxu0
    %v2301 = vpop.f32.mrf.mxu0
    %v2302 = vpop.f32.mrf.mxu0
    %2303 = vdwg.mxu0
    %v2304 = vxor.u32 %v2299, 2147483648
    %v2305 = vmul.f32 %v2304, 1.442695
    %v2306 = vpow.pop %v2305
    %v2307 = vadd.f32 %v2306, 1.0
    %v2308 = vrcp.pop %v2307
    %v2309 = vmul.f32 1.0, %v2308
    %v2310 = vtanh.pop %v2299
    %v2311 = vmul.f32 %v2309, %v1326
    %2313 = vrot.lane.b32.xlu0 %v2310, 64
    %v2314 = vpop.permute.xlu0 %2313
    %v2316 = vmul.f32 %v2309, %v2314
    %2318 = vrot.lane.b32.xlu0 %v2316, 32
    %v2319 = vpop.permute.xlu0 %2318
    %v2321 = vadd.f32 %v2311, %v2319
    %v2322 = vtanh.pop %v2321
    %2324 = vrot.lane.b32.xlu0 %v2322, 64
    %v2325 = vpop.permute.xlu0 %2324
    %v2327 = vmul.f32 %v2309, %v2325
    %2329 = vrot.lane.b32.xlu0 %v2327, 32
    %v2330 = vpop.permute.xlu0 %2329
    %2332 = vrot.lane.b32.xlu0 %v1441, 64
    %v2333 = vpop.permute.xlu0 %2332
    %v2335 = vsel %vm331, %v2330, %v2333
    %v2336 = vpack.c.bf16 %v2335, %v2335
    %v2337 = vld [vmem:[#allocation13] sm:$0xf]
    %v2338 = vld [vmem:[#allocation13 + $0x4] sm:$0xf]
    %v2339 = vld [vmem:[#allocation13 + $0x8] sm:$0xf]
    %v2340 = vld [vmem:[#allocation13 + $0xc] sm:$0xf]
    %v2341 = vld [vmem:[#allocation13 + $0x10] sm:$0xf]
    %v2342 = vld [vmem:[#allocation13 + $0x14] sm:$0xf]
    %v2343 = vld [vmem:[#allocation13 + $0x18] sm:$0xf]
    %v2344 = vld [vmem:[#allocation13 + $0x1c] sm:$0xf]
    %v2345 = vld [vmem:[%s6] sm:$0xff]
    %v2354 = vunpack.c.l.b16 %v2337
    %v2355 = vunpack.c.l.b16 %v2338
    %v2356 = vunpack.c.l.b16 %v2339
    %v2357 = vunpack.c.l.b16 %v2340
    %v2358 = vunpack.c.l.b16 %v2341
    %v2359 = vunpack.c.l.b16 %v2342
    %v2360 = vunpack.c.l.b16 %v2343
    %v2361 = vunpack.c.l.b16 %v2344
    %v2362 = vpack.c.b16 %v2355, %v2354
    %v2363 = vpack.c.b16 %v2357, %v2356
    %v2364 = vpack.c.b16 %v2359, %v2358
    %v2365 = vpack.c.b16 %v2361, %v2360
    %v2371 = vsel %vm199, %v2336, 0
    %2373 = vmatprep.subr.bf16.mxu0 0
    %2374 = vmatpush1.bf16.msra.mxu0 0
    %2375 = vmatprep.subr.bf16.mxu0 0
    %2376 = vmatpush1.bf16.msra.mxu0 0
    %2377 = vmatprep.subr.bf16.mxu0 0
    %2378 = vmatpush1.bf16.msra.mxu0 0
    %2379 = vmatprep.subr.bf16.mxu0 0
    %2380 = vmatpush1.bf16.msra.mxu0 0
    %2381 = vmatprep.subr.bf16.mxu0 0
    %2382 = vmatpush1.bf16.msra.mxu0 %v2365
    %2383 = vmatprep.subr.bf16.mxu0 0
    %2384 = vmatpush1.bf16.msra.mxu0 %v2364
    %2385 = vmatprep.subr.bf16.mxu0 0
    %2386 = vmatpush1.bf16.msra.mxu0 %v2363
    %2387 = vmatprep.subr.bf16.mxu0 0
    %2388 = vmatpush1.bf16.msra.mxu0 %v2362
    %2389 = vmatprep.subr.bf16.mxu0 0
    %2390 = vmatpush2.bf16.msra.mxu0 0
    %2391 = vmatprep.subr.bf16.mxu0 0
    %2392 = vmatpush2.bf16.msra.mxu0 0
    %2393 = vmatprep.subr.bf16.mxu0 0
    %2394 = vmatpush2.bf16.msra.mxu0 0
    %2395 = vmatprep.subr.bf16.mxu0 0
    %2396 = vmatpush2.bf16.msra.mxu0 0
    %2397 = vmatprep.subr.bf16.mxu0 0
    %2398 = vmatpush2.bf16.msra.mxu0 0
    %2399 = vmatprep.subr.bf16.mxu0 0
    %2400 = vmatpush2.bf16.msra.mxu0 0
    %2401 = vmatprep.subr.bf16.mxu0 0
    %2402 = vmatpush2.bf16.msra.mxu0 0
    %2403 = vmatprep.subr.bf16.mxu0 0
    %2404 = vmatpush2.bf16.msra.mxu0 0
    %2405 = vmatprep.mubr.bf16.mxu0 0
    %2406 = vmatmul.mubr.bf16.gmra.mxu0 %v2371
    %v2407 = vpop.f32.mrf.mxu0
    %v2408 = vadd.f32 %v2345, %v2407
    %v2409 = vpop.f32.mrf.mxu0
    %v2410 = vpop.f32.mrf.mxu0
    %v2411 = vpop.f32.mrf.mxu0
    %2412 = vdwg.mxu0
    %v2413 = vxor.u32 %v2408, 2147483648
    %v2414 = vmul.f32 %v2413, 1.442695
    %v2415 = vpow.pop %v2414
    %v2416 = vadd.f32 %v2415, 1.0
    %v2417 = vrcp.pop %v2416
    %v2418 = vmul.f32 1.0, %v2417
    %v2419 = vtanh.pop %v2408
    %v2420 = vmul.f32 %v2418, %v1435
    %2422 = vrot.lane.b32.xlu0 %v2419, 64
    %v2423 = vpop.permute.xlu0 %2422
    %v2425 = vmul.f32 %v2418, %v2423
    %2427 = vrot.lane.b32.xlu0 %v2425, 32
    %v2428 = vpop.permute.xlu0 %2427
    %v2430 = vadd.f32 %v2420, %v2428
    %v2431 = vtanh.pop %v2430
    %2433 = vrot.lane.b32.xlu0 %v2431, 64
    %v2434 = vpop.permute.xlu0 %2433
    %v2436 = vmul.f32 %v2418, %v2434
    %v2438 = vcombine.high %v2436, %v2436
    %v2440 = vunpack.c.l.s4 1966171168
    %v2441 = vunpack.c.0.s8 %v2440
    %v2442 = vlaneseq
    %v2443 = vshrl.u32 %v2442, 7
    %v2444 = vsub.s32 %v2441, %v2443
    %v2445 = vrot.slane %v2436, %v2444
    %v2447 = vunpack.c.l.s4 1966171168
    %v2448 = vunpack.c.0.s8 %v2447
    %v2449 = vlaneseq
    %v2450 = vshrl.u32 %v2449, 7
    %v2451 = vsub.s32 %v2448, %v2450
    %v2452 = vrot.slane %v2438, %v2451
    %v2453 = vcombine.high %v2445, %v2445
    %v2454 = vcombine.high %v2452, %v2452
    %v2456 = vunpack.c.l.s4 1966171168
    %v2457 = vunpack.c.0.s8 %v2456
    %v2458 = vlaneseq
    %v2459 = vshrl.u32 %v2458, 7
    %v2460 = vsub.s32 %v2457, %v2459
    %v2461 = vrot.slane %v2445, %v2460
    %v2463 = vunpack.c.l.s4 1966171168
    %v2464 = vunpack.c.0.s8 %v2463
    %v2465 = vlaneseq
    %v2466 = vshrl.u32 %v2465, 7
    %v2467 = vsub.s32 %v2464, %v2466
    %v2468 = vrot.slane %v2452, %v2467
    %v2470 = vunpack.c.l.s4 1966171168
    %v2471 = vunpack.c.0.s8 %v2470
    %v2472 = vlaneseq
    %v2473 = vshrl.u32 %v2472, 7
    %v2474 = vsub.s32 %v2471, %v2473
    %v2475 = vrot.slane %v2453, %v2474
    %v2477 = vunpack.c.l.s4 1966171168
    %v2478 = vunpack.c.0.s8 %v2477
    %v2479 = vlaneseq
    %v2480 = vshrl.u32 %v2479, 7
    %v2481 = vsub.s32 %v2478, %v2480
    %v2482 = vrot.slane %v2454, %v2481
    %v2483 = vcombine.high %v2461, %v2461
    %v2484 = vcombine.high %v2468, %v2468
    %v2485 = vcombine.high %v2475, %v2475
    %v2486 = vcombine.high %v2482, %v2482
    %v2487 = vld [vmem:[#allocation15] sm:$0xff]
    %v2488 = vld [vmem:[#allocation15 + $0x8] sm:$0xff]
    %v2489 = vld [vmem:[#allocation15 + $0x10] sm:$0xff]
    %v2490 = vld [vmem:[#allocation15 + $0x18] sm:$0xff]
    %v2491 = vld [vmem:[#allocation15 + $0x20] sm:$0xff]
    %v2492 = vld [vmem:[#allocation15 + $0x28] sm:$0xff]
    %v2493 = vld [vmem:[#allocation15 + $0x30] sm:$0xff]
    %v2494 = vld [vmem:[#allocation15 + $0x38] sm:$0xff]
    %v2495 = vlaneseq
    %v2496 = vshrl.u32 %v2495, 7
    %v2497 = vsub.s32 0, %v2496
    %v2498 = vrot.slane %v2461, %v2497
    %v2499 = vlaneseq
    %v2500 = vshrl.u32 %v2499, 7
    %v2501 = vsub.s32 0, %v2500
    %v2502 = vrot.slane %v2475, %v2501
    %v2503 = vlaneseq
    %v2504 = vshrl.u32 %v2503, 7
    %v2505 = vsub.s32 0, %v2504
    %v2506 = vrot.slane %v2483, %v2505
    %v2507 = vlaneseq
    %v2508 = vshrl.u32 %v2507, 7
    %v2509 = vsub.s32 0, %v2508
    %v2510 = vrot.slane %v2485, %v2509
    %v2511 = vlaneseq
    %v2512 = vshrl.u32 %v2511, 7
    %v2513 = vsub.s32 0, %v2512
    %v2514 = vrot.slane %v2468, %v2513
    %v2515 = vlaneseq
    %v2516 = vshrl.u32 %v2515, 7
    %v2517 = vsub.s32 0, %v2516
    %v2518 = vrot.slane %v2482, %v2517
    %v2519 = vlaneseq
    %v2520 = vshrl.u32 %v2519, 7
    %v2521 = vsub.s32 0, %v2520
    %v2522 = vrot.slane %v2484, %v2521
    %v2523 = vlaneseq
    %v2524 = vshrl.u32 %v2523, 7
    %v2525 = vsub.s32 0, %v2524
    %v2526 = vrot.slane %v2486, %v2525
    %2543 = vrot.lane.b32.xlu0 %v2487, 96
    %v2544 = vpop.permute.xlu0 %2543
    %2545 = vrot.lane.b32.xlu0 %v2488, 96
    %v2546 = vpop.permute.xlu0 %2545
    %2547 = vrot.lane.b32.xlu0 %v2489, 96
    %v2548 = vpop.permute.xlu0 %2547
    %2549 = vrot.lane.b32.xlu0 %v2490, 96
    %v2550 = vpop.permute.xlu0 %2549
    %2551 = vrot.lane.b32.xlu0 %v2491, 96
    %v2552 = vpop.permute.xlu0 %2551
    %2553 = vrot.lane.b32.xlu0 %v2492, 96
    %v2554 = vpop.permute.xlu0 %2553
    %2555 = vrot.lane.b32.xlu0 %v2493, 96
    %v2556 = vpop.permute.xlu0 %2555
    %2557 = vrot.lane.b32.xlu0 %v2494, 96
    %v2558 = vpop.permute.xlu0 %2557
    %v2567 = vmul.f32 %v2498, %v2544
    %v2568 = vmul.f32 %v2502, %v2546
    %v2569 = vmul.f32 %v2506, %v2548
    %v2570 = vmul.f32 %v2510, %v2550
    %v2571 = vmul.f32 %v2514, %v2552
    %v2572 = vmul.f32 %v2518, %v2554
    %v2573 = vmul.f32 %v2522, %v2556
    %v2574 = vmul.f32 %v2526, %v2558
    %2583 = vrot.lane.b32.xlu0 %v2567, 32
    %v2584 = vpop.permute.xlu0 %2583
    %2585 = vrot.lane.b32.xlu0 %v2568, 32
    %v2586 = vpop.permute.xlu0 %2585
    %2587 = vrot.lane.b32.xlu0 %v2569, 32
    %v2588 = vpop.permute.xlu0 %2587
    %2589 = vrot.lane.b32.xlu0 %v2570, 32
    %v2590 = vpop.permute.xlu0 %2589
    %2591 = vrot.lane.b32.xlu0 %v2571, 32
    %v2592 = vpop.permute.xlu0 %2591
    %2593 = vrot.lane.b32.xlu0 %v2572, 32
    %v2594 = vpop.permute.xlu0 %2593
    %2595 = vrot.lane.b32.xlu0 %v2573, 32
    %v2596 = vpop.permute.xlu0 %2595
    %2597 = vrot.lane.b32.xlu0 %v2574, 32
    %v2598 = vpop.permute.xlu0 %2597
    %v2607 = vsel %vm331, %v2584, 0.0
    %2608 = vadd.xlane.f32.xlu0 %v2607
    %v2609 = vpop.xlane.xlu0 %2608
    %v2610 = vsel %vm331, %v2586, 0.0
    %2611 = vadd.xlane.f32.xlu0 %v2610
    %v2612 = vpop.xlane.xlu0 %2611
    %v2613 = vsel %vm331, %v2588, 0.0
    %2614 = vadd.xlane.f32.xlu0 %v2613
    %v2615 = vpop.xlane.xlu0 %2614
    %v2616 = vsel %vm331, %v2590, 0.0
    %2617 = vadd.xlane.f32.xlu0 %v2616
    %v2618 = vpop.xlane.xlu0 %2617
    %v2619 = vsel %vm331, %v2592, 0.0
    %2620 = vadd.xlane.f32.xlu0 %v2619
    %v2621 = vpop.xlane.xlu0 %2620
    %v2622 = vsel %vm331, %v2594, 0.0
    %2623 = vadd.xlane.f32.xlu0 %v2622
    %v2624 = vpop.xlane.xlu0 %2623
    %v2625 = vsel %vm331, %v2596, 0.0
    %2626 = vadd.xlane.f32.xlu0 %v2625
    %v2627 = vpop.xlane.xlu0 %2626
    %v2628 = vsel %vm331, %v2598, 0.0
    %2629 = vadd.xlane.f32.xlu0 %v2628
    %v2630 = vpop.xlane.xlu0 %2629
    %v2631 = vld [vmem:[#allocation16] sm:$0xff]
    %v2633 = vlaneseq
    %v2634 = vshrl.u32 %v2633, 7
    %v2635 = vsub.s32 0, %v2634
    %v2636 = vrot.slane %v2631, %v2635
    %2638 = vbcast.lane.b32.xlu0 %v2636, 256
    %v2639 = vpop.permute.xlu0 %2638
    %v2640 = vlaneseq
    %v2641 = vshrl.u32 %v2640, 7
    %v2642 = vsub.s32 1, %v2641
    %v2643 = vrot.slane %v2631, %v2642
    %2645 = vbcast.lane.b32.xlu0 %v2643, 256
    %v2646 = vpop.permute.xlu0 %2645
    %v2647 = vlaneseq
    %v2648 = vshrl.u32 %v2647, 7
    %v2649 = vsub.s32 2, %v2648
    %v2650 = vrot.slane %v2631, %v2649
    %2652 = vbcast.lane.b32.xlu0 %v2650, 256
    %v2653 = vpop.permute.xlu0 %2652
    %v2654 = vlaneseq
    %v2655 = vshrl.u32 %v2654, 7
    %v2656 = vsub.s32 3, %v2655
    %v2657 = vrot.slane %v2631, %v2656
    %2659 = vbcast.lane.b32.xlu0 %v2657, 256
    %v2660 = vpop.permute.xlu0 %2659
    %v2661 = vlaneseq
    %v2662 = vshrl.u32 %v2661, 7
    %v2663 = vsub.s32 4, %v2662
    %v2664 = vrot.slane %v2631, %v2663
    %2666 = vbcast.lane.b32.xlu0 %v2664, 256
    %v2667 = vpop.permute.xlu0 %2666
    %v2668 = vlaneseq
    %v2669 = vshrl.u32 %v2668, 7
    %v2670 = vsub.s32 5, %v2669
    %v2671 = vrot.slane %v2631, %v2670
    %2673 = vbcast.lane.b32.xlu0 %v2671, 256
    %v2674 = vpop.permute.xlu0 %2673
    %v2675 = vlaneseq
    %v2676 = vshrl.u32 %v2675, 7
    %v2677 = vsub.s32 6, %v2676
    %v2678 = vrot.slane %v2631, %v2677
    %2680 = vbcast.lane.b32.xlu0 %v2678, 256
    %v2681 = vpop.permute.xlu0 %2680
    %v2682 = vlaneseq
    %v2683 = vshrl.u32 %v2682, 7
    %v2684 = vsub.s32 7, %v2683
    %v2685 = vrot.slane %v2631, %v2684
    %2687 = vbcast.lane.b32.xlu0 %v2685, 256
    %v2688 = vpop.permute.xlu0 %2687
    %v2697 = vadd.f32 %v2609, %v2639
    %v2698 = vadd.f32 %v2612, %v2646
    %v2699 = vadd.f32 %v2615, %v2653
    %v2700 = vadd.f32 %v2618, %v2660
    %v2701 = vadd.f32 %v2621, %v2667
    %v2702 = vadd.f32 %v2624, %v2674
    %v2703 = vadd.f32 %v2627, %v2681
    %v2704 = vadd.f32 %v2630, %v2688
    %2713 = vset.pattern.permute.xlu0 0
    %2714 = vperm.xlu0 %2713, %v2697
    %v2715 = vpop.permute.xlu0 %2714
    %2716 = vset.pattern.permute.xlu0 0
    %2717 = vperm.xlu0 %2716, %v2698
    %v2718 = vpop.permute.xlu0 %2717
    %2719 = vset.pattern.permute.xlu0 0
    %2720 = vperm.xlu0 %2719, %v2699
    %v2721 = vpop.permute.xlu0 %2720
    %2722 = vset.pattern.permute.xlu0 0
    %2723 = vperm.xlu0 %2722, %v2700
    %v2724 = vpop.permute.xlu0 %2723
    %2725 = vset.pattern.permute.xlu0 0
    %2726 = vperm.xlu0 %2725, %v2701
    %v2727 = vpop.permute.xlu0 %2726
    %2728 = vset.pattern.permute.xlu0 0
    %2729 = vperm.xlu0 %2728, %v2702
    %v2730 = vpop.permute.xlu0 %2729
    %2731 = vset.pattern.permute.xlu0 0
    %2732 = vperm.xlu0 %2731, %v2703
    %v2733 = vpop.permute.xlu0 %2732
    %2734 = vset.pattern.permute.xlu0 0
    %2735 = vperm.xlu0 %2734, %v2704
    %v2736 = vpop.permute.xlu0 %2735
    %v2737 = vlaneseq
    %v2738 = vshrl.u32 %v2737, 7
    %v2739 = vsub.s32 %v739, %v2738
    %v2740 = vrot.slane %v2715, %v2739
    %v2741 = vlaneseq
    %v2742 = vshrl.u32 %v2741, 7
    %v2743 = vsub.s32 %v739, %v2742
    %v2744 = vrot.slane %v2718, %v2743
    %v2745 = vlaneseq
    %v2746 = vshrl.u32 %v2745, 7
    %v2747 = vsub.s32 %v739, %v2746
    %v2748 = vrot.slane %v2721, %v2747
    %v2749 = vlaneseq
    %v2750 = vshrl.u32 %v2749, 7
    %v2751 = vsub.s32 %v739, %v2750
    %v2752 = vrot.slane %v2724, %v2751
    %v2753 = vlaneseq
    %v2754 = vshrl.u32 %v2753, 7
    %v2755 = vsub.s32 %v739, %v2754
    %v2756 = vrot.slane %v2727, %v2755
    %v2757 = vlaneseq
    %v2758 = vshrl.u32 %v2757, 7
    %v2759 = vsub.s32 %v739, %v2758
    %v2760 = vrot.slane %v2730, %v2759
    %v2761 = vlaneseq
    %v2762 = vshrl.u32 %v2761, 7
    %v2763 = vsub.s32 %v739, %v2762
    %v2764 = vrot.slane %v2733, %v2763
    %v2765 = vlaneseq
    %v2766 = vshrl.u32 %v2765, 7
    %v2767 = vsub.s32 %v739, %v2766
    %v2768 = vrot.slane %v2736, %v2767
    %v2769 = vsel %vm772, %v2744, %v2740
    %v2770 = vsel %vm774, %v2748, %v2769
    %v2771 = vsel %vm776, %v2752, %v2770
    %v2772 = vsel %vm778, %v2756, %v2771
    %v2773 = vsel %vm780, %v2760, %v2772
    %v2774 = vsel %vm782, %v2764, %v2773
    %v2775 = vsel %vm784, %v2768, %v2774
    %v2777 = vsel %vm787, %v2775, -inf
    %2778 = vmax.xlane.f32.xlu0 %v2777
    %v2779 = vpop.xlane.xlu0 %2778
    %v2781 = vlaneseq
    %v2782 = vshrl.u32 %v2781, 7
    %v2783 = vsub.s32 0, %v2782
    %v2784 = vrot.slane %v2779, %v2783
    %v2785 = vlaneseq
    %v2786 = vshrl.u32 %v2785, 7
    %v2787 = vsub.s32 1, %v2786
    %v2788 = vrot.slane %v2779, %v2787
    %v2789 = vlaneseq
    %v2790 = vshrl.u32 %v2789, 7
    %v2791 = vsub.s32 2, %v2790
    %v2792 = vrot.slane %v2779, %v2791
    %v2793 = vlaneseq
    %v2794 = vshrl.u32 %v2793, 7
    %v2795 = vsub.s32 3, %v2794
    %v2796 = vrot.slane %v2779, %v2795
    %v2797 = vlaneseq
    %v2798 = vshrl.u32 %v2797, 7
    %v2799 = vsub.s32 4, %v2798
    %v2800 = vrot.slane %v2779, %v2799
    %v2801 = vlaneseq
    %v2802 = vshrl.u32 %v2801, 7
    %v2803 = vsub.s32 5, %v2802
    %v2804 = vrot.slane %v2779, %v2803
    %v2805 = vlaneseq
    %v2806 = vshrl.u32 %v2805, 7
    %v2807 = vsub.s32 6, %v2806
    %v2808 = vrot.slane %v2779, %v2807
    %v2809 = vlaneseq
    %v2810 = vshrl.u32 %v2809, 7
    %v2811 = vsub.s32 7, %v2810
    %v2812 = vrot.slane %v2779, %v2811
    %v2821 = vsub.f32 %v2697, %v2784
    %v2822 = vsub.f32 %v2698, %v2788
    %v2823 = vsub.f32 %v2699, %v2792
    %v2824 = vsub.f32 %v2700, %v2796
    %v2825 = vsub.f32 %v2701, %v2800
    %v2826 = vsub.f32 %v2702, %v2804
    %v2827 = vsub.f32 %v2703, %v2808
    %v2828 = vsub.f32 %v2704, %v2812
    %v2829 = vmul.f32 %v2821, 1.442695
    %v2830 = vpow.pop %v2829
    %v2831 = vmul.f32 %v2822, 1.442695
    %v2832 = vpow.pop %v2831
    %v2833 = vmul.f32 %v2823, 1.442695
    %v2834 = vpow.pop %v2833
    %v2835 = vmul.f32 %v2824, 1.442695
    %v2836 = vpow.pop %v2835
    %v2837 = vmul.f32 %v2825, 1.442695
    %v2838 = vpow.pop %v2837
    %v2839 = vmul.f32 %v2826, 1.442695
    %v2840 = vpow.pop %v2839
    %v2841 = vmul.f32 %v2827, 1.442695
    %v2842 = vpow.pop %v2841
    %v2843 = vmul.f32 %v2828, 1.442695
    %v2844 = vpow.pop %v2843
    %2853 = vset.pattern.permute.xlu0 0
    %2854 = vperm.xlu0 %2853, %v2830
    %v2855 = vpop.permute.xlu0 %2854
    %2856 = vset.pattern.permute.xlu0 0
    %2857 = vperm.xlu0 %2856, %v2832
    %v2858 = vpop.permute.xlu0 %2857
    %2859 = vset.pattern.permute.xlu0 0
    %2860 = vperm.xlu0 %2859, %v2834
    %v2861 = vpop.permute.xlu0 %2860
    %2862 = vset.pattern.permute.xlu0 0
    %2863 = vperm.xlu0 %2862, %v2836
    %v2864 = vpop.permute.xlu0 %2863
    %2865 = vset.pattern.permute.xlu0 0
    %2866 = vperm.xlu0 %2865, %v2838
    %v2867 = vpop.permute.xlu0 %2866
    %2868 = vset.pattern.permute.xlu0 0
    %2869 = vperm.xlu0 %2868, %v2840
    %v2870 = vpop.permute.xlu0 %2869
    %2871 = vset.pattern.permute.xlu0 0
    %2872 = vperm.xlu0 %2871, %v2842
    %v2873 = vpop.permute.xlu0 %2872
    %2874 = vset.pattern.permute.xlu0 0
    %2875 = vperm.xlu0 %2874, %v2844
    %v2876 = vpop.permute.xlu0 %2875
    %v2877 = vlaneseq
    %v2878 = vshrl.u32 %v2877, 7
    %v2879 = vsub.s32 %v739, %v2878
    %v2880 = vrot.slane %v2855, %v2879
    %v2881 = vlaneseq
    %v2882 = vshrl.u32 %v2881, 7
    %v2883 = vsub.s32 %v739, %v2882
    %v2884 = vrot.slane %v2858, %v2883
    %v2885 = vlaneseq
    %v2886 = vshrl.u32 %v2885, 7
    %v2887 = vsub.s32 %v739, %v2886
    %v2888 = vrot.slane %v2861, %v2887
    %v2889 = vlaneseq
    %v2890 = vshrl.u32 %v2889, 7
    %v2891 = vsub.s32 %v739, %v2890
    %v2892 = vrot.slane %v2864, %v2891
    %v2893 = vlaneseq
    %v2894 = vshrl.u32 %v2893, 7
    %v2895 = vsub.s32 %v739, %v2894
    %v2896 = vrot.slane %v2867, %v2895
    %v2897 = vlaneseq
    %v2898 = vshrl.u32 %v2897, 7
    %v2899 = vsub.s32 %v739, %v2898
    %v2900 = vrot.slane %v2870, %v2899
    %v2901 = vlaneseq
    %v2902 = vshrl.u32 %v2901, 7
    %v2903 = vsub.s32 %v739, %v2902
    %v2904 = vrot.slane %v2873, %v2903
    %v2905 = vlaneseq
    %v2906 = vshrl.u32 %v2905, 7
    %v2907 = vsub.s32 %v739, %v2906
    %v2908 = vrot.slane %v2876, %v2907
    %v2909 = vsel %vm772, %v2884, %v2880
    %v2910 = vsel %vm774, %v2888, %v2909
    %v2911 = vsel %vm776, %v2892, %v2910
    %v2912 = vsel %vm778, %v2896, %v2911
    %v2913 = vsel %vm780, %v2900, %v2912
    %v2914 = vsel %vm782, %v2904, %v2913
    %v2915 = vsel %vm784, %v2908, %v2914
    %v2917 = vsel %vm787, %v2915, 0.0
    %2918 = vadd.xlane.f32.xlu0 %v2917
    %v2919 = vpop.xlane.xlu0 %2918
    %v2920 = vrcp.pop %v2919
    %v2922 = vlaneseq
    %v2923 = vshrl.u32 %v2922, 7
    %v2924 = vsub.s32 0, %v2923
    %v2925 = vrot.slane %v2920, %v2924
    %v2926 = vlaneseq
    %v2927 = vshrl.u32 %v2926, 7
    %v2928 = vsub.s32 1, %v2927
    %v2929 = vrot.slane %v2920, %v2928
    %v2930 = vlaneseq
    %v2931 = vshrl.u32 %v2930, 7
    %v2932 = vsub.s32 2, %v2931
    %v2933 = vrot.slane %v2920, %v2932
    %v2934 = vlaneseq
    %v2935 = vshrl.u32 %v2934, 7
    %v2936 = vsub.s32 3, %v2935
    %v2937 = vrot.slane %v2920, %v2936
    %v2938 = vlaneseq
    %v2939 = vshrl.u32 %v2938, 7
    %v2940 = vsub.s32 4, %v2939
    %v2941 = vrot.slane %v2920, %v2940
    %v2942 = vlaneseq
    %v2943 = vshrl.u32 %v2942, 7
    %v2944 = vsub.s32 5, %v2943
    %v2945 = vrot.slane %v2920, %v2944
    %v2946 = vlaneseq
    %v2947 = vshrl.u32 %v2946, 7
    %v2948 = vsub.s32 6, %v2947
    %v2949 = vrot.slane %v2920, %v2948
    %v2950 = vlaneseq
    %v2951 = vshrl.u32 %v2950, 7
    %v2952 = vsub.s32 7, %v2951
    %v2953 = vrot.slane %v2920, %v2952
    %v2962 = vmul.f32 %v2830, %v2925
    %v2963 = vmul.f32 %v2832, %v2929
    %v2964 = vmul.f32 %v2834, %v2933
    %v2965 = vmul.f32 %v2836, %v2937
    %v2966 = vmul.f32 %v2838, %v2941
    %v2967 = vmul.f32 %v2840, %v2945
    %v2968 = vmul.f32 %v2842, %v2949
    %v2969 = vmul.f32 %v2844, %v2953
    %v2970 = vld [vmem:[#allocation18] sm:$0xff]
    %v2971 = vld [vmem:[#allocation18 + $0x8] sm:$0xff]
    %v2972 = vld [vmem:[#allocation18 + $0x10] sm:$0xff]
    %v2973 = vld [vmem:[#allocation18 + $0x18] sm:$0xff]
    %v2974 = vld [vmem:[#allocation18 + $0x20] sm:$0xff]
    %v2975 = vld [vmem:[#allocation18 + $0x28] sm:$0xff]
    %v2976 = vld [vmem:[#allocation18 + $0x30] sm:$0xff]
    %v2977 = vld [vmem:[#allocation18 + $0x38] sm:$0xff]
    %2979 = vset.pattern.permute.xlu0 0
    %2980 = vperm.xlu0 %2979, %v2962
    %v2981 = vpop.permute.xlu0 %2980
    %2984 = vset.pattern.permute.xlu0 0
    %2985 = vperm.xlu0 %2984, %v2963
    %v2986 = vpop.permute.xlu0 %2985
    %2989 = vset.pattern.permute.xlu0 0
    %2990 = vperm.xlu0 %2989, %v2964
    %v2991 = vpop.permute.xlu0 %2990
    %2994 = vset.pattern.permute.xlu0 0
    %2995 = vperm.xlu0 %2994, %v2965
    %v2996 = vpop.permute.xlu0 %2995
    %2999 = vset.pattern.permute.xlu0 0
    %3000 = vperm.xlu0 %2999, %v2966
    %v3001 = vpop.permute.xlu0 %3000
    %3004 = vset.pattern.permute.xlu0 0
    %3005 = vperm.xlu0 %3004, %v2967
    %v3006 = vpop.permute.xlu0 %3005
    %3009 = vset.pattern.permute.xlu0 0
    %3010 = vperm.xlu0 %3009, %v2968
    %v3011 = vpop.permute.xlu0 %3010
    %3014 = vset.pattern.permute.xlu0 0
    %3015 = vperm.xlu0 %3014, %v2969
    %v3016 = vpop.permute.xlu0 %3015
    %v3018 = vmul.f32 %v2981, %v2970
    %v3019 = vmul.f32 %v2986, %v2971
    %v3020 = vmul.f32 %v2991, %v2972
    %v3021 = vmul.f32 %v2996, %v2973
    %v3022 = vmul.f32 %v3001, %v2974
    %v3023 = vmul.f32 %v3006, %v2975
    %v3024 = vmul.f32 %v3011, %v2976
    %v3025 = vmul.f32 %v3016, %v2977
    %v3026 = vsel %vm199, %v3018, 0.0
    %v3027 = vrot.slane %v3026, 4
    %v3028 = vadd.f32 %v3026, %v3027
    %v3029 = vrot.slane %v3028, 2
    %v3030 = vadd.f32 %v3028, %v3029
    %v3031 = vrot.slane %v3030, 1
    %v3032 = vadd.f32 %v3030, %v3031
    %v3033 = vsel %vm199, %v3019, 0.0
    %v3034 = vrot.slane %v3033, 4
    %v3035 = vadd.f32 %v3033, %v3034
    %v3036 = vrot.slane %v3035, 2
    %v3037 = vadd.f32 %v3035, %v3036
    %v3038 = vrot.slane %v3037, 1
    %v3039 = vadd.f32 %v3037, %v3038
    %v3040 = vsel %vm199, %v3020, 0.0
    %v3041 = vrot.slane %v3040, 4
    %v3042 = vadd.f32 %v3040, %v3041
    %v3043 = vrot.slane %v3042, 2
    %v3044 = vadd.f32 %v3042, %v3043
    %v3045 = vrot.slane %v3044, 1
    %v3046 = vadd.f32 %v3044, %v3045
    %v3047 = vsel %vm199, %v3021, 0.0
    %v3048 = vrot.slane %v3047, 4
    %v3049 = vadd.f32 %v3047, %v3048
    %v3050 = vrot.slane %v3049, 2
    %v3051 = vadd.f32 %v3049, %v3050
    %v3052 = vrot.slane %v3051, 1
    %v3053 = vadd.f32 %v3051, %v3052
    %v3054 = vsel %vm199, %v3022, 0.0
    %v3055 = vrot.slane %v3054, 4
    %v3056 = vadd.f32 %v3054, %v3055
    %v3057 = vrot.slane %v3056, 2
    %v3058 = vadd.f32 %v3056, %v3057
    %v3059 = vrot.slane %v3058, 1
    %v3060 = vadd.f32 %v3058, %v3059
    %v3061 = vsel %vm199, %v3023, 0.0
    %v3062 = vrot.slane %v3061, 4
    %v3063 = vadd.f32 %v3061, %v3062
    %v3064 = vrot.slane %v3063, 2
    %v3065 = vadd.f32 %v3063, %v3064
    %v3066 = vrot.slane %v3065, 1
    %v3067 = vadd.f32 %v3065, %v3066
    %v3068 = vsel %vm199, %v3024, 0.0
    %v3069 = vrot.slane %v3068, 4
    %v3070 = vadd.f32 %v3068, %v3069
    %v3071 = vrot.slane %v3070, 2
    %v3072 = vadd.f32 %v3070, %v3071
    %v3073 = vrot.slane %v3072, 1
    %v3074 = vadd.f32 %v3072, %v3073
    %v3075 = vsel %vm199, %v3025, 0.0
    %v3076 = vrot.slane %v3075, 4
    %v3077 = vadd.f32 %v3075, %v3076
    %v3078 = vrot.slane %v3077, 2
    %v3079 = vadd.f32 %v3077, %v3078
    %v3080 = vrot.slane %v3079, 1
    %v3081 = vadd.f32 %v3079, %v3080
    %3082 = vrot.lane.b32.xlu0 %v2436, 32
    %v3083 = vpop.permute.xlu0 %3082
    %v3093 = vsel %vm772, %v3039, %v3032
    %v3094 = vsel %vm774, %v3046, %v3093
    %v3095 = vsel %vm776, %v3053, %v3094
    %v3096 = vsel %vm778, %v3060, %v3095
    %v3097 = vsel %vm780, %v3067, %v3096
    %v3098 = vsel %vm782, %v3074, %v3097
    %v3099 = vsel %vm784, %v3081, %v3098
    %3100 = vrot.lane.b32.xlu0 %v3099, 32
    %v3101 = vpop.permute.xlu0 %3100
    %v3103 = vsel %vm331, %v3083, %v3101
    %v3104 = vpack.c.bf16 %v3103, %v3103
    %v3105 = vld [vmem:[#allocation19] sm:$0xf]
    %v3106 = vld [vmem:[#allocation19 + $0x4] sm:$0xf]
    %v3107 = vld [vmem:[#allocation19 + $0x8] sm:$0xf]
    %v3108 = vld [vmem:[#allocation19 + $0xc] sm:$0xf]
    %v3109 = vld [vmem:[#allocation19 + $0x10] sm:$0xf]
    %v3110 = vld [vmem:[#allocation19 + $0x14] sm:$0xf]
    %v3111 = vld [vmem:[#allocation19 + $0x18] sm:$0xf]
    %v3112 = vld [vmem:[#allocation19 + $0x1c] sm:$0xf]
    %v3113 = vld [vmem:[#allocation19 + $0x20] sm:$0xf]
    %v3114 = vld [vmem:[#allocation19 + $0x24] sm:$0xf]
    %v3115 = vld [vmem:[#allocation19 + $0x28] sm:$0xf]
    %v3116 = vld [vmem:[#allocation19 + $0x2c] sm:$0xf]
    %v3117 = vld [vmem:[%s11] sm:$0xff]
    %v3130 = vunpack.c.l.b16 %v3105
    %v3131 = vunpack.c.l.b16 %v3106
    %v3132 = vunpack.c.l.b16 %v3107
    %v3133 = vunpack.c.l.b16 %v3108
    %v3134 = vunpack.c.l.b16 %v3109
    %v3135 = vunpack.c.l.b16 %v3110
    %v3136 = vunpack.c.l.b16 %v3111
    %v3137 = vunpack.c.l.b16 %v3112
    %v3138 = vunpack.c.l.b16 %v3113
    %v3139 = vunpack.c.l.b16 %v3114
    %v3140 = vunpack.c.l.b16 %v3115
    %v3141 = vunpack.c.l.b16 %v3116
    %v3142 = vpack.c.b16 %v3131, %v3130
    %v3143 = vpack.c.b16 %v3133, %v3132
    %v3144 = vpack.c.b16 %v3135, %v3134
    %v3145 = vpack.c.b16 %v3137, %v3136
    %v3146 = vpack.c.b16 %v3139, %v3138
    %v3147 = vpack.c.b16 %v3141, %v3140
    %v3155 = vsel %vm251, %v3104, 0
    %3157 = vmatprep.subr.bf16.mxu0 0
    %3158 = vmatpush1.bf16.msra.mxu0 0
    %3159 = vmatprep.subr.bf16.mxu0 0
    %3160 = vmatpush1.bf16.msra.mxu0 0
    %3161 = vmatprep.subr.bf16.mxu0 0
    %3162 = vmatpush1.bf16.msra.mxu0 %v3147
    %3163 = vmatprep.subr.bf16.mxu0 0
    %3164 = vmatpush1.bf16.msra.mxu0 %v3146
    %3165 = vmatprep.subr.bf16.mxu0 0
    %3166 = vmatpush1.bf16.msra.mxu0 %v3145
    %3167 = vmatprep.subr.bf16.mxu0 0
    %3168 = vmatpush1.bf16.msra.mxu0 %v3144
    %3169 = vmatprep.subr.bf16.mxu0 0
    %3170 = vmatpush1.bf16.msra.mxu0 %v3143
    %3171 = vmatprep.subr.bf16.mxu0 0
    %3172 = vmatpush1.bf16.msra.mxu0 %v3142
    %3173 = vmatprep.subr.bf16.mxu0 0
    %3174 = vmatpush2.bf16.msra.mxu0 0
    %3175 = vmatprep.subr.bf16.mxu0 0
    %3176 = vmatpush2.bf16.msra.mxu0 0
    %3177 = vmatprep.subr.bf16.mxu0 0
    %3178 = vmatpush2.bf16.msra.mxu0 0
    %3179 = vmatprep.subr.bf16.mxu0 0
    %3180 = vmatpush2.bf16.msra.mxu0 0
    %3181 = vmatprep.subr.bf16.mxu0 0
    %3182 = vmatpush2.bf16.msra.mxu0 0
    %3183 = vmatprep.subr.bf16.mxu0 0
    %3184 = vmatpush2.bf16.msra.mxu0 0
    %3185 = vmatprep.subr.bf16.mxu0 0
    %3186 = vmatpush2.bf16.msra.mxu0 0
    %3187 = vmatprep.subr.bf16.mxu0 0
    %3188 = vmatpush2.bf16.msra.mxu0 0
    %3189 = vmatprep.mubr.bf16.mxu0 0
    %3190 = vmatmul.mubr.bf16.gmra.mxu0 %v3155
    %v3191 = vpop.f32.mrf.mxu0
    %v3192 = vadd.f32 %v3117, %v3191
    %v3193 = vpop.f32.mrf.mxu0
    %v3194 = vpop.f32.mrf.mxu0
    %v3195 = vpop.f32.mrf.mxu0
    %3196 = vdwg.mxu0
    %v3197 = vtanh.pop %v3192
    %s3198 = scalar_lea.vmem [#allocation21], 16
    %3199 = vst [vmem:[%s3198] sm:$0xff] %v3197
    %s3200 = scalar_lea.vmem [#allocation4], 24
    %v3201 = vld [vmem:[%s3200] sm:$0xff]
    %3202 = vrot.lane.b32.xlu0 %v2327, 96
    %v3203 = vpop.permute.xlu0 %3202
    %v3205 = vsel %vm199, %v3201, %v3203
    %v3206 = vpack.c.bf16 %v3205, %v3205
    %v3207 = vld [vmem:[#allocation10] sm:$0xf]
    %v3208 = vld [vmem:[#allocation10 + $0x4] sm:$0xf]
    %v3209 = vld [vmem:[#allocation10 + $0x8] sm:$0xf]
    %v3210 = vld [vmem:[#allocation10 + $0xc] sm:$0xf]
    %v3211 = vld [vmem:[#allocation10 + $0x10] sm:$0xf]
    %v3212 = vld [vmem:[#allocation10 + $0x14] sm:$0xf]
    %v3213 = vld [vmem:[#allocation10 + $0x18] sm:$0xf]
    %v3214 = vld [vmem:[#allocation10 + $0x1c] sm:$0xf]
    %v3215 = vld [vmem:[#allocation10 + $0x20] sm:$0xf]
    %v3216 = vld [vmem:[#allocation10 + $0x24] sm:$0xf]
    %v3217 = vld [vmem:[#allocation10 + $0x28] sm:$0xf]
    %v3218 = vld [vmem:[#allocation10 + $0x2c] sm:$0xf]
    %v3219 = vld [vmem:[#allocation12] sm:$0xff]
    %v3232 = vunpack.c.l.b16 %v3207
    %v3233 = vunpack.c.l.b16 %v3208
    %v3234 = vunpack.c.l.b16 %v3209
    %v3235 = vunpack.c.l.b16 %v3210
    %v3236 = vunpack.c.l.b16 %v3211
    %v3237 = vunpack.c.l.b16 %v3212
    %v3238 = vunpack.c.l.b16 %v3213
    %v3239 = vunpack.c.l.b16 %v3214
    %v3240 = vunpack.c.l.b16 %v3215
    %v3241 = vunpack.c.l.b16 %v3216
    %v3242 = vunpack.c.l.b16 %v3217
    %v3243 = vunpack.c.l.b16 %v3218
    %v3244 = vpack.c.b16 %v3233, %v3232
    %v3245 = vpack.c.b16 %v3235, %v3234
    %v3246 = vpack.c.b16 %v3237, %v3236
    %v3247 = vpack.c.b16 %v3239, %v3238
    %v3248 = vpack.c.b16 %v3241, %v3240
    %v3249 = vpack.c.b16 %v3243, %v3242
    %v3257 = vsel %vm251, %v3206, 0
    %3259 = vmatprep.subr.bf16.mxu0 0
    %3260 = vmatpush1.bf16.msra.mxu0 0
    %3261 = vmatprep.subr.bf16.mxu0 0
    %3262 = vmatpush1.bf16.msra.mxu0 0
    %3263 = vmatprep.subr.bf16.mxu0 0
    %3264 = vmatpush1.bf16.msra.mxu0 %v3249
    %3265 = vmatprep.subr.bf16.mxu0 0
    %3266 = vmatpush1.bf16.msra.mxu0 %v3248
    %3267 = vmatprep.subr.bf16.mxu0 0
    %3268 = vmatpush1.bf16.msra.mxu0 %v3247
    %3269 = vmatprep.subr.bf16.mxu0 0
    %3270 = vmatpush1.bf16.msra.mxu0 %v3246
    %3271 = vmatprep.subr.bf16.mxu0 0
    %3272 = vmatpush1.bf16.msra.mxu0 %v3245
    %3273 = vmatprep.subr.bf16.mxu0 0
    %3274 = vmatpush1.bf16.msra.mxu0 %v3244
    %3275 = vmatprep.subr.bf16.mxu0 0
    %3276 = vmatpush2.bf16.msra.mxu0 0
    %3277 = vmatprep.subr.bf16.mxu0 0
    %3278 = vmatpush2.bf16.msra.mxu0 0
    %3279 = vmatprep.subr.bf16.mxu0 0
    %3280 = vmatpush2.bf16.msra.mxu0 0
    %3281 = vmatprep.subr.bf16.mxu0 0
    %3282 = vmatpush2.bf16.msra.mxu0 0
    %3283 = vmatprep.subr.bf16.mxu0 0
    %3284 = vmatpush2.bf16.msra.mxu0 0
    %3285 = vmatprep.subr.bf16.mxu0 0
    %3286 = vmatpush2.bf16.msra.mxu0 0
    %3287 = vmatprep.subr.bf16.mxu0 0
    %3288 = vmatpush2.bf16.msra.mxu0 0
    %3289 = vmatprep.subr.bf16.mxu0 0
    %3290 = vmatpush2.bf16.msra.mxu0 0
    %3291 = vmatprep.mubr.bf16.mxu0 0
    %3292 = vmatmul.mubr.bf16.gmra.mxu0 %v3257
    %v3293 = vpop.f32.mrf.mxu0
    %v3294 = vadd.f32 %v3219, %v3293
    %v3295 = vpop.f32.mrf.mxu0
    %v3296 = vpop.f32.mrf.mxu0
    %v3297 = vpop.f32.mrf.mxu0
    %3298 = vdwg.mxu0
    %v3299 = vxor.u32 %v3294, 2147483648
    %v3300 = vmul.f32 %v3299, 1.442695
    %v3301 = vpow.pop %v3300
    %v3302 = vadd.f32 %v3301, 1.0
    %v3303 = vrcp.pop %v3302
    %v3304 = vmul.f32 1.0, %v3303
    %v3305 = vtanh.pop %v3294
    %v3306 = vmul.f32 %v3304, %v2321
    %3308 = vrot.lane.b32.xlu0 %v3305, 64
    %v3309 = vpop.permute.xlu0 %3308
    %v3311 = vmul.f32 %v3304, %v3309
    %3313 = vrot.lane.b32.xlu0 %v3311, 32
    %v3314 = vpop.permute.xlu0 %3313
    %v3316 = vadd.f32 %v3306, %v3314
    %v3317 = vtanh.pop %v3316
    %3319 = vrot.lane.b32.xlu0 %v3317, 64
    %v3320 = vpop.permute.xlu0 %3319
    %v3322 = vmul.f32 %v3304, %v3320
    %3324 = vrot.lane.b32.xlu0 %v3322, 32
    %v3325 = vpop.permute.xlu0 %3324
    %3327 = vrot.lane.b32.xlu0 %v2436, 64
    %v3328 = vpop.permute.xlu0 %3327
    %v3330 = vsel %vm331, %v3325, %v3328
    %v3331 = vpack.c.bf16 %v3330, %v3330
    %v3332 = vld [vmem:[#allocation13] sm:$0xf]
    %v3333 = vld [vmem:[#allocation13 + $0x4] sm:$0xf]
    %v3334 = vld [vmem:[#allocation13 + $0x8] sm:$0xf]
    %v3335 = vld [vmem:[#allocation13 + $0xc] sm:$0xf]
    %v3336 = vld [vmem:[#allocation13 + $0x10] sm:$0xf]
    %v3337 = vld [vmem:[#allocation13 + $0x14] sm:$0xf]
    %v3338 = vld [vmem:[#allocation13 + $0x18] sm:$0xf]
    %v3339 = vld [vmem:[#allocation13 + $0x1c] sm:$0xf]
    %v3340 = vld [vmem:[%s6] sm:$0xff]
    %v3349 = vunpack.c.l.b16 %v3332
    %v3350 = vunpack.c.l.b16 %v3333
    %v3351 = vunpack.c.l.b16 %v3334
    %v3352 = vunpack.c.l.b16 %v3335
    %v3353 = vunpack.c.l.b16 %v3336
    %v3354 = vunpack.c.l.b16 %v3337
    %v3355 = vunpack.c.l.b16 %v3338
    %v3356 = vunpack.c.l.b16 %v3339
    %v3357 = vpack.c.b16 %v3350, %v3349
    %v3358 = vpack.c.b16 %v3352, %v3351
    %v3359 = vpack.c.b16 %v3354, %v3353
    %v3360 = vpack.c.b16 %v3356, %v3355
    %v3366 = vsel %vm199, %v3331, 0
    %3368 = vmatprep.subr.bf16.mxu0 0
    %3369 = vmatpush1.bf16.msra.mxu0 0
    %3370 = vmatprep.subr.bf16.mxu0 0
    %3371 = vmatpush1.bf16.msra.mxu0 0
    %3372 = vmatprep.subr.bf16.mxu0 0
    %3373 = vmatpush1.bf16.msra.mxu0 0
    %3374 = vmatprep.subr.bf16.mxu0 0
    %3375 = vmatpush1.bf16.msra.mxu0 0
    %3376 = vmatprep.subr.bf16.mxu0 0
    %3377 = vmatpush1.bf16.msra.mxu0 %v3360
    %3378 = vmatprep.subr.bf16.mxu0 0
    %3379 = vmatpush1.bf16.msra.mxu0 %v3359
    %3380 = vmatprep.subr.bf16.mxu0 0
    %3381 = vmatpush1.bf16.msra.mxu0 %v3358
    %3382 = vmatprep.subr.bf16.mxu0 0
    %3383 = vmatpush1.bf16.msra.mxu0 %v3357
    %3384 = vmatprep.subr.bf16.mxu0 0
    %3385 = vmatpush2.bf16.msra.mxu0 0
    %3386 = vmatprep.subr.bf16.mxu0 0
    %3387 = vmatpush2.bf16.msra.mxu0 0
    %3388 = vmatprep.subr.bf16.mxu0 0
    %3389 = vmatpush2.bf16.msra.mxu0 0
    %3390 = vmatprep.subr.bf16.mxu0 0
    %3391 = vmatpush2.bf16.msra.mxu0 0
    %3392 = vmatprep.subr.bf16.mxu0 0
    %3393 = vmatpush2.bf16.msra.mxu0 0
    %3394 = vmatprep.subr.bf16.mxu0 0
    %3395 = vmatpush2.bf16.msra.mxu0 0
    %3396 = vmatprep.subr.bf16.mxu0 0
    %3397 = vmatpush2.bf16.msra.mxu0 0
    %3398 = vmatprep.subr.bf16.mxu0 0
    %3399 = vmatpush2.bf16.msra.mxu0 0
    %3400 = vmatprep.mubr.bf16.mxu0 0
    %3401 = vmatmul.mubr.bf16.gmra.mxu0 %v3366
    %v3402 = vpop.f32.mrf.mxu0
    %v3403 = vadd.f32 %v3340, %v3402
    %v3404 = vpop.f32.mrf.mxu0
    %v3405 = vpop.f32.mrf.mxu0
    %v3406 = vpop.f32.mrf.mxu0
    %3407 = vdwg.mxu0
    %v3408 = vxor.u32 %v3403, 2147483648
    %v3409 = vmul.f32 %v3408, 1.442695
    %v3410 = vpow.pop %v3409
    %v3411 = vadd.f32 %v3410, 1.0
    %v3412 = vrcp.pop %v3411
    %v3413 = vmul.f32 1.0, %v3412
    %v3414 = vtanh.pop %v3403
    %v3415 = vmul.f32 %v3413, %v2430
    %3417 = vrot.lane.b32.xlu0 %v3414, 64
    %v3418 = vpop.permute.xlu0 %3417
    %v3420 = vmul.f32 %v3413, %v3418
    %3422 = vrot.lane.b32.xlu0 %v3420, 32
    %v3423 = vpop.permute.xlu0 %3422
    %v3425 = vadd.f32 %v3415, %v3423
    %v3426 = vtanh.pop %v3425
    %3428 = vrot.lane.b32.xlu0 %v3426, 64
    %v3429 = vpop.permute.xlu0 %3428
    %v3431 = vmul.f32 %v3413, %v3429
    %v3433 = vcombine.high %v3431, %v3431
    %v3435 = vunpack.c.l.s4 1966171168
    %v3436 = vunpack.c.0.s8 %v3435
    %v3437 = vlaneseq
    %v3438 = vshrl.u32 %v3437, 7
    %v3439 = vsub.s32 %v3436, %v3438
    %v3440 = vrot.slane %v3431, %v3439
    %v3442 = vunpack.c.l.s4 1966171168
    %v3443 = vunpack.c.0.s8 %v3442
    %v3444 = vlaneseq
    %v3445 = vshrl.u32 %v3444, 7
    %v3446 = vsub.s32 %v3443, %v3445
    %v3447 = vrot.slane %v3433, %v3446
    %v3448 = vcombine.high %v3440, %v3440
    %v3449 = vcombine.high %v3447, %v3447
    %v3451 = vunpack.c.l.s4 1966171168
    %v3452 = vunpack.c.0.s8 %v3451
    %v3453 = vlaneseq
    %v3454 = vshrl.u32 %v3453, 7
    %v3455 = vsub.s32 %v3452, %v3454
    %v3456 = vrot.slane %v3440, %v3455
    %v3458 = vunpack.c.l.s4 1966171168
    %v3459 = vunpack.c.0.s8 %v3458
    %v3460 = vlaneseq
    %v3461 = vshrl.u32 %v3460, 7
    %v3462 = vsub.s32 %v3459, %v3461
    %v3463 = vrot.slane %v3447, %v3462
    %v3465 = vunpack.c.l.s4 1966171168
    %v3466 = vunpack.c.0.s8 %v3465
    %v3467 = vlaneseq
    %v3468 = vshrl.u32 %v3467, 7
    %v3469 = vsub.s32 %v3466, %v3468
    %v3470 = vrot.slane %v3448, %v3469
    %v3472 = vunpack.c.l.s4 1966171168
    %v3473 = vunpack.c.0.s8 %v3472
    %v3474 = vlaneseq
    %v3475 = vshrl.u32 %v3474, 7
    %v3476 = vsub.s32 %v3473, %v3475
    %v3477 = vrot.slane %v3449, %v3476
    %v3478 = vcombine.high %v3456, %v3456
    %v3479 = vcombine.high %v3463, %v3463
    %v3480 = vcombine.high %v3470, %v3470
    %v3481 = vcombine.high %v3477, %v3477
    %v3482 = vld [vmem:[#allocation15] sm:$0xff]
    %v3483 = vld [vmem:[#allocation15 + $0x8] sm:$0xff]
    %v3484 = vld [vmem:[#allocation15 + $0x10] sm:$0xff]
    %v3485 = vld [vmem:[#allocation15 + $0x18] sm:$0xff]
    %v3486 = vld [vmem:[#allocation15 + $0x20] sm:$0xff]
    %v3487 = vld [vmem:[#allocation15 + $0x28] sm:$0xff]
    %v3488 = vld [vmem:[#allocation15 + $0x30] sm:$0xff]
    %v3489 = vld [vmem:[#allocation15 + $0x38] sm:$0xff]
    %v3490 = vlaneseq
    %v3491 = vshrl.u32 %v3490, 7
    %v3492 = vsub.s32 0, %v3491
    %v3493 = vrot.slane %v3456, %v3492
    %v3494 = vlaneseq
    %v3495 = vshrl.u32 %v3494, 7
    %v3496 = vsub.s32 0, %v3495
    %v3497 = vrot.slane %v3470, %v3496
    %v3498 = vlaneseq
    %v3499 = vshrl.u32 %v3498, 7
    %v3500 = vsub.s32 0, %v3499
    %v3501 = vrot.slane %v3478, %v3500
    %v3502 = vlaneseq
    %v3503 = vshrl.u32 %v3502, 7
    %v3504 = vsub.s32 0, %v3503
    %v3505 = vrot.slane %v3480, %v3504
    %v3506 = vlaneseq
    %v3507 = vshrl.u32 %v3506, 7
    %v3508 = vsub.s32 0, %v3507
    %v3509 = vrot.slane %v3463, %v3508
    %v3510 = vlaneseq
    %v3511 = vshrl.u32 %v3510, 7
    %v3512 = vsub.s32 0, %v3511
    %v3513 = vrot.slane %v3477, %v3512
    %v3514 = vlaneseq
    %v3515 = vshrl.u32 %v3514, 7
    %v3516 = vsub.s32 0, %v3515
    %v3517 = vrot.slane %v3479, %v3516
    %v3518 = vlaneseq
    %v3519 = vshrl.u32 %v3518, 7
    %v3520 = vsub.s32 0, %v3519
    %v3521 = vrot.slane %v3481, %v3520
    %3538 = vrot.lane.b32.xlu0 %v3482, 96
    %v3539 = vpop.permute.xlu0 %3538
    %3540 = vrot.lane.b32.xlu0 %v3483, 96
    %v3541 = vpop.permute.xlu0 %3540
    %3542 = vrot.lane.b32.xlu0 %v3484, 96
    %v3543 = vpop.permute.xlu0 %3542
    %3544 = vrot.lane.b32.xlu0 %v3485, 96
    %v3545 = vpop.permute.xlu0 %3544
    %3546 = vrot.lane.b32.xlu0 %v3486, 96
    %v3547 = vpop.permute.xlu0 %3546
    %3548 = vrot.lane.b32.xlu0 %v3487, 96
    %v3549 = vpop.permute.xlu0 %3548
    %3550 = vrot.lane.b32.xlu0 %v3488, 96
    %v3551 = vpop.permute.xlu0 %3550
    %3552 = vrot.lane.b32.xlu0 %v3489, 96
    %v3553 = vpop.permute.xlu0 %3552
    %v3562 = vmul.f32 %v3493, %v3539
    %v3563 = vmul.f32 %v3497, %v3541
    %v3564 = vmul.f32 %v3501, %v3543
    %v3565 = vmul.f32 %v3505, %v3545
    %v3566 = vmul.f32 %v3509, %v3547
    %v3567 = vmul.f32 %v3513, %v3549
    %v3568 = vmul.f32 %v3517, %v3551
    %v3569 = vmul.f32 %v3521, %v3553
    %3578 = vrot.lane.b32.xlu0 %v3562, 32
    %v3579 = vpop.permute.xlu0 %3578
    %3580 = vrot.lane.b32.xlu0 %v3563, 32
    %v3581 = vpop.permute.xlu0 %3580
    %3582 = vrot.lane.b32.xlu0 %v3564, 32
    %v3583 = vpop.permute.xlu0 %3582
    %3584 = vrot.lane.b32.xlu0 %v3565, 32
    %v3585 = vpop.permute.xlu0 %3584
    %3586 = vrot.lane.b32.xlu0 %v3566, 32
    %v3587 = vpop.permute.xlu0 %3586
    %3588 = vrot.lane.b32.xlu0 %v3567, 32
    %v3589 = vpop.permute.xlu0 %3588
    %3590 = vrot.lane.b32.xlu0 %v3568, 32
    %v3591 = vpop.permute.xlu0 %3590
    %3592 = vrot.lane.b32.xlu0 %v3569, 32
    %v3593 = vpop.permute.xlu0 %3592
    %v3602 = vsel %vm331, %v3579, 0.0
    %3603 = vadd.xlane.f32.xlu0 %v3602
    %v3604 = vpop.xlane.xlu0 %3603
    %v3605 = vsel %vm331, %v3581, 0.0
    %3606 = vadd.xlane.f32.xlu0 %v3605
    %v3607 = vpop.xlane.xlu0 %3606
    %v3608 = vsel %vm331, %v3583, 0.0
    %3609 = vadd.xlane.f32.xlu0 %v3608
    %v3610 = vpop.xlane.xlu0 %3609
    %v3611 = vsel %vm331, %v3585, 0.0
    %3612 = vadd.xlane.f32.xlu0 %v3611
    %v3613 = vpop.xlane.xlu0 %3612
    %v3614 = vsel %vm331, %v3587, 0.0
    %3615 = vadd.xlane.f32.xlu0 %v3614
    %v3616 = vpop.xlane.xlu0 %3615
    %v3617 = vsel %vm331, %v3589, 0.0
    %3618 = vadd.xlane.f32.xlu0 %v3617
    %v3619 = vpop.xlane.xlu0 %3618
    %v3620 = vsel %vm331, %v3591, 0.0
    %3621 = vadd.xlane.f32.xlu0 %v3620
    %v3622 = vpop.xlane.xlu0 %3621
    %v3623 = vsel %vm331, %v3593, 0.0
    %3624 = vadd.xlane.f32.xlu0 %v3623
    %v3625 = vpop.xlane.xlu0 %3624
    %v3626 = vld [vmem:[#allocation16] sm:$0xff]
    %v3628 = vlaneseq
    %v3629 = vshrl.u32 %v3628, 7
    %v3630 = vsub.s32 0, %v3629
    %v3631 = vrot.slane %v3626, %v3630
    %3633 = vbcast.lane.b32.xlu0 %v3631, 256
    %v3634 = vpop.permute.xlu0 %3633
    %v3635 = vlaneseq
    %v3636 = vshrl.u32 %v3635, 7
    %v3637 = vsub.s32 1, %v3636
    %v3638 = vrot.slane %v3626, %v3637
    %3640 = vbcast.lane.b32.xlu0 %v3638, 256
    %v3641 = vpop.permute.xlu0 %3640
    %v3642 = vlaneseq
    %v3643 = vshrl.u32 %v3642, 7
    %v3644 = vsub.s32 2, %v3643
    %v3645 = vrot.slane %v3626, %v3644
    %3647 = vbcast.lane.b32.xlu0 %v3645, 256
    %v3648 = vpop.permute.xlu0 %3647
    %v3649 = vlaneseq
    %v3650 = vshrl.u32 %v3649, 7
    %v3651 = vsub.s32 3, %v3650
    %v3652 = vrot.slane %v3626, %v3651
    %3654 = vbcast.lane.b32.xlu0 %v3652, 256
    %v3655 = vpop.permute.xlu0 %3654
    %v3656 = vlaneseq
    %v3657 = vshrl.u32 %v3656, 7
    %v3658 = vsub.s32 4, %v3657
    %v3659 = vrot.slane %v3626, %v3658
    %3661 = vbcast.lane.b32.xlu0 %v3659, 256
    %v3662 = vpop.permute.xlu0 %3661
    %v3663 = vlaneseq
    %v3664 = vshrl.u32 %v3663, 7
    %v3665 = vsub.s32 5, %v3664
    %v3666 = vrot.slane %v3626, %v3665
    %3668 = vbcast.lane.b32.xlu0 %v3666, 256
    %v3669 = vpop.permute.xlu0 %3668
    %v3670 = vlaneseq
    %v3671 = vshrl.u32 %v3670, 7
    %v3672 = vsub.s32 6, %v3671
    %v3673 = vrot.slane %v3626, %v3672
    %3675 = vbcast.lane.b32.xlu0 %v3673, 256
    %v3676 = vpop.permute.xlu0 %3675
    %v3677 = vlaneseq
    %v3678 = vshrl.u32 %v3677, 7
    %v3679 = vsub.s32 7, %v3678
    %v3680 = vrot.slane %v3626, %v3679
    %3682 = vbcast.lane.b32.xlu0 %v3680, 256
    %v3683 = vpop.permute.xlu0 %3682
    %v3692 = vadd.f32 %v3604, %v3634
    %v3693 = vadd.f32 %v3607, %v3641
    %v3694 = vadd.f32 %v3610, %v3648
    %v3695 = vadd.f32 %v3613, %v3655
    %v3696 = vadd.f32 %v3616, %v3662
    %v3697 = vadd.f32 %v3619, %v3669
    %v3698 = vadd.f32 %v3622, %v3676
    %v3699 = vadd.f32 %v3625, %v3683
    %3708 = vset.pattern.permute.xlu0 0
    %3709 = vperm.xlu0 %3708, %v3692
    %v3710 = vpop.permute.xlu0 %3709
    %3711 = vset.pattern.permute.xlu0 0
    %3712 = vperm.xlu0 %3711, %v3693
    %v3713 = vpop.permute.xlu0 %3712
    %3714 = vset.pattern.permute.xlu0 0
    %3715 = vperm.xlu0 %3714, %v3694
    %v3716 = vpop.permute.xlu0 %3715
    %3717 = vset.pattern.permute.xlu0 0
    %3718 = vperm.xlu0 %3717, %v3695
    %v3719 = vpop.permute.xlu0 %3718
    %3720 = vset.pattern.permute.xlu0 0
    %3721 = vperm.xlu0 %3720, %v3696
    %v3722 = vpop.permute.xlu0 %3721
    %3723 = vset.pattern.permute.xlu0 0
    %3724 = vperm.xlu0 %3723, %v3697
    %v3725 = vpop.permute.xlu0 %3724
    %3726 = vset.pattern.permute.xlu0 0
    %3727 = vperm.xlu0 %3726, %v3698
    %v3728 = vpop.permute.xlu0 %3727
    %3729 = vset.pattern.permute.xlu0 0
    %3730 = vperm.xlu0 %3729, %v3699
    %v3731 = vpop.permute.xlu0 %3730
    %v3732 = vlaneseq
    %v3733 = vshrl.u32 %v3732, 7
    %v3734 = vsub.s32 %v739, %v3733
    %v3735 = vrot.slane %v3710, %v3734
    %v3736 = vlaneseq
    %v3737 = vshrl.u32 %v3736, 7
    %v3738 = vsub.s32 %v739, %v3737
    %v3739 = vrot.slane %v3713, %v3738
    %v3740 = vlaneseq
    %v3741 = vshrl.u32 %v3740, 7
    %v3742 = vsub.s32 %v739, %v3741
    %v3743 = vrot.slane %v3716, %v3742
    %v3744 = vlaneseq
    %v3745 = vshrl.u32 %v3744, 7
    %v3746 = vsub.s32 %v739, %v3745
    %v3747 = vrot.slane %v3719, %v3746
    %v3748 = vlaneseq
    %v3749 = vshrl.u32 %v3748, 7
    %v3750 = vsub.s32 %v739, %v3749
    %v3751 = vrot.slane %v3722, %v3750
    %v3752 = vlaneseq
    %v3753 = vshrl.u32 %v3752, 7
    %v3754 = vsub.s32 %v739, %v3753
    %v3755 = vrot.slane %v3725, %v3754
    %v3756 = vlaneseq
    %v3757 = vshrl.u32 %v3756, 7
    %v3758 = vsub.s32 %v739, %v3757
    %v3759 = vrot.slane %v3728, %v3758
    %v3760 = vlaneseq
    %v3761 = vshrl.u32 %v3760, 7
    %v3762 = vsub.s32 %v739, %v3761
    %v3763 = vrot.slane %v3731, %v3762
    %v3764 = vsel %vm772, %v3739, %v3735
    %v3765 = vsel %vm774, %v3743, %v3764
    %v3766 = vsel %vm776, %v3747, %v3765
    %v3767 = vsel %vm778, %v3751, %v3766
    %v3768 = vsel %vm780, %v3755, %v3767
    %v3769 = vsel %vm782, %v3759, %v3768
    %v3770 = vsel %vm784, %v3763, %v3769
    %v3772 = vsel %vm787, %v3770, -inf
    %3773 = vmax.xlane.f32.xlu0 %v3772
    %v3774 = vpop.xlane.xlu0 %3773
    %v3776 = vlaneseq
    %v3777 = vshrl.u32 %v3776, 7
    %v3778 = vsub.s32 0, %v3777
    %v3779 = vrot.slane %v3774, %v3778
    %v3780 = vlaneseq
    %v3781 = vshrl.u32 %v3780, 7
    %v3782 = vsub.s32 1, %v3781
    %v3783 = vrot.slane %v3774, %v3782
    %v3784 = vlaneseq
    %v3785 = vshrl.u32 %v3784, 7
    %v3786 = vsub.s32 2, %v3785
    %v3787 = vrot.slane %v3774, %v3786
    %v3788 = vlaneseq
    %v3789 = vshrl.u32 %v3788, 7
    %v3790 = vsub.s32 3, %v3789
    %v3791 = vrot.slane %v3774, %v3790
    %v3792 = vlaneseq
    %v3793 = vshrl.u32 %v3792, 7
    %v3794 = vsub.s32 4, %v3793
    %v3795 = vrot.slane %v3774, %v3794
    %v3796 = vlaneseq
    %v3797 = vshrl.u32 %v3796, 7
    %v3798 = vsub.s32 5, %v3797
    %v3799 = vrot.slane %v3774, %v3798
    %v3800 = vlaneseq
    %v3801 = vshrl.u32 %v3800, 7
    %v3802 = vsub.s32 6, %v3801
    %v3803 = vrot.slane %v3774, %v3802
    %v3804 = vlaneseq
    %v3805 = vshrl.u32 %v3804, 7
    %v3806 = vsub.s32 7, %v3805
    %v3807 = vrot.slane %v3774, %v3806
    %v3816 = vsub.f32 %v3692, %v3779
    %v3817 = vsub.f32 %v3693, %v3783
    %v3818 = vsub.f32 %v3694, %v3787
    %v3819 = vsub.f32 %v3695, %v3791
    %v3820 = vsub.f32 %v3696, %v3795
    %v3821 = vsub.f32 %v3697, %v3799
    %v3822 = vsub.f32 %v3698, %v3803
    %v3823 = vsub.f32 %v3699, %v3807
    %v3824 = vmul.f32 %v3816, 1.442695
    %v3825 = vpow.pop %v3824
    %v3826 = vmul.f32 %v3817, 1.442695
    %v3827 = vpow.pop %v3826
    %v3828 = vmul.f32 %v3818, 1.442695
    %v3829 = vpow.pop %v3828
    %v3830 = vmul.f32 %v3819, 1.442695
    %v3831 = vpow.pop %v3830
    %v3832 = vmul.f32 %v3820, 1.442695
    %v3833 = vpow.pop %v3832
    %v3834 = vmul.f32 %v3821, 1.442695
    %v3835 = vpow.pop %v3834
    %v3836 = vmul.f32 %v3822, 1.442695
    %v3837 = vpow.pop %v3836
    %v3838 = vmul.f32 %v3823, 1.442695
    %v3839 = vpow.pop %v3838
    %3848 = vset.pattern.permute.xlu0 0
    %3849 = vperm.xlu0 %3848, %v3825
    %v3850 = vpop.permute.xlu0 %3849
    %3851 = vset.pattern.permute.xlu0 0
    %3852 = vperm.xlu0 %3851, %v3827
    %v3853 = vpop.permute.xlu0 %3852
    %3854 = vset.pattern.permute.xlu0 0
    %3855 = vperm.xlu0 %3854, %v3829
    %v3856 = vpop.permute.xlu0 %3855
    %3857 = vset.pattern.permute.xlu0 0
    %3858 = vperm.xlu0 %3857, %v3831
    %v3859 = vpop.permute.xlu0 %3858
    %3860 = vset.pattern.permute.xlu0 0
    %3861 = vperm.xlu0 %3860, %v3833
    %v3862 = vpop.permute.xlu0 %3861
    %3863 = vset.pattern.permute.xlu0 0
    %3864 = vperm.xlu0 %3863, %v3835
    %v3865 = vpop.permute.xlu0 %3864
    %3866 = vset.pattern.permute.xlu0 0
    %3867 = vperm.xlu0 %3866, %v3837
    %v3868 = vpop.permute.xlu0 %3867
    %3869 = vset.pattern.permute.xlu0 0
    %3870 = vperm.xlu0 %3869, %v3839
    %v3871 = vpop.permute.xlu0 %3870
    %v3872 = vlaneseq
    %v3873 = vshrl.u32 %v3872, 7
    %v3874 = vsub.s32 %v739, %v3873
    %v3875 = vrot.slane %v3850, %v3874
    %v3876 = vlaneseq
    %v3877 = vshrl.u32 %v3876, 7
    %v3878 = vsub.s32 %v739, %v3877
    %v3879 = vrot.slane %v3853, %v3878
    %v3880 = vlaneseq
    %v3881 = vshrl.u32 %v3880, 7
    %v3882 = vsub.s32 %v739, %v3881
    %v3883 = vrot.slane %v3856, %v3882
    %v3884 = vlaneseq
    %v3885 = vshrl.u32 %v3884, 7
    %v3886 = vsub.s32 %v739, %v3885
    %v3887 = vrot.slane %v3859, %v3886
    %v3888 = vlaneseq
    %v3889 = vshrl.u32 %v3888, 7
    %v3890 = vsub.s32 %v739, %v3889
    %v3891 = vrot.slane %v3862, %v3890
    %v3892 = vlaneseq
    %v3893 = vshrl.u32 %v3892, 7
    %v3894 = vsub.s32 %v739, %v3893
    %v3895 = vrot.slane %v3865, %v3894
    %v3896 = vlaneseq
    %v3897 = vshrl.u32 %v3896, 7
    %v3898 = vsub.s32 %v739, %v3897
    %v3899 = vrot.slane %v3868, %v3898
    %v3900 = vlaneseq
    %v3901 = vshrl.u32 %v3900, 7
    %v3902 = vsub.s32 %v739, %v3901
    %v3903 = vrot.slane %v3871, %v3902
    %v3904 = vsel %vm772, %v3879, %v3875
    %v3905 = vsel %vm774, %v3883, %v3904
    %v3906 = vsel %vm776, %v3887, %v3905
    %v3907 = vsel %vm778, %v3891, %v3906
    %v3908 = vsel %vm780, %v3895, %v3907
    %v3909 = vsel %vm782, %v3899, %v3908
    %v3910 = vsel %vm784, %v3903, %v3909
    %v3912 = vsel %vm787, %v3910, 0.0
    %3913 = vadd.xlane.f32.xlu0 %v3912
    %v3914 = vpop.xlane.xlu0 %3913
    %v3915 = vrcp.pop %v3914
    %v3917 = vlaneseq
    %v3918 = vshrl.u32 %v3917, 7
    %v3919 = vsub.s32 0, %v3918
    %v3920 = vrot.slane %v3915, %v3919
    %v3921 = vlaneseq
    %v3922 = vshrl.u32 %v3921, 7
    %v3923 = vsub.s32 1, %v3922
    %v3924 = vrot.slane %v3915, %v3923
    %v3925 = vlaneseq
    %v3926 = vshrl.u32 %v3925, 7
    %v3927 = vsub.s32 2, %v3926
    %v3928 = vrot.slane %v3915, %v3927
    %v3929 = vlaneseq
    %v3930 = vshrl.u32 %v3929, 7
    %v3931 = vsub.s32 3, %v3930
    %v3932 = vrot.slane %v3915, %v3931
    %v3933 = vlaneseq
    %v3934 = vshrl.u32 %v3933, 7
    %v3935 = vsub.s32 4, %v3934
    %v3936 = vrot.slane %v3915, %v3935
    %v3937 = vlaneseq
    %v3938 = vshrl.u32 %v3937, 7
    %v3939 = vsub.s32 5, %v3938
    %v3940 = vrot.slane %v3915, %v3939
    %v3941 = vlaneseq
    %v3942 = vshrl.u32 %v3941, 7
    %v3943 = vsub.s32 6, %v3942
    %v3944 = vrot.slane %v3915, %v3943
    %v3945 = vlaneseq
    %v3946 = vshrl.u32 %v3945, 7
    %v3947 = vsub.s32 7, %v3946
    %v3948 = vrot.slane %v3915, %v3947
    %v3957 = vmul.f32 %v3825, %v3920
    %v3958 = vmul.f32 %v3827, %v3924
    %v3959 = vmul.f32 %v3829, %v3928
    %v3960 = vmul.f32 %v3831, %v3932
    %v3961 = vmul.f32 %v3833, %v3936
    %v3962 = vmul.f32 %v3835, %v3940
    %v3963 = vmul.f32 %v3837, %v3944
    %v3964 = vmul.f32 %v3839, %v3948
    %v3965 = vld [vmem:[#allocation18] sm:$0xff]
    %v3966 = vld [vmem:[#allocation18 + $0x8] sm:$0xff]
    %v3967 = vld [vmem:[#allocation18 + $0x10] sm:$0xff]
    %v3968 = vld [vmem:[#allocation18 + $0x18] sm:$0xff]
    %v3969 = vld [vmem:[#allocation18 + $0x20] sm:$0xff]
    %v3970 = vld [vmem:[#allocation18 + $0x28] sm:$0xff]
    %v3971 = vld [vmem:[#allocation18 + $0x30] sm:$0xff]
    %v3972 = vld [vmem:[#allocation18 + $0x38] sm:$0xff]
    %3974 = vset.pattern.permute.xlu0 0
    %3975 = vperm.xlu0 %3974, %v3957
    %v3976 = vpop.permute.xlu0 %3975
    %3979 = vset.pattern.permute.xlu0 0
    %3980 = vperm.xlu0 %3979, %v3958
    %v3981 = vpop.permute.xlu0 %3980
    %3984 = vset.pattern.permute.xlu0 0
    %3985 = vperm.xlu0 %3984, %v3959
    %v3986 = vpop.permute.xlu0 %3985
    %3989 = vset.pattern.permute.xlu0 0
    %3990 = vperm.xlu0 %3989, %v3960
    %v3991 = vpop.permute.xlu0 %3990
    %3994 = vset.pattern.permute.xlu0 0
    %3995 = vperm.xlu0 %3994, %v3961
    %v3996 = vpop.permute.xlu0 %3995
    %3999 = vset.pattern.permute.xlu0 0
    %4000 = vperm.xlu0 %3999, %v3962
    %v4001 = vpop.permute.xlu0 %4000
    %4004 = vset.pattern.permute.xlu0 0
    %4005 = vperm.xlu0 %4004, %v3963
    %v4006 = vpop.permute.xlu0 %4005
    %4009 = vset.pattern.permute.xlu0 0
    %4010 = vperm.xlu0 %4009, %v3964
    %v4011 = vpop.permute.xlu0 %4010
    %v4013 = vmul.f32 %v3976, %v3965
    %v4014 = vmul.f32 %v3981, %v3966
    %v4015 = vmul.f32 %v3986, %v3967
    %v4016 = vmul.f32 %v3991, %v3968
    %v4017 = vmul.f32 %v3996, %v3969
    %v4018 = vmul.f32 %v4001, %v3970
    %v4019 = vmul.f32 %v4006, %v3971
    %v4020 = vmul.f32 %v4011, %v3972
    %v4021 = vsel %vm199, %v4013, 0.0
    %v4022 = vrot.slane %v4021, 4
    %v4023 = vadd.f32 %v4021, %v4022
    %v4024 = vrot.slane %v4023, 2
    %v4025 = vadd.f32 %v4023, %v4024
    %v4026 = vrot.slane %v4025, 1
    %v4027 = vadd.f32 %v4025, %v4026
    %v4028 = vsel %vm199, %v4014, 0.0
    %v4029 = vrot.slane %v4028, 4
    %v4030 = vadd.f32 %v4028, %v4029
    %v4031 = vrot.slane %v4030, 2
    %v4032 = vadd.f32 %v4030, %v4031
    %v4033 = vrot.slane %v4032, 1
    %v4034 = vadd.f32 %v4032, %v4033
    %v4035 = vsel %vm199, %v4015, 0.0
    %v4036 = vrot.slane %v4035, 4
    %v4037 = vadd.f32 %v4035, %v4036
    %v4038 = vrot.slane %v4037, 2
    %v4039 = vadd.f32 %v4037, %v4038
    %v4040 = vrot.slane %v4039, 1
    %v4041 = vadd.f32 %v4039, %v4040
    %v4042 = vsel %vm199, %v4016, 0.0
    %v4043 = vrot.slane %v4042, 4
    %v4044 = vadd.f32 %v4042, %v4043
    %v4045 = vrot.slane %v4044, 2
    %v4046 = vadd.f32 %v4044, %v4045
    %v4047 = vrot.slane %v4046, 1
    %v4048 = vadd.f32 %v4046, %v4047
    %v4049 = vsel %vm199, %v4017, 0.0
    %v4050 = vrot.slane %v4049, 4
    %v4051 = vadd.f32 %v4049, %v4050
    %v4052 = vrot.slane %v4051, 2
    %v4053 = vadd.f32 %v4051, %v4052
    %v4054 = vrot.slane %v4053, 1
    %v4055 = vadd.f32 %v4053, %v4054
    %v4056 = vsel %vm199, %v4018, 0.0
    %v4057 = vrot.slane %v4056, 4
    %v4058 = vadd.f32 %v4056, %v4057
    %v4059 = vrot.slane %v4058, 2
    %v4060 = vadd.f32 %v4058, %v4059
    %v4061 = vrot.slane %v4060, 1
    %v4062 = vadd.f32 %v4060, %v4061
    %v4063 = vsel %vm199, %v4019, 0.0
    %v4064 = vrot.slane %v4063, 4
    %v4065 = vadd.f32 %v4063, %v4064
    %v4066 = vrot.slane %v4065, 2
    %v4067 = vadd.f32 %v4065, %v4066
    %v4068 = vrot.slane %v4067, 1
    %v4069 = vadd.f32 %v4067, %v4068
    %v4070 = vsel %vm199, %v4020, 0.0
    %v4071 = vrot.slane %v4070, 4
    %v4072 = vadd.f32 %v4070, %v4071
    %v4073 = vrot.slane %v4072, 2
    %v4074 = vadd.f32 %v4072, %v4073
    %v4075 = vrot.slane %v4074, 1
    %v4076 = vadd.f32 %v4074, %v4075
    %4077 = vrot.lane.b32.xlu0 %v3431, 32
    %v4078 = vpop.permute.xlu0 %4077
    %v4088 = vsel %vm772, %v4034, %v4027
    %v4089 = vsel %vm774, %v4041, %v4088
    %v4090 = vsel %vm776, %v4048, %v4089
    %v4091 = vsel %vm778, %v4055, %v4090
    %v4092 = vsel %vm780, %v4062, %v4091
    %v4093 = vsel %vm782, %v4069, %v4092
    %v4094 = vsel %vm784, %v4076, %v4093
    %4095 = vrot.lane.b32.xlu0 %v4094, 32
    %v4096 = vpop.permute.xlu0 %4095
    %v4098 = vsel %vm331, %v4078, %v4096
    %v4099 = vpack.c.bf16 %v4098, %v4098
    %v4100 = vld [vmem:[#allocation19] sm:$0xf]
    %v4101 = vld [vmem:[#allocation19 + $0x4] sm:$0xf]
    %v4102 = vld [vmem:[#allocation19 + $0x8] sm:$0xf]
    %v4103 = vld [vmem:[#allocation19 + $0xc] sm:$0xf]
    %v4104 = vld [vmem:[#allocation19 + $0x10] sm:$0xf]
    %v4105 = vld [vmem:[#allocation19 + $0x14] sm:$0xf]
    %v4106 = vld [vmem:[#allocation19 + $0x18] sm:$0xf]
    %v4107 = vld [vmem:[#allocation19 + $0x1c] sm:$0xf]
    %v4108 = vld [vmem:[#allocation19 + $0x20] sm:$0xf]
    %v4109 = vld [vmem:[#allocation19 + $0x24] sm:$0xf]
    %v4110 = vld [vmem:[#allocation19 + $0x28] sm:$0xf]
    %v4111 = vld [vmem:[#allocation19 + $0x2c] sm:$0xf]
    %v4112 = vld [vmem:[%s11] sm:$0xff]
    %v4125 = vunpack.c.l.b16 %v4100
    %v4126 = vunpack.c.l.b16 %v4101
    %v4127 = vunpack.c.l.b16 %v4102
    %v4128 = vunpack.c.l.b16 %v4103
    %v4129 = vunpack.c.l.b16 %v4104
    %v4130 = vunpack.c.l.b16 %v4105
    %v4131 = vunpack.c.l.b16 %v4106
    %v4132 = vunpack.c.l.b16 %v4107
    %v4133 = vunpack.c.l.b16 %v4108
    %v4134 = vunpack.c.l.b16 %v4109
    %v4135 = vunpack.c.l.b16 %v4110
    %v4136 = vunpack.c.l.b16 %v4111
    %v4137 = vpack.c.b16 %v4126, %v4125
    %v4138 = vpack.c.b16 %v4128, %v4127
    %v4139 = vpack.c.b16 %v4130, %v4129
    %v4140 = vpack.c.b16 %v4132, %v4131
    %v4141 = vpack.c.b16 %v4134, %v4133
    %v4142 = vpack.c.b16 %v4136, %v4135
    %v4150 = vsel %vm251, %v4099, 0
    %4152 = vmatprep.subr.bf16.mxu0 0
    %4153 = vmatpush1.bf16.msra.mxu0 0
    %4154 = vmatprep.subr.bf16.mxu0 0
    %4155 = vmatpush1.bf16.msra.mxu0 0
    %4156 = vmatprep.subr.bf16.mxu0 0
    %4157 = vmatpush1.bf16.msra.mxu0 %v4142
    %4158 = vmatprep.subr.bf16.mxu0 0
    %4159 = vmatpush1.bf16.msra.mxu0 %v4141
    %4160 = vmatprep.subr.bf16.mxu0 0
    %4161 = vmatpush1.bf16.msra.mxu0 %v4140
    %4162 = vmatprep.subr.bf16.mxu0 0
    %4163 = vmatpush1.bf16.msra.mxu0 %v4139
    %4164 = vmatprep.subr.bf16.mxu0 0
    %4165 = vmatpush1.bf16.msra.mxu0 %v4138
    %4166 = vmatprep.subr.bf16.mxu0 0
    %4167 = vmatpush1.bf16.msra.mxu0 %v4137
    %4168 = vmatprep.subr.bf16.mxu0 0
    %4169 = vmatpush2.bf16.msra.mxu0 0
    %4170 = vmatprep.subr.bf16.mxu0 0
    %4171 = vmatpush2.bf16.msra.mxu0 0
    %4172 = vmatprep.subr.bf16.mxu0 0
    %4173 = vmatpush2.bf16.msra.mxu0 0
    %4174 = vmatprep.subr.bf16.mxu0 0
    %4175 = vmatpush2.bf16.msra.mxu0 0
    %4176 = vmatprep.subr.bf16.mxu0 0
    %4177 = vmatpush2.bf16.msra.mxu0 0
    %4178 = vmatprep.subr.bf16.mxu0 0
    %4179 = vmatpush2.bf16.msra.mxu0 0
    %4180 = vmatprep.subr.bf16.mxu0 0
    %4181 = vmatpush2.bf16.msra.mxu0 0
    %4182 = vmatprep.subr.bf16.mxu0 0
    %4183 = vmatpush2.bf16.msra.mxu0 0
    %4184 = vmatprep.mubr.bf16.mxu0 0
    %4185 = vmatmul.mubr.bf16.gmra.mxu0 %v4150
    %v4186 = vpop.f32.mrf.mxu0
    %v4187 = vadd.f32 %v4112, %v4186
    %v4188 = vpop.f32.mrf.mxu0
    %v4189 = vpop.f32.mrf.mxu0
    %v4190 = vpop.f32.mrf.mxu0
    %4191 = vdwg.mxu0
    %v4192 = vtanh.pop %v4187
    %s4193 = scalar_lea.vmem [#allocation21], 24
    %4194 = vst [vmem:[%s4193] sm:$0xff] %v4192
    %s4195 = scalar_lea.vmem [#allocation4], 32
    %v4196 = vld [vmem:[%s4195] sm:$0xff]
    %4197 = vrot.lane.b32.xlu0 %v3322, 96
    %v4198 = vpop.permute.xlu0 %4197
    %v4200 = vsel %vm199, %v4196, %v4198
    %v4201 = vpack.c.bf16 %v4200, %v4200
    %v4202 = vld [vmem:[#allocation10] sm:$0xf]
    %v4203 = vld [vmem:[#allocation10 + $0x4] sm:$0xf]
    %v4204 = vld [vmem:[#allocation10 + $0x8] sm:$0xf]
    %v4205 = vld [vmem:[#allocation10 + $0xc] sm:$0xf]
    %v4206 = vld [vmem:[#allocation10 + $0x10] sm:$0xf]
    %v4207 = vld [vmem:[#allocation10 + $0x14] sm:$0xf]
    %v4208 = vld [vmem:[#allocation10 + $0x18] sm:$0xf]
    %v4209 = vld [vmem:[#allocation10 + $0x1c] sm:$0xf]
    %v4210 = vld [vmem:[#allocation10 + $0x20] sm:$0xf]
    %v4211 = vld [vmem:[#allocation10 + $0x24] sm:$0xf]
    %v4212 = vld [vmem:[#allocation10 + $0x28] sm:$0xf]
    %v4213 = vld [vmem:[#allocation10 + $0x2c] sm:$0xf]
    %v4214 = vld [vmem:[#allocation12] sm:$0xff]
    %v4227 = vunpack.c.l.b16 %v4202
    %v4228 = vunpack.c.l.b16 %v4203
    %v4229 = vunpack.c.l.b16 %v4204
    %v4230 = vunpack.c.l.b16 %v4205
    %v4231 = vunpack.c.l.b16 %v4206
    %v4232 = vunpack.c.l.b16 %v4207
    %v4233 = vunpack.c.l.b16 %v4208
    %v4234 = vunpack.c.l.b16 %v4209
    %v4235 = vunpack.c.l.b16 %v4210
    %v4236 = vunpack.c.l.b16 %v4211
    %v4237 = vunpack.c.l.b16 %v4212
    %v4238 = vunpack.c.l.b16 %v4213
    %v4239 = vpack.c.b16 %v4228, %v4227
    %v4240 = vpack.c.b16 %v4230, %v4229
    %v4241 = vpack.c.b16 %v4232, %v4231
    %v4242 = vpack.c.b16 %v4234, %v4233
    %v4243 = vpack.c.b16 %v4236, %v4235
    %v4244 = vpack.c.b16 %v4238, %v4237
    %v4252 = vsel %vm251, %v4201, 0
    %4254 = vmatprep.subr.bf16.mxu0 0
    %4255 = vmatpush1.bf16.msra.mxu0 0
    %4256 = vmatprep.subr.bf16.mxu0 0
    %4257 = vmatpush1.bf16.msra.mxu0 0
    %4258 = vmatprep.subr.bf16.mxu0 0
    %4259 = vmatpush1.bf16.msra.mxu0 %v4244
    %4260 = vmatprep.subr.bf16.mxu0 0
    %4261 = vmatpush1.bf16.msra.mxu0 %v4243
    %4262 = vmatprep.subr.bf16.mxu0 0
    %4263 = vmatpush1.bf16.msra.mxu0 %v4242
    %4264 = vmatprep.subr.bf16.mxu0 0
    %4265 = vmatpush1.bf16.msra.mxu0 %v4241
    %4266 = vmatprep.subr.bf16.mxu0 0
    %4267 = vmatpush1.bf16.msra.mxu0 %v4240
    %4268 = vmatprep.subr.bf16.mxu0 0
    %4269 = vmatpush1.bf16.msra.mxu0 %v4239
    %4270 = vmatprep.subr.bf16.mxu0 0
    %4271 = vmatpush2.bf16.msra.mxu0 0
    %4272 = vmatprep.subr.bf16.mxu0 0
    %4273 = vmatpush2.bf16.msra.mxu0 0
    %4274 = vmatprep.subr.bf16.mxu0 0
    %4275 = vmatpush2.bf16.msra.mxu0 0
    %4276 = vmatprep.subr.bf16.mxu0 0
    %4277 = vmatpush2.bf16.msra.mxu0 0
    %4278 = vmatprep.subr.bf16.mxu0 0
    %4279 = vmatpush2.bf16.msra.mxu0 0
    %4280 = vmatprep.subr.bf16.mxu0 0
    %4281 = vmatpush2.bf16.msra.mxu0 0
    %4282 = vmatprep.subr.bf16.mxu0 0
    %4283 = vmatpush2.bf16.msra.mxu0 0
    %4284 = vmatprep.subr.bf16.mxu0 0
    %4285 = vmatpush2.bf16.msra.mxu0 0
    %4286 = vmatprep.mubr.bf16.mxu0 0
    %4287 = vmatmul.mubr.bf16.gmra.mxu0 %v4252
    %v4288 = vpop.f32.mrf.mxu0
    %v4289 = vadd.f32 %v4214, %v4288
    %v4290 = vpop.f32.mrf.mxu0
    %v4291 = vpop.f32.mrf.mxu0
    %v4292 = vpop.f32.mrf.mxu0
    %4293 = vdwg.mxu0
    %v4294 = vxor.u32 %v4289, 2147483648
    %v4295 = vmul.f32 %v4294, 1.442695
    %v4296 = vpow.pop %v4295
    %v4297 = vadd.f32 %v4296, 1.0
    %v4298 = vrcp.pop %v4297
    %v4299 = vmul.f32 1.0, %v4298
    %v4300 = vtanh.pop %v4289
    %v4301 = vmul.f32 %v4299, %v3316
    %4303 = vrot.lane.b32.xlu0 %v4300, 64
    %v4304 = vpop.permute.xlu0 %4303
    %v4306 = vmul.f32 %v4299, %v4304
    %4308 = vrot.lane.b32.xlu0 %v4306, 32
    %v4309 = vpop.permute.xlu0 %4308
    %v4311 = vadd.f32 %v4301, %v4309
    %v4312 = vtanh.pop %v4311
    %4314 = vrot.lane.b32.xlu0 %v4312, 64
    %v4315 = vpop.permute.xlu0 %4314
    %v4317 = vmul.f32 %v4299, %v4315
    %4319 = vrot.lane.b32.xlu0 %v4317, 32
    %v4320 = vpop.permute.xlu0 %4319
    %4322 = vrot.lane.b32.xlu0 %v3431, 64
    %v4323 = vpop.permute.xlu0 %4322
    %v4325 = vsel %vm331, %v4320, %v4323
    %v4326 = vpack.c.bf16 %v4325, %v4325
    %v4327 = vld [vmem:[#allocation13] sm:$0xf]
    %v4328 = vld [vmem:[#allocation13 + $0x4] sm:$0xf]
    %v4329 = vld [vmem:[#allocation13 + $0x8] sm:$0xf]
    %v4330 = vld [vmem:[#allocation13 + $0xc] sm:$0xf]
    %v4331 = vld [vmem:[#allocation13 + $0x10] sm:$0xf]
    %v4332 = vld [vmem:[#allocation13 + $0x14] sm:$0xf]
    %v4333 = vld [vmem:[#allocation13 + $0x18] sm:$0xf]
    %v4334 = vld [vmem:[#allocation13 + $0x1c] sm:$0xf]
    %v4335 = vld [vmem:[%s6] sm:$0xff]
    %v4344 = vunpack.c.l.b16 %v4327
    %v4345 = vunpack.c.l.b16 %v4328
    %v4346 = vunpack.c.l.b16 %v4329
    %v4347 = vunpack.c.l.b16 %v4330
    %v4348 = vunpack.c.l.b16 %v4331
    %v4349 = vunpack.c.l.b16 %v4332
    %v4350 = vunpack.c.l.b16 %v4333
    %v4351 = vunpack.c.l.b16 %v4334
    %v4352 = vpack.c.b16 %v4345, %v4344
    %v4353 = vpack.c.b16 %v4347, %v4346
    %v4354 = vpack.c.b16 %v4349, %v4348
    %v4355 = vpack.c.b16 %v4351, %v4350
    %v4361 = vsel %vm199, %v4326, 0
    %4363 = vmatprep.subr.bf16.mxu0 0
    %4364 = vmatpush1.bf16.msra.mxu0 0
    %4365 = vmatprep.subr.bf16.mxu0 0
    %4366 = vmatpush1.bf16.msra.mxu0 0
    %4367 = vmatprep.subr.bf16.mxu0 0
    %4368 = vmatpush1.bf16.msra.mxu0 0
    %4369 = vmatprep.subr.bf16.mxu0 0
    %4370 = vmatpush1.bf16.msra.mxu0 0
    %4371 = vmatprep.subr.bf16.mxu0 0
    %4372 = vmatpush1.bf16.msra.mxu0 %v4355
    %4373 = vmatprep.subr.bf16.mxu0 0
    %4374 = vmatpush1.bf16.msra.mxu0 %v4354
    %4375 = vmatprep.subr.bf16.mxu0 0
    %4376 = vmatpush1.bf16.msra.mxu0 %v4353
    %4377 = vmatprep.subr.bf16.mxu0 0
    %4378 = vmatpush1.bf16.msra.mxu0 %v4352
    %4379 = vmatprep.subr.bf16.mxu0 0
    %4380 = vmatpush2.bf16.msra.mxu0 0
    %4381 = vmatprep.subr.bf16.mxu0 0
    %4382 = vmatpush2.bf16.msra.mxu0 0
    %4383 = vmatprep.subr.bf16.mxu0 0
    %4384 = vmatpush2.bf16.msra.mxu0 0
    %4385 = vmatprep.subr.bf16.mxu0 0
    %4386 = vmatpush2.bf16.msra.mxu0 0
    %4387 = vmatprep.subr.bf16.mxu0 0
    %4388 = vmatpush2.bf16.msra.mxu0 0
    %4389 = vmatprep.subr.bf16.mxu0 0
    %4390 = vmatpush2.bf16.msra.mxu0 0
    %4391 = vmatprep.subr.bf16.mxu0 0
    %4392 = vmatpush2.bf16.msra.mxu0 0
    %4393 = vmatprep.subr.bf16.mxu0 0
    %4394 = vmatpush2.bf16.msra.mxu0 0
    %4395 = vmatprep.mubr.bf16.mxu0 0
    %4396 = vmatmul.mubr.bf16.gmra.mxu0 %v4361
    %v4397 = vpop.f32.mrf.mxu0
    %v4398 = vadd.f32 %v4335, %v4397
    %v4399 = vpop.f32.mrf.mxu0
    %v4400 = vpop.f32.mrf.mxu0
    %v4401 = vpop.f32.mrf.mxu0
    %4402 = vdwg.mxu0
    %v4403 = vxor.u32 %v4398, 2147483648
    %v4404 = vmul.f32 %v4403, 1.442695
    %v4405 = vpow.pop %v4404
    %v4406 = vadd.f32 %v4405, 1.0
    %v4407 = vrcp.pop %v4406
    %v4408 = vmul.f32 1.0, %v4407
    %v4409 = vtanh.pop %v4398
    %v4410 = vmul.f32 %v4408, %v3425
    %4412 = vrot.lane.b32.xlu0 %v4409, 64
    %v4413 = vpop.permute.xlu0 %4412
    %v4415 = vmul.f32 %v4408, %v4413
    %4417 = vrot.lane.b32.xlu0 %v4415, 32
    %v4418 = vpop.permute.xlu0 %4417
    %v4420 = vadd.f32 %v4410, %v4418
    %v4421 = vtanh.pop %v4420
    %4423 = vrot.lane.b32.xlu0 %v4421, 64
    %v4424 = vpop.permute.xlu0 %4423
    %v4426 = vmul.f32 %v4408, %v4424
    %v4428 = vcombine.high %v4426, %v4426
    %v4430 = vunpack.c.l.s4 1966171168
    %v4431 = vunpack.c.0.s8 %v4430
    %v4432 = vlaneseq
    %v4433 = vshrl.u32 %v4432, 7
    %v4434 = vsub.s32 %v4431, %v4433
    %v4435 = vrot.slane %v4426, %v4434
    %v4437 = vunpack.c.l.s4 1966171168
    %v4438 = vunpack.c.0.s8 %v4437
    %v4439 = vlaneseq
    %v4440 = vshrl.u32 %v4439, 7
    %v4441 = vsub.s32 %v4438, %v4440
    %v4442 = vrot.slane %v4428, %v4441
    %v4443 = vcombine.high %v4435, %v4435
    %v4444 = vcombine.high %v4442, %v4442
    %v4446 = vunpack.c.l.s4 1966171168
    %v4447 = vunpack.c.0.s8 %v4446
    %v4448 = vlaneseq
    %v4449 = vshrl.u32 %v4448, 7
    %v4450 = vsub.s32 %v4447, %v4449
    %v4451 = vrot.slane %v4435, %v4450
    %v4453 = vunpack.c.l.s4 1966171168
    %v4454 = vunpack.c.0.s8 %v4453
    %v4455 = vlaneseq
    %v4456 = vshrl.u32 %v4455, 7
    %v4457 = vsub.s32 %v4454, %v4456
    %v4458 = vrot.slane %v4442, %v4457
    %v4460 = vunpack.c.l.s4 1966171168
    %v4461 = vunpack.c.0.s8 %v4460
    %v4462 = vlaneseq
    %v4463 = vshrl.u32 %v4462, 7
    %v4464 = vsub.s32 %v4461, %v4463
    %v4465 = vrot.slane %v4443, %v4464
    %v4467 = vunpack.c.l.s4 1966171168
    %v4468 = vunpack.c.0.s8 %v4467
    %v4469 = vlaneseq
    %v4470 = vshrl.u32 %v4469, 7
    %v4471 = vsub.s32 %v4468, %v4470
    %v4472 = vrot.slane %v4444, %v4471
    %v4473 = vcombine.high %v4451, %v4451
    %v4474 = vcombine.high %v4458, %v4458
    %v4475 = vcombine.high %v4465, %v4465
    %v4476 = vcombine.high %v4472, %v4472
    %v4477 = vld [vmem:[#allocation15] sm:$0xff]
    %v4478 = vld [vmem:[#allocation15 + $0x8] sm:$0xff]
    %v4479 = vld [vmem:[#allocation15 + $0x10] sm:$0xff]
    %v4480 = vld [vmem:[#allocation15 + $0x18] sm:$0xff]
    %v4481 = vld [vmem:[#allocation15 + $0x20] sm:$0xff]
    %v4482 = vld [vmem:[#allocation15 + $0x28] sm:$0xff]
    %v4483 = vld [vmem:[#allocation15 + $0x30] sm:$0xff]
    %v4484 = vld [vmem:[#allocation15 + $0x38] sm:$0xff]
    %v4485 = vlaneseq
    %v4486 = vshrl.u32 %v4485, 7
    %v4487 = vsub.s32 0, %v4486
    %v4488 = vrot.slane %v4451, %v4487
    %v4489 = vlaneseq
    %v4490 = vshrl.u32 %v4489, 7
    %v4491 = vsub.s32 0, %v4490
    %v4492 = vrot.slane %v4465, %v4491
    %v4493 = vlaneseq
    %v4494 = vshrl.u32 %v4493, 7
    %v4495 = vsub.s32 0, %v4494
    %v4496 = vrot.slane %v4473, %v4495
    %v4497 = vlaneseq
    %v4498 = vshrl.u32 %v4497, 7
    %v4499 = vsub.s32 0, %v4498
    %v4500 = vrot.slane %v4475, %v4499
    %v4501 = vlaneseq
    %v4502 = vshrl.u32 %v4501, 7
    %v4503 = vsub.s32 0, %v4502
    %v4504 = vrot.slane %v4458, %v4503
    %v4505 = vlaneseq
    %v4506 = vshrl.u32 %v4505, 7
    %v4507 = vsub.s32 0, %v4506
    %v4508 = vrot.slane %v4472, %v4507
    %v4509 = vlaneseq
    %v4510 = vshrl.u32 %v4509, 7
    %v4511 = vsub.s32 0, %v4510
    %v4512 = vrot.slane %v4474, %v4511
    %v4513 = vlaneseq
    %v4514 = vshrl.u32 %v4513, 7
    %v4515 = vsub.s32 0, %v4514
    %v4516 = vrot.slane %v4476, %v4515
    %4533 = vrot.lane.b32.xlu0 %v4477, 96
    %v4534 = vpop.permute.xlu0 %4533
    %4535 = vrot.lane.b32.xlu0 %v4478, 96
    %v4536 = vpop.permute.xlu0 %4535
    %4537 = vrot.lane.b32.xlu0 %v4479, 96
    %v4538 = vpop.permute.xlu0 %4537
    %4539 = vrot.lane.b32.xlu0 %v4480, 96
    %v4540 = vpop.permute.xlu0 %4539
    %4541 = vrot.lane.b32.xlu0 %v4481, 96
    %v4542 = vpop.permute.xlu0 %4541
    %4543 = vrot.lane.b32.xlu0 %v4482, 96
    %v4544 = vpop.permute.xlu0 %4543
    %4545 = vrot.lane.b32.xlu0 %v4483, 96
    %v4546 = vpop.permute.xlu0 %4545
    %4547 = vrot.lane.b32.xlu0 %v4484, 96
    %v4548 = vpop.permute.xlu0 %4547
    %v4557 = vmul.f32 %v4488, %v4534
    %v4558 = vmul.f32 %v4492, %v4536
    %v4559 = vmul.f32 %v4496, %v4538
    %v4560 = vmul.f32 %v4500, %v4540
    %v4561 = vmul.f32 %v4504, %v4542
    %v4562 = vmul.f32 %v4508, %v4544
    %v4563 = vmul.f32 %v4512, %v4546
    %v4564 = vmul.f32 %v4516, %v4548
    %4573 = vrot.lane.b32.xlu0 %v4557, 32
    %v4574 = vpop.permute.xlu0 %4573
    %4575 = vrot.lane.b32.xlu0 %v4558, 32
    %v4576 = vpop.permute.xlu0 %4575
    %4577 = vrot.lane.b32.xlu0 %v4559, 32
    %v4578 = vpop.permute.xlu0 %4577
    %4579 = vrot.lane.b32.xlu0 %v4560, 32
    %v4580 = vpop.permute.xlu0 %4579
    %4581 = vrot.lane.b32.xlu0 %v4561, 32
    %v4582 = vpop.permute.xlu0 %4581
    %4583 = vrot.lane.b32.xlu0 %v4562, 32
    %v4584 = vpop.permute.xlu0 %4583
    %4585 = vrot.lane.b32.xlu0 %v4563, 32
    %v4586 = vpop.permute.xlu0 %4585
    %4587 = vrot.lane.b32.xlu0 %v4564, 32
    %v4588 = vpop.permute.xlu0 %4587
    %v4597 = vsel %vm331, %v4574, 0.0
    %4598 = vadd.xlane.f32.xlu0 %v4597
    %v4599 = vpop.xlane.xlu0 %4598
    %v4600 = vsel %vm331, %v4576, 0.0
    %4601 = vadd.xlane.f32.xlu0 %v4600
    %v4602 = vpop.xlane.xlu0 %4601
    %v4603 = vsel %vm331, %v4578, 0.0
    %4604 = vadd.xlane.f32.xlu0 %v4603
    %v4605 = vpop.xlane.xlu0 %4604
    %v4606 = vsel %vm331, %v4580, 0.0
    %4607 = vadd.xlane.f32.xlu0 %v4606
    %v4608 = vpop.xlane.xlu0 %4607
    %v4609 = vsel %vm331, %v4582, 0.0
    %4610 = vadd.xlane.f32.xlu0 %v4609
    %v4611 = vpop.xlane.xlu0 %4610
    %v4612 = vsel %vm331, %v4584, 0.0
    %4613 = vadd.xlane.f32.xlu0 %v4612
    %v4614 = vpop.xlane.xlu0 %4613
    %v4615 = vsel %vm331, %v4586, 0.0
    %4616 = vadd.xlane.f32.xlu0 %v4615
    %v4617 = vpop.xlane.xlu0 %4616
    %v4618 = vsel %vm331, %v4588, 0.0
    %4619 = vadd.xlane.f32.xlu0 %v4618
    %v4620 = vpop.xlane.xlu0 %4619
    %v4621 = vld [vmem:[#allocation16] sm:$0xff]
    %v4623 = vlaneseq
    %v4624 = vshrl.u32 %v4623, 7
    %v4625 = vsub.s32 0, %v4624
    %v4626 = vrot.slane %v4621, %v4625
    %4628 = vbcast.lane.b32.xlu0 %v4626, 256
    %v4629 = vpop.permute.xlu0 %4628
    %v4630 = vlaneseq
    %v4631 = vshrl.u32 %v4630, 7
    %v4632 = vsub.s32 1, %v4631
    %v4633 = vrot.slane %v4621, %v4632
    %4635 = vbcast.lane.b32.xlu0 %v4633, 256
    %v4636 = vpop.permute.xlu0 %4635
    %v4637 = vlaneseq
    %v4638 = vshrl.u32 %v4637, 7
    %v4639 = vsub.s32 2, %v4638
    %v4640 = vrot.slane %v4621, %v4639
    %4642 = vbcast.lane.b32.xlu0 %v4640, 256
    %v4643 = vpop.permute.xlu0 %4642
    %v4644 = vlaneseq
    %v4645 = vshrl.u32 %v4644, 7
    %v4646 = vsub.s32 3, %v4645
    %v4647 = vrot.slane %v4621, %v4646
    %4649 = vbcast.lane.b32.xlu0 %v4647, 256
    %v4650 = vpop.permute.xlu0 %4649
    %v4651 = vlaneseq
    %v4652 = vshrl.u32 %v4651, 7
    %v4653 = vsub.s32 4, %v4652
    %v4654 = vrot.slane %v4621, %v4653
    %4656 = vbcast.lane.b32.xlu0 %v4654, 256
    %v4657 = vpop.permute.xlu0 %4656
    %v4658 = vlaneseq
    %v4659 = vshrl.u32 %v4658, 7
    %v4660 = vsub.s32 5, %v4659
    %v4661 = vrot.slane %v4621, %v4660
    %4663 = vbcast.lane.b32.xlu0 %v4661, 256
    %v4664 = vpop.permute.xlu0 %4663
    %v4665 = vlaneseq
    %v4666 = vshrl.u32 %v4665, 7
    %v4667 = vsub.s32 6, %v4666
    %v4668 = vrot.slane %v4621, %v4667
    %4670 = vbcast.lane.b32.xlu0 %v4668, 256
    %v4671 = vpop.permute.xlu0 %4670
    %v4672 = vlaneseq
    %v4673 = vshrl.u32 %v4672, 7
    %v4674 = vsub.s32 7, %v4673
    %v4675 = vrot.slane %v4621, %v4674
    %4677 = vbcast.lane.b32.xlu0 %v4675, 256
    %v4678 = vpop.permute.xlu0 %4677
    %v4687 = vadd.f32 %v4599, %v4629
    %v4688 = vadd.f32 %v4602, %v4636
    %v4689 = vadd.f32 %v4605, %v4643
    %v4690 = vadd.f32 %v4608, %v4650
    %v4691 = vadd.f32 %v4611, %v4657
    %v4692 = vadd.f32 %v4614, %v4664
    %v4693 = vadd.f32 %v4617, %v4671
    %v4694 = vadd.f32 %v4620, %v4678
    %4703 = vset.pattern.permute.xlu0 0
    %4704 = vperm.xlu0 %4703, %v4687
    %v4705 = vpop.permute.xlu0 %4704
    %4706 = vset.pattern.permute.xlu0 0
    %4707 = vperm.xlu0 %4706, %v4688
    %v4708 = vpop.permute.xlu0 %4707
    %4709 = vset.pattern.permute.xlu0 0
    %4710 = vperm.xlu0 %4709, %v4689
    %v4711 = vpop.permute.xlu0 %4710
    %4712 = vset.pattern.permute.xlu0 0
    %4713 = vperm.xlu0 %4712, %v4690
    %v4714 = vpop.permute.xlu0 %4713
    %4715 = vset.pattern.permute.xlu0 0
    %4716 = vperm.xlu0 %4715, %v4691
    %v4717 = vpop.permute.xlu0 %4716
    %4718 = vset.pattern.permute.xlu0 0
    %4719 = vperm.xlu0 %4718, %v4692
    %v4720 = vpop.permute.xlu0 %4719
    %4721 = vset.pattern.permute.xlu0 0
    %4722 = vperm.xlu0 %4721, %v4693
    %v4723 = vpop.permute.xlu0 %4722
    %4724 = vset.pattern.permute.xlu0 0
    %4725 = vperm.xlu0 %4724, %v4694
    %v4726 = vpop.permute.xlu0 %4725
    %v4727 = vlaneseq
    %v4728 = vshrl.u32 %v4727, 7
    %v4729 = vsub.s32 %v739, %v4728
    %v4730 = vrot.slane %v4705, %v4729
    %v4731 = vlaneseq
    %v4732 = vshrl.u32 %v4731, 7
    %v4733 = vsub.s32 %v739, %v4732
    %v4734 = vrot.slane %v4708, %v4733
    %v4735 = vlaneseq
    %v4736 = vshrl.u32 %v4735, 7
    %v4737 = vsub.s32 %v739, %v4736
    %v4738 = vrot.slane %v4711, %v4737
    %v4739 = vlaneseq
    %v4740 = vshrl.u32 %v4739, 7
    %v4741 = vsub.s32 %v739, %v4740
    %v4742 = vrot.slane %v4714, %v4741
    %v4743 = vlaneseq
    %v4744 = vshrl.u32 %v4743, 7
    %v4745 = vsub.s32 %v739, %v4744
    %v4746 = vrot.slane %v4717, %v4745
    %v4747 = vlaneseq
    %v4748 = vshrl.u32 %v4747, 7
    %v4749 = vsub.s32 %v739, %v4748
    %v4750 = vrot.slane %v4720, %v4749
    %v4751 = vlaneseq
    %v4752 = vshrl.u32 %v4751, 7
    %v4753 = vsub.s32 %v739, %v4752
    %v4754 = vrot.slane %v4723, %v4753
    %v4755 = vlaneseq
    %v4756 = vshrl.u32 %v4755, 7
    %v4757 = vsub.s32 %v739, %v4756
    %v4758 = vrot.slane %v4726, %v4757
    %v4759 = vsel %vm772, %v4734, %v4730
    %v4760 = vsel %vm774, %v4738, %v4759
    %v4761 = vsel %vm776, %v4742, %v4760
    %v4762 = vsel %vm778, %v4746, %v4761
    %v4763 = vsel %vm780, %v4750, %v4762
    %v4764 = vsel %vm782, %v4754, %v4763
    %v4765 = vsel %vm784, %v4758, %v4764
    %v4767 = vsel %vm787, %v4765, -inf
    %4768 = vmax.xlane.f32.xlu0 %v4767
    %v4769 = vpop.xlane.xlu0 %4768
    %v4771 = vlaneseq
    %v4772 = vshrl.u32 %v4771, 7
    %v4773 = vsub.s32 0, %v4772
    %v4774 = vrot.slane %v4769, %v4773
    %v4775 = vlaneseq
    %v4776 = vshrl.u32 %v4775, 7
    %v4777 = vsub.s32 1, %v4776
    %v4778 = vrot.slane %v4769, %v4777
    %v4779 = vlaneseq
    %v4780 = vshrl.u32 %v4779, 7
    %v4781 = vsub.s32 2, %v4780
    %v4782 = vrot.slane %v4769, %v4781
    %v4783 = vlaneseq
    %v4784 = vshrl.u32 %v4783, 7
    %v4785 = vsub.s32 3, %v4784
    %v4786 = vrot.slane %v4769, %v4785
    %v4787 = vlaneseq
    %v4788 = vshrl.u32 %v4787, 7
    %v4789 = vsub.s32 4, %v4788
    %v4790 = vrot.slane %v4769, %v4789
    %v4791 = vlaneseq
    %v4792 = vshrl.u32 %v4791, 7
    %v4793 = vsub.s32 5, %v4792
    %v4794 = vrot.slane %v4769, %v4793
    %v4795 = vlaneseq
    %v4796 = vshrl.u32 %v4795, 7
    %v4797 = vsub.s32 6, %v4796
    %v4798 = vrot.slane %v4769, %v4797
    %v4799 = vlaneseq
    %v4800 = vshrl.u32 %v4799, 7
    %v4801 = vsub.s32 7, %v4800
    %v4802 = vrot.slane %v4769, %v4801
    %v4811 = vsub.f32 %v4687, %v4774
    %v4812 = vsub.f32 %v4688, %v4778
    %v4813 = vsub.f32 %v4689, %v4782
    %v4814 = vsub.f32 %v4690, %v4786
    %v4815 = vsub.f32 %v4691, %v4790
    %v4816 = vsub.f32 %v4692, %v4794
    %v4817 = vsub.f32 %v4693, %v4798
    %v4818 = vsub.f32 %v4694, %v4802
    %v4819 = vmul.f32 %v4811, 1.442695
    %v4820 = vpow.pop %v4819
    %v4821 = vmul.f32 %v4812, 1.442695
    %v4822 = vpow.pop %v4821
    %v4823 = vmul.f32 %v4813, 1.442695
    %v4824 = vpow.pop %v4823
    %v4825 = vmul.f32 %v4814, 1.442695
    %v4826 = vpow.pop %v4825
    %v4827 = vmul.f32 %v4815, 1.442695
    %v4828 = vpow.pop %v4827
    %v4829 = vmul.f32 %v4816, 1.442695
    %v4830 = vpow.pop %v4829
    %v4831 = vmul.f32 %v4817, 1.442695
    %v4832 = vpow.pop %v4831
    %v4833 = vmul.f32 %v4818, 1.442695
    %v4834 = vpow.pop %v4833
    %4843 = vset.pattern.permute.xlu0 0
    %4844 = vperm.xlu0 %4843, %v4820
    %v4845 = vpop.permute.xlu0 %4844
    %4846 = vset.pattern.permute.xlu0 0
    %4847 = vperm.xlu0 %4846, %v4822
    %v4848 = vpop.permute.xlu0 %4847
    %4849 = vset.pattern.permute.xlu0 0
    %4850 = vperm.xlu0 %4849, %v4824
    %v4851 = vpop.permute.xlu0 %4850
    %4852 = vset.pattern.permute.xlu0 0
    %4853 = vperm.xlu0 %4852, %v4826
    %v4854 = vpop.permute.xlu0 %4853
    %4855 = vset.pattern.permute.xlu0 0
    %4856 = vperm.xlu0 %4855, %v4828
    %v4857 = vpop.permute.xlu0 %4856
    %4858 = vset.pattern.permute.xlu0 0
    %4859 = vperm.xlu0 %4858, %v4830
    %v4860 = vpop.permute.xlu0 %4859
    %4861 = vset.pattern.permute.xlu0 0
    %4862 = vperm.xlu0 %4861, %v4832
    %v4863 = vpop.permute.xlu0 %4862
    %4864 = vset.pattern.permute.xlu0 0
    %4865 = vperm.xlu0 %4864, %v4834
    %v4866 = vpop.permute.xlu0 %4865
    %v4867 = vlaneseq
    %v4868 = vshrl.u32 %v4867, 7
    %v4869 = vsub.s32 %v739, %v4868
    %v4870 = vrot.slane %v4845, %v4869
    %v4871 = vlaneseq
    %v4872 = vshrl.u32 %v4871, 7
    %v4873 = vsub.s32 %v739, %v4872
    %v4874 = vrot.slane %v4848, %v4873
    %v4875 = vlaneseq
    %v4876 = vshrl.u32 %v4875, 7
    %v4877 = vsub.s32 %v739, %v4876
    %v4878 = vrot.slane %v4851, %v4877
    %v4879 = vlaneseq
    %v4880 = vshrl.u32 %v4879, 7
    %v4881 = vsub.s32 %v739, %v4880
    %v4882 = vrot.slane %v4854, %v4881
    %v4883 = vlaneseq
    %v4884 = vshrl.u32 %v4883, 7
    %v4885 = vsub.s32 %v739, %v4884
    %v4886 = vrot.slane %v4857, %v4885
    %v4887 = vlaneseq
    %v4888 = vshrl.u32 %v4887, 7
    %v4889 = vsub.s32 %v739, %v4888
    %v4890 = vrot.slane %v4860, %v4889
    %v4891 = vlaneseq
    %v4892 = vshrl.u32 %v4891, 7
    %v4893 = vsub.s32 %v739, %v4892
    %v4894 = vrot.slane %v4863, %v4893
    %v4895 = vlaneseq
    %v4896 = vshrl.u32 %v4895, 7
    %v4897 = vsub.s32 %v739, %v4896
    %v4898 = vrot.slane %v4866, %v4897
    %v4899 = vsel %vm772, %v4874, %v4870
    %v4900 = vsel %vm774, %v4878, %v4899
    %v4901 = vsel %vm776, %v4882, %v4900
    %v4902 = vsel %vm778, %v4886, %v4901
    %v4903 = vsel %vm780, %v4890, %v4902
    %v4904 = vsel %vm782, %v4894, %v4903
    %v4905 = vsel %vm784, %v4898, %v4904
    %v4907 = vsel %vm787, %v4905, 0.0
    %4908 = vadd.xlane.f32.xlu0 %v4907
    %v4909 = vpop.xlane.xlu0 %4908
    %v4910 = vrcp.pop %v4909
    %v4912 = vlaneseq
    %v4913 = vshrl.u32 %v4912, 7
    %v4914 = vsub.s32 0, %v4913
    %v4915 = vrot.slane %v4910, %v4914
    %v4916 = vlaneseq
    %v4917 = vshrl.u32 %v4916, 7
    %v4918 = vsub.s32 1, %v4917
    %v4919 = vrot.slane %v4910, %v4918
    %v4920 = vlaneseq
    %v4921 = vshrl.u32 %v4920, 7
    %v4922 = vsub.s32 2, %v4921
    %v4923 = vrot.slane %v4910, %v4922
    %v4924 = vlaneseq
    %v4925 = vshrl.u32 %v4924, 7
    %v4926 = vsub.s32 3, %v4925
    %v4927 = vrot.slane %v4910, %v4926
    %v4928 = vlaneseq
    %v4929 = vshrl.u32 %v4928, 7
    %v4930 = vsub.s32 4, %v4929
    %v4931 = vrot.slane %v4910, %v4930
    %v4932 = vlaneseq
    %v4933 = vshrl.u32 %v4932, 7
    %v4934 = vsub.s32 5, %v4933
    %v4935 = vrot.slane %v4910, %v4934
    %v4936 = vlaneseq
    %v4937 = vshrl.u32 %v4936, 7
    %v4938 = vsub.s32 6, %v4937
    %v4939 = vrot.slane %v4910, %v4938
    %v4940 = vlaneseq
    %v4941 = vshrl.u32 %v4940, 7
    %v4942 = vsub.s32 7, %v4941
    %v4943 = vrot.slane %v4910, %v4942
    %v4952 = vmul.f32 %v4820, %v4915
    %v4953 = vmul.f32 %v4822, %v4919
    %v4954 = vmul.f32 %v4824, %v4923
    %v4955 = vmul.f32 %v4826, %v4927
    %v4956 = vmul.f32 %v4828, %v4931
    %v4957 = vmul.f32 %v4830, %v4935
    %v4958 = vmul.f32 %v4832, %v4939
    %v4959 = vmul.f32 %v4834, %v4943
    %v4960 = vld [vmem:[#allocation18] sm:$0xff]
    %v4961 = vld [vmem:[#allocation18 + $0x8] sm:$0xff]
    %v4962 = vld [vmem:[#allocation18 + $0x10] sm:$0xff]
    %v4963 = vld [vmem:[#allocation18 + $0x18] sm:$0xff]
    %v4964 = vld [vmem:[#allocation18 + $0x20] sm:$0xff]
    %v4965 = vld [vmem:[#allocation18 + $0x28] sm:$0xff]
    %v4966 = vld [vmem:[#allocation18 + $0x30] sm:$0xff]
    %v4967 = vld [vmem:[#allocation18 + $0x38] sm:$0xff]
    %4969 = vset.pattern.permute.xlu0 0
    %4970 = vperm.xlu0 %4969, %v4952
    %v4971 = vpop.permute.xlu0 %4970
    %4974 = vset.pattern.permute.xlu0 0
    %4975 = vperm.xlu0 %4974, %v4953
    %v4976 = vpop.permute.xlu0 %4975
    %4979 = vset.pattern.permute.xlu0 0
    %4980 = vperm.xlu0 %4979, %v4954
    %v4981 = vpop.permute.xlu0 %4980
    %4984 = vset.pattern.permute.xlu0 0
    %4985 = vperm.xlu0 %4984, %v4955
    %v4986 = vpop.permute.xlu0 %4985
    %4989 = vset.pattern.permute.xlu0 0
    %4990 = vperm.xlu0 %4989, %v4956
    %v4991 = vpop.permute.xlu0 %4990
    %4994 = vset.pattern.permute.xlu0 0
    %4995 = vperm.xlu0 %4994, %v4957
    %v4996 = vpop.permute.xlu0 %4995
    %4999 = vset.pattern.permute.xlu0 0
    %5000 = vperm.xlu0 %4999, %v4958
    %v5001 = vpop.permute.xlu0 %5000
    %5004 = vset.pattern.permute.xlu0 0
    %5005 = vperm.xlu0 %5004, %v4959
    %v5006 = vpop.permute.xlu0 %5005
    %v5008 = vmul.f32 %v4971, %v4960
    %v5009 = vmul.f32 %v4976, %v4961
    %v5010 = vmul.f32 %v4981, %v4962
    %v5011 = vmul.f32 %v4986, %v4963
    %v5012 = vmul.f32 %v4991, %v4964
    %v5013 = vmul.f32 %v4996, %v4965
    %v5014 = vmul.f32 %v5001, %v4966
    %v5015 = vmul.f32 %v5006, %v4967
    %v5016 = vsel %vm199, %v5008, 0.0
    %v5017 = vrot.slane %v5016, 4
    %v5018 = vadd.f32 %v5016, %v5017
    %v5019 = vrot.slane %v5018, 2
    %v5020 = vadd.f32 %v5018, %v5019
    %v5021 = vrot.slane %v5020, 1
    %v5022 = vadd.f32 %v5020, %v5021
    %v5023 = vsel %vm199, %v5009, 0.0
    %v5024 = vrot.slane %v5023, 4
    %v5025 = vadd.f32 %v5023, %v5024
    %v5026 = vrot.slane %v5025, 2
    %v5027 = vadd.f32 %v5025, %v5026
    %v5028 = vrot.slane %v5027, 1
    %v5029 = vadd.f32 %v5027, %v5028
    %v5030 = vsel %vm199, %v5010, 0.0
    %v5031 = vrot.slane %v5030, 4
    %v5032 = vadd.f32 %v5030, %v5031
    %v5033 = vrot.slane %v5032, 2
    %v5034 = vadd.f32 %v5032, %v5033
    %v5035 = vrot.slane %v5034, 1
    %v5036 = vadd.f32 %v5034, %v5035
    %v5037 = vsel %vm199, %v5011, 0.0
    %v5038 = vrot.slane %v5037, 4
    %v5039 = vadd.f32 %v5037, %v5038
    %v5040 = vrot.slane %v5039, 2
    %v5041 = vadd.f32 %v5039, %v5040
    %v5042 = vrot.slane %v5041, 1
    %v5043 = vadd.f32 %v5041, %v5042
    %v5044 = vsel %vm199, %v5012, 0.0
    %v5045 = vrot.slane %v5044, 4
    %v5046 = vadd.f32 %v5044, %v5045
    %v5047 = vrot.slane %v5046, 2
    %v5048 = vadd.f32 %v5046, %v5047
    %v5049 = vrot.slane %v5048, 1
    %v5050 = vadd.f32 %v5048, %v5049
    %v5051 = vsel %vm199, %v5013, 0.0
    %v5052 = vrot.slane %v5051, 4
    %v5053 = vadd.f32 %v5051, %v5052
    %v5054 = vrot.slane %v5053, 2
    %v5055 = vadd.f32 %v5053, %v5054
    %v5056 = vrot.slane %v5055, 1
    %v5057 = vadd.f32 %v5055, %v5056
    %v5058 = vsel %vm199, %v5014, 0.0
    %v5059 = vrot.slane %v5058, 4
    %v5060 = vadd.f32 %v5058, %v5059
    %v5061 = vrot.slane %v5060, 2
    %v5062 = vadd.f32 %v5060, %v5061
    %v5063 = vrot.slane %v5062, 1
    %v5064 = vadd.f32 %v5062, %v5063
    %v5065 = vsel %vm199, %v5015, 0.0
    %v5066 = vrot.slane %v5065, 4
    %v5067 = vadd.f32 %v5065, %v5066
    %v5068 = vrot.slane %v5067, 2
    %v5069 = vadd.f32 %v5067, %v5068
    %v5070 = vrot.slane %v5069, 1
    %v5071 = vadd.f32 %v5069, %v5070
    %5072 = vrot.lane.b32.xlu0 %v4426, 32
    %v5073 = vpop.permute.xlu0 %5072
    %v5083 = vsel %vm772, %v5029, %v5022
    %v5084 = vsel %vm774, %v5036, %v5083
    %v5085 = vsel %vm776, %v5043, %v5084
    %v5086 = vsel %vm778, %v5050, %v5085
    %v5087 = vsel %vm780, %v5057, %v5086
    %v5088 = vsel %vm782, %v5064, %v5087
    %v5089 = vsel %vm784, %v5071, %v5088
    %5090 = vrot.lane.b32.xlu0 %v5089, 32
    %v5091 = vpop.permute.xlu0 %5090
    %v5093 = vsel %vm331, %v5073, %v5091
    %v5094 = vpack.c.bf16 %v5093, %v5093
    %v5095 = vld [vmem:[#allocation19] sm:$0xf]
    %v5096 = vld [vmem:[#allocation19 + $0x4] sm:$0xf]
    %v5097 = vld [vmem:[#allocation19 + $0x8] sm:$0xf]
    %v5098 = vld [vmem:[#allocation19 + $0xc] sm:$0xf]
    %v5099 = vld [vmem:[#allocation19 + $0x10] sm:$0xf]
    %v5100 = vld [vmem:[#allocation19 + $0x14] sm:$0xf]
    %v5101 = vld [vmem:[#allocation19 + $0x18] sm:$0xf]
    %v5102 = vld [vmem:[#allocation19 + $0x1c] sm:$0xf]
    %v5103 = vld [vmem:[#allocation19 + $0x20] sm:$0xf]
    %v5104 = vld [vmem:[#allocation19 + $0x24] sm:$0xf]
    %v5105 = vld [vmem:[#allocation19 + $0x28] sm:$0xf]
    %v5106 = vld [vmem:[#allocation19 + $0x2c] sm:$0xf]
    %v5107 = vld [vmem:[%s11] sm:$0xff]
    %v5120 = vunpack.c.l.b16 %v5095
    %v5121 = vunpack.c.l.b16 %v5096
    %v5122 = vunpack.c.l.b16 %v5097
    %v5123 = vunpack.c.l.b16 %v5098
    %v5124 = vunpack.c.l.b16 %v5099
    %v5125 = vunpack.c.l.b16 %v5100
    %v5126 = vunpack.c.l.b16 %v5101
    %v5127 = vunpack.c.l.b16 %v5102
    %v5128 = vunpack.c.l.b16 %v5103
    %v5129 = vunpack.c.l.b16 %v5104
    %v5130 = vunpack.c.l.b16 %v5105
    %v5131 = vunpack.c.l.b16 %v5106
    %v5132 = vpack.c.b16 %v5121, %v5120
    %v5133 = vpack.c.b16 %v5123, %v5122
    %v5134 = vpack.c.b16 %v5125, %v5124
    %v5135 = vpack.c.b16 %v5127, %v5126
    %v5136 = vpack.c.b16 %v5129, %v5128
    %v5137 = vpack.c.b16 %v5131, %v5130
    %v5145 = vsel %vm251, %v5094, 0
    %5147 = vmatprep.subr.bf16.mxu0 0
    %5148 = vmatpush1.bf16.msra.mxu0 0
    %5149 = vmatprep.subr.bf16.mxu0 0
    %5150 = vmatpush1.bf16.msra.mxu0 0
    %5151 = vmatprep.subr.bf16.mxu0 0
    %5152 = vmatpush1.bf16.msra.mxu0 %v5137
    %5153 = vmatprep.subr.bf16.mxu0 0
    %5154 = vmatpush1.bf16.msra.mxu0 %v5136
    %5155 = vmatprep.subr.bf16.mxu0 0
    %5156 = vmatpush1.bf16.msra.mxu0 %v5135
    %5157 = vmatprep.subr.bf16.mxu0 0
    %5158 = vmatpush1.bf16.msra.mxu0 %v5134
    %5159 = vmatprep.subr.bf16.mxu0 0
    %5160 = vmatpush1.bf16.msra.mxu0 %v5133
    %5161 = vmatprep.subr.bf16.mxu0 0
    %5162 = vmatpush1.bf16.msra.mxu0 %v5132
    %5163 = vmatprep.subr.bf16.mxu0 0
    %5164 = vmatpush2.bf16.msra.mxu0 0
    %5165 = vmatprep.subr.bf16.mxu0 0
    %5166 = vmatpush2.bf16.msra.mxu0 0
    %5167 = vmatprep.subr.bf16.mxu0 0
    %5168 = vmatpush2.bf16.msra.mxu0 0
    %5169 = vmatprep.subr.bf16.mxu0 0
    %5170 = vmatpush2.bf16.msra.mxu0 0
    %5171 = vmatprep.subr.bf16.mxu0 0
    %5172 = vmatpush2.bf16.msra.mxu0 0
    %5173 = vmatprep.subr.bf16.mxu0 0
    %5174 = vmatpush2.bf16.msra.mxu0 0
    %5175 = vmatprep.subr.bf16.mxu0 0
    %5176 = vmatpush2.bf16.msra.mxu0 0
    %5177 = vmatprep.subr.bf16.mxu0 0
    %5178 = vmatpush2.bf16.msra.mxu0 0
    %5179 = vmatprep.mubr.bf16.mxu0 0
    %5180 = vmatmul.mubr.bf16.gmra.mxu0 %v5145
    %v5181 = vpop.f32.mrf.mxu0
    %v5182 = vadd.f32 %v5107, %v5181
    %v5183 = vpop.f32.mrf.mxu0
    %v5184 = vpop.f32.mrf.mxu0
    %v5185 = vpop.f32.mrf.mxu0
    %5186 = vdwg.mxu0
    %v5187 = vtanh.pop %v5182
    %s5188 = scalar_lea.vmem [#allocation21], 32
    %5189 = vst [vmem:[%s5188] sm:$0xff] %v5187
    %s5190 = scalar_lea.vmem [#allocation4], 40
    %v5191 = vld [vmem:[%s5190] sm:$0xff]
    %5192 = vrot.lane.b32.xlu0 %v4317, 96
    %v5193 = vpop.permute.xlu0 %5192
    %v5195 = vsel %vm199, %v5191, %v5193
    %v5196 = vpack.c.bf16 %v5195, %v5195
    %v5197 = vld [vmem:[#allocation10] sm:$0xf]
    %v5198 = vld [vmem:[#allocation10 + $0x4] sm:$0xf]
    %v5199 = vld [vmem:[#allocation10 + $0x8] sm:$0xf]
    %v5200 = vld [vmem:[#allocation10 + $0xc] sm:$0xf]
    %v5201 = vld [vmem:[#allocation10 + $0x10] sm:$0xf]
    %v5202 = vld [vmem:[#allocation10 + $0x14] sm:$0xf]
    %v5203 = vld [vmem:[#allocation10 + $0x18] sm:$0xf]
    %v5204 = vld [vmem:[#allocation10 + $0x1c] sm:$0xf]
    %v5205 = vld [vmem:[#allocation10 + $0x20] sm:$0xf]
    %v5206 = vld [vmem:[#allocation10 + $0x24] sm:$0xf]
    %v5207 = vld [vmem:[#allocation10 + $0x28] sm:$0xf]
    %v5208 = vld [vmem:[#allocation10 + $0x2c] sm:$0xf]
    %v5209 = vld [vmem:[#allocation12] sm:$0xff]
    %v5222 = vunpack.c.l.b16 %v5197
    %v5223 = vunpack.c.l.b16 %v5198
    %v5224 = vunpack.c.l.b16 %v5199
    %v5225 = vunpack.c.l.b16 %v5200
    %v5226 = vunpack.c.l.b16 %v5201
    %v5227 = vunpack.c.l.b16 %v5202
    %v5228 = vunpack.c.l.b16 %v5203
    %v5229 = vunpack.c.l.b16 %v5204
    %v5230 = vunpack.c.l.b16 %v5205
    %v5231 = vunpack.c.l.b16 %v5206
    %v5232 = vunpack.c.l.b16 %v5207
    %v5233 = vunpack.c.l.b16 %v5208
    %v5234 = vpack.c.b16 %v5223, %v5222
    %v5235 = vpack.c.b16 %v5225, %v5224
    %v5236 = vpack.c.b16 %v5227, %v5226
    %v5237 = vpack.c.b16 %v5229, %v5228
    %v5238 = vpack.c.b16 %v5231, %v5230
    %v5239 = vpack.c.b16 %v5233, %v5232
    %v5247 = vsel %vm251, %v5196, 0
    %5249 = vmatprep.subr.bf16.mxu0 0
    %5250 = vmatpush1.bf16.msra.mxu0 0
    %5251 = vmatprep.subr.bf16.mxu0 0
    %5252 = vmatpush1.bf16.msra.mxu0 0
    %5253 = vmatprep.subr.bf16.mxu0 0
    %5254 = vmatpush1.bf16.msra.mxu0 %v5239
    %5255 = vmatprep.subr.bf16.mxu0 0
    %5256 = vmatpush1.bf16.msra.mxu0 %v5238
    %5257 = vmatprep.subr.bf16.mxu0 0
    %5258 = vmatpush1.bf16.msra.mxu0 %v5237
    %5259 = vmatprep.subr.bf16.mxu0 0
    %5260 = vmatpush1.bf16.msra.mxu0 %v5236
    %5261 = vmatprep.subr.bf16.mxu0 0
    %5262 = vmatpush1.bf16.msra.mxu0 %v5235
    %5263 = vmatprep.subr.bf16.mxu0 0
    %5264 = vmatpush1.bf16.msra.mxu0 %v5234
    %5265 = vmatprep.subr.bf16.mxu0 0
    %5266 = vmatpush2.bf16.msra.mxu0 0
    %5267 = vmatprep.subr.bf16.mxu0 0
    %5268 = vmatpush2.bf16.msra.mxu0 0
    %5269 = vmatprep.subr.bf16.mxu0 0
    %5270 = vmatpush2.bf16.msra.mxu0 0
    %5271 = vmatprep.subr.bf16.mxu0 0
    %5272 = vmatpush2.bf16.msra.mxu0 0
    %5273 = vmatprep.subr.bf16.mxu0 0
    %5274 = vmatpush2.bf16.msra.mxu0 0
    %5275 = vmatprep.subr.bf16.mxu0 0
    %5276 = vmatpush2.bf16.msra.mxu0 0
    %5277 = vmatprep.subr.bf16.mxu0 0
    %5278 = vmatpush2.bf16.msra.mxu0 0
    %5279 = vmatprep.subr.bf16.mxu0 0
    %5280 = vmatpush2.bf16.msra.mxu0 0
    %5281 = vmatprep.mubr.bf16.mxu0 0
    %5282 = vmatmul.mubr.bf16.gmra.mxu0 %v5247
    %v5283 = vpop.f32.mrf.mxu0
    %v5284 = vadd.f32 %v5209, %v5283
    %v5285 = vpop.f32.mrf.mxu0
    %v5286 = vpop.f32.mrf.mxu0
    %v5287 = vpop.f32.mrf.mxu0
    %5288 = vdwg.mxu0
    %v5289 = vxor.u32 %v5284, 2147483648
    %v5290 = vmul.f32 %v5289, 1.442695
    %v5291 = vpow.pop %v5290
    %v5292 = vadd.f32 %v5291, 1.0
    %v5293 = vrcp.pop %v5292
    %v5294 = vmul.f32 1.0, %v5293
    %v5295 = vtanh.pop %v5284
    %v5296 = vmul.f32 %v5294, %v4311
    %5298 = vrot.lane.b32.xlu0 %v5295, 64
    %v5299 = vpop.permute.xlu0 %5298
    %v5301 = vmul.f32 %v5294, %v5299
    %5303 = vrot.lane.b32.xlu0 %v5301, 32
    %v5304 = vpop.permute.xlu0 %5303
    %v5306 = vadd.f32 %v5296, %v5304
    %v5307 = vtanh.pop %v5306
    %5309 = vrot.lane.b32.xlu0 %v5307, 64
    %v5310 = vpop.permute.xlu0 %5309
    %v5312 = vmul.f32 %v5294, %v5310
    %5314 = vrot.lane.b32.xlu0 %v5312, 32
    %v5315 = vpop.permute.xlu0 %5314
    %5317 = vrot.lane.b32.xlu0 %v4426, 64
    %v5318 = vpop.permute.xlu0 %5317
    %v5320 = vsel %vm331, %v5315, %v5318
    %v5321 = vpack.c.bf16 %v5320, %v5320
    %v5322 = vld [vmem:[#allocation13] sm:$0xf]
    %v5323 = vld [vmem:[#allocation13 + $0x4] sm:$0xf]
    %v5324 = vld [vmem:[#allocation13 + $0x8] sm:$0xf]
    %v5325 = vld [vmem:[#allocation13 + $0xc] sm:$0xf]
    %v5326 = vld [vmem:[#allocation13 + $0x10] sm:$0xf]
    %v5327 = vld [vmem:[#allocation13 + $0x14] sm:$0xf]
    %v5328 = vld [vmem:[#allocation13 + $0x18] sm:$0xf]
    %v5329 = vld [vmem:[#allocation13 + $0x1c] sm:$0xf]
    %v5330 = vld [vmem:[%s6] sm:$0xff]
    %v5339 = vunpack.c.l.b16 %v5322
    %v5340 = vunpack.c.l.b16 %v5323
    %v5341 = vunpack.c.l.b16 %v5324
    %v5342 = vunpack.c.l.b16 %v5325
    %v5343 = vunpack.c.l.b16 %v5326
    %v5344 = vunpack.c.l.b16 %v5327
    %v5345 = vunpack.c.l.b16 %v5328
    %v5346 = vunpack.c.l.b16 %v5329
    %v5347 = vpack.c.b16 %v5340, %v5339
    %v5348 = vpack.c.b16 %v5342, %v5341
    %v5349 = vpack.c.b16 %v5344, %v5343
    %v5350 = vpack.c.b16 %v5346, %v5345
    %v5356 = vsel %vm199, %v5321, 0
    %5358 = vmatprep.subr.bf16.mxu0 0
    %5359 = vmatpush1.bf16.msra.mxu0 0
    %5360 = vmatprep.subr.bf16.mxu0 0
    %5361 = vmatpush1.bf16.msra.mxu0 0
    %5362 = vmatprep.subr.bf16.mxu0 0
    %5363 = vmatpush1.bf16.msra.mxu0 0
    %5364 = vmatprep.subr.bf16.mxu0 0
    %5365 = vmatpush1.bf16.msra.mxu0 0
    %5366 = vmatprep.subr.bf16.mxu0 0
    %5367 = vmatpush1.bf16.msra.mxu0 %v5350
    %5368 = vmatprep.subr.bf16.mxu0 0
    %5369 = vmatpush1.bf16.msra.mxu0 %v5349
    %5370 = vmatprep.subr.bf16.mxu0 0
    %5371 = vmatpush1.bf16.msra.mxu0 %v5348
    %5372 = vmatprep.subr.bf16.mxu0 0
    %5373 = vmatpush1.bf16.msra.mxu0 %v5347
    %5374 = vmatprep.subr.bf16.mxu0 0
    %5375 = vmatpush2.bf16.msra.mxu0 0
    %5376 = vmatprep.subr.bf16.mxu0 0
    %5377 = vmatpush2.bf16.msra.mxu0 0
    %5378 = vmatprep.subr.bf16.mxu0 0
    %5379 = vmatpush2.bf16.msra.mxu0 0
    %5380 = vmatprep.subr.bf16.mxu0 0
    %5381 = vmatpush2.bf16.msra.mxu0 0
    %5382 = vmatprep.subr.bf16.mxu0 0
    %5383 = vmatpush2.bf16.msra.mxu0 0
    %5384 = vmatprep.subr.bf16.mxu0 0
    %5385 = vmatpush2.bf16.msra.mxu0 0
    %5386 = vmatprep.subr.bf16.mxu0 0
    %5387 = vmatpush2.bf16.msra.mxu0 0
    %5388 = vmatprep.subr.bf16.mxu0 0
    %5389 = vmatpush2.bf16.msra.mxu0 0
    %5390 = vmatprep.mubr.bf16.mxu0 0
    %5391 = vmatmul.mubr.bf16.gmra.mxu0 %v5356
    %v5392 = vpop.f32.mrf.mxu0
    %v5393 = vadd.f32 %v5330, %v5392
    %v5394 = vpop.f32.mrf.mxu0
    %v5395 = vpop.f32.mrf.mxu0
    %v5396 = vpop.f32.mrf.mxu0
    %5397 = vdwg.mxu0
    %v5398 = vxor.u32 %v5393, 2147483648
    %v5399 = vmul.f32 %v5398, 1.442695
    %v5400 = vpow.pop %v5399
    %v5401 = vadd.f32 %v5400, 1.0
    %v5402 = vrcp.pop %v5401
    %v5403 = vmul.f32 1.0, %v5402
    %v5404 = vtanh.pop %v5393
    %v5405 = vmul.f32 %v5403, %v4420
    %5407 = vrot.lane.b32.xlu0 %v5404, 64
    %v5408 = vpop.permute.xlu0 %5407
    %v5410 = vmul.f32 %v5403, %v5408
    %5412 = vrot.lane.b32.xlu0 %v5410, 32
    %v5413 = vpop.permute.xlu0 %5412
    %v5415 = vadd.f32 %v5405, %v5413
    %v5416 = vtanh.pop %v5415
    %5418 = vrot.lane.b32.xlu0 %v5416, 64
    %v5419 = vpop.permute.xlu0 %5418
    %v5421 = vmul.f32 %v5403, %v5419
    %v5423 = vcombine.high %v5421, %v5421
    %v5425 = vunpack.c.l.s4 1966171168
    %v5426 = vunpack.c.0.s8 %v5425
    %v5427 = vlaneseq
    %v5428 = vshrl.u32 %v5427, 7
    %v5429 = vsub.s32 %v5426, %v5428
    %v5430 = vrot.slane %v5421, %v5429
    %v5432 = vunpack.c.l.s4 1966171168
    %v5433 = vunpack.c.0.s8 %v5432
    %v5434 = vlaneseq
    %v5435 = vshrl.u32 %v5434, 7
    %v5436 = vsub.s32 %v5433, %v5435
    %v5437 = vrot.slane %v5423, %v5436
    %v5438 = vcombine.high %v5430, %v5430
    %v5439 = vcombine.high %v5437, %v5437
    %v5441 = vunpack.c.l.s4 1966171168
    %v5442 = vunpack.c.0.s8 %v5441
    %v5443 = vlaneseq
    %v5444 = vshrl.u32 %v5443, 7
    %v5445 = vsub.s32 %v5442, %v5444
    %v5446 = vrot.slane %v5430, %v5445
    %v5448 = vunpack.c.l.s4 1966171168
    %v5449 = vunpack.c.0.s8 %v5448
    %v5450 = vlaneseq
    %v5451 = vshrl.u32 %v5450, 7
    %v5452 = vsub.s32 %v5449, %v5451
    %v5453 = vrot.slane %v5437, %v5452
    %v5455 = vunpack.c.l.s4 1966171168
    %v5456 = vunpack.c.0.s8 %v5455
    %v5457 = vlaneseq
    %v5458 = vshrl.u32 %v5457, 7
    %v5459 = vsub.s32 %v5456, %v5458
    %v5460 = vrot.slane %v5438, %v5459
    %v5462 = vunpack.c.l.s4 1966171168
    %v5463 = vunpack.c.0.s8 %v5462
    %v5464 = vlaneseq
    %v5465 = vshrl.u32 %v5464, 7
    %v5466 = vsub.s32 %v5463, %v5465
    %v5467 = vrot.slane %v5439, %v5466
    %v5468 = vcombine.high %v5446, %v5446
    %v5469 = vcombine.high %v5453, %v5453
    %v5470 = vcombine.high %v5460, %v5460
    %v5471 = vcombine.high %v5467, %v5467
    %v5472 = vld [vmem:[#allocation15] sm:$0xff]
    %v5473 = vld [vmem:[#allocation15 + $0x8] sm:$0xff]
    %v5474 = vld [vmem:[#allocation15 + $0x10] sm:$0xff]
    %v5475 = vld [vmem:[#allocation15 + $0x18] sm:$0xff]
    %v5476 = vld [vmem:[#allocation15 + $0x20] sm:$0xff]
    %v5477 = vld [vmem:[#allocation15 + $0x28] sm:$0xff]
    %v5478 = vld [vmem:[#allocation15 + $0x30] sm:$0xff]
    %v5479 = vld [vmem:[#allocation15 + $0x38] sm:$0xff]
    %v5480 = vlaneseq
    %v5481 = vshrl.u32 %v5480, 7
    %v5482 = vsub.s32 0, %v5481
    %v5483 = vrot.slane %v5446, %v5482
    %v5484 = vlaneseq
    %v5485 = vshrl.u32 %v5484, 7
    %v5486 = vsub.s32 0, %v5485
    %v5487 = vrot.slane %v5460, %v5486
    %v5488 = vlaneseq
    %v5489 = vshrl.u32 %v5488, 7
    %v5490 = vsub.s32 0, %v5489
    %v5491 = vrot.slane %v5468, %v5490
    %v5492 = vlaneseq
    %v5493 = vshrl.u32 %v5492, 7
    %v5494 = vsub.s32 0, %v5493
    %v5495 = vrot.slane %v5470, %v5494
    %v5496 = vlaneseq
    %v5497 = vshrl.u32 %v5496, 7
    %v5498 = vsub.s32 0, %v5497
    %v5499 = vrot.slane %v5453, %v5498
    %v5500 = vlaneseq
    %v5501 = vshrl.u32 %v5500, 7
    %v5502 = vsub.s32 0, %v5501
    %v5503 = vrot.slane %v5467, %v5502
    %v5504 = vlaneseq
    %v5505 = vshrl.u32 %v5504, 7
    %v5506 = vsub.s32 0, %v5505
    %v5507 = vrot.slane %v5469, %v5506
    %v5508 = vlaneseq
    %v5509 = vshrl.u32 %v5508, 7
    %v5510 = vsub.s32 0, %v5509
    %v5511 = vrot.slane %v5471, %v5510
    %5528 = vrot.lane.b32.xlu0 %v5472, 96
    %v5529 = vpop.permute.xlu0 %5528
    %5530 = vrot.lane.b32.xlu0 %v5473, 96
    %v5531 = vpop.permute.xlu0 %5530
    %5532 = vrot.lane.b32.xlu0 %v5474, 96
    %v5533 = vpop.permute.xlu0 %5532
    %5534 = vrot.lane.b32.xlu0 %v5475, 96
    %v5535 = vpop.permute.xlu0 %5534
    %5536 = vrot.lane.b32.xlu0 %v5476, 96
    %v5537 = vpop.permute.xlu0 %5536
    %5538 = vrot.lane.b32.xlu0 %v5477, 96
    %v5539 = vpop.permute.xlu0 %5538
    %5540 = vrot.lane.b32.xlu0 %v5478, 96
    %v5541 = vpop.permute.xlu0 %5540
    %5542 = vrot.lane.b32.xlu0 %v5479, 96
    %v5543 = vpop.permute.xlu0 %5542
    %v5552 = vmul.f32 %v5483, %v5529
    %v5553 = vmul.f32 %v5487, %v5531
    %v5554 = vmul.f32 %v5491, %v5533
    %v5555 = vmul.f32 %v5495, %v5535
    %v5556 = vmul.f32 %v5499, %v5537
    %v5557 = vmul.f32 %v5503, %v5539
    %v5558 = vmul.f32 %v5507, %v5541
    %v5559 = vmul.f32 %v5511, %v5543
    %5568 = vrot.lane.b32.xlu0 %v5552, 32
    %v5569 = vpop.permute.xlu0 %5568
    %5570 = vrot.lane.b32.xlu0 %v5553, 32
    %v5571 = vpop.permute.xlu0 %5570
    %5572 = vrot.lane.b32.xlu0 %v5554, 32
    %v5573 = vpop.permute.xlu0 %5572
    %5574 = vrot.lane.b32.xlu0 %v5555, 32
    %v5575 = vpop.permute.xlu0 %5574
    %5576 = vrot.lane.b32.xlu0 %v5556, 32
    %v5577 = vpop.permute.xlu0 %5576
    %5578 = vrot.lane.b32.xlu0 %v5557, 32
    %v5579 = vpop.permute.xlu0 %5578
    %5580 = vrot.lane.b32.xlu0 %v5558, 32
    %v5581 = vpop.permute.xlu0 %5580
    %5582 = vrot.lane.b32.xlu0 %v5559, 32
    %v5583 = vpop.permute.xlu0 %5582
    %v5592 = vsel %vm331, %v5569, 0.0
    %5593 = vadd.xlane.f32.xlu0 %v5592
    %v5594 = vpop.xlane.xlu0 %5593
    %v5595 = vsel %vm331, %v5571, 0.0
    %5596 = vadd.xlane.f32.xlu0 %v5595
    %v5597 = vpop.xlane.xlu0 %5596
    %v5598 = vsel %vm331, %v5573, 0.0
    %5599 = vadd.xlane.f32.xlu0 %v5598
    %v5600 = vpop.xlane.xlu0 %5599
    %v5601 = vsel %vm331, %v5575, 0.0
    %5602 = vadd.xlane.f32.xlu0 %v5601
    %v5603 = vpop.xlane.xlu0 %5602
    %v5604 = vsel %vm331, %v5577, 0.0
    %5605 = vadd.xlane.f32.xlu0 %v5604
    %v5606 = vpop.xlane.xlu0 %5605
    %v5607 = vsel %vm331, %v5579, 0.0
    %5608 = vadd.xlane.f32.xlu0 %v5607
    %v5609 = vpop.xlane.xlu0 %5608
    %v5610 = vsel %vm331, %v5581, 0.0
    %5611 = vadd.xlane.f32.xlu0 %v5610
    %v5612 = vpop.xlane.xlu0 %5611
    %v5613 = vsel %vm331, %v5583, 0.0
    %5614 = vadd.xlane.f32.xlu0 %v5613
    %v5615 = vpop.xlane.xlu0 %5614
    %v5616 = vld [vmem:[#allocation16] sm:$0xff]
    %v5618 = vlaneseq
    %v5619 = vshrl.u32 %v5618, 7
    %v5620 = vsub.s32 0, %v5619
    %v5621 = vrot.slane %v5616, %v5620
    %5623 = vbcast.lane.b32.xlu0 %v5621, 256
    %v5624 = vpop.permute.xlu0 %5623
    %v5625 = vlaneseq
    %v5626 = vshrl.u32 %v5625, 7
    %v5627 = vsub.s32 1, %v5626
    %v5628 = vrot.slane %v5616, %v5627
    %5630 = vbcast.lane.b32.xlu0 %v5628, 256
    %v5631 = vpop.permute.xlu0 %5630
    %v5632 = vlaneseq
    %v5633 = vshrl.u32 %v5632, 7
    %v5634 = vsub.s32 2, %v5633
    %v5635 = vrot.slane %v5616, %v5634
    %5637 = vbcast.lane.b32.xlu0 %v5635, 256
    %v5638 = vpop.permute.xlu0 %5637
    %v5639 = vlaneseq
    %v5640 = vshrl.u32 %v5639, 7
    %v5641 = vsub.s32 3, %v5640
    %v5642 = vrot.slane %v5616, %v5641
    %5644 = vbcast.lane.b32.xlu0 %v5642, 256
    %v5645 = vpop.permute.xlu0 %5644
    %v5646 = vlaneseq
    %v5647 = vshrl.u32 %v5646, 7
    %v5648 = vsub.s32 4, %v5647
    %v5649 = vrot.slane %v5616, %v5648
    %5651 = vbcast.lane.b32.xlu0 %v5649, 256
    %v5652 = vpop.permute.xlu0 %5651
    %v5653 = vlaneseq
    %v5654 = vshrl.u32 %v5653, 7
    %v5655 = vsub.s32 5, %v5654
    %v5656 = vrot.slane %v5616, %v5655
    %5658 = vbcast.lane.b32.xlu0 %v5656, 256
    %v5659 = vpop.permute.xlu0 %5658
    %v5660 = vlaneseq
    %v5661 = vshrl.u32 %v5660, 7
    %v5662 = vsub.s32 6, %v5661
    %v5663 = vrot.slane %v5616, %v5662
    %5665 = vbcast.lane.b32.xlu0 %v5663, 256
    %v5666 = vpop.permute.xlu0 %5665
    %v5667 = vlaneseq
    %v5668 = vshrl.u32 %v5667, 7
    %v5669 = vsub.s32 7, %v5668
    %v5670 = vrot.slane %v5616, %v5669
    %5672 = vbcast.lane.b32.xlu0 %v5670, 256
    %v5673 = vpop.permute.xlu0 %5672
    %v5682 = vadd.f32 %v5594, %v5624
    %v5683 = vadd.f32 %v5597, %v5631
    %v5684 = vadd.f32 %v5600, %v5638
    %v5685 = vadd.f32 %v5603, %v5645
    %v5686 = vadd.f32 %v5606, %v5652
    %v5687 = vadd.f32 %v5609, %v5659
    %v5688 = vadd.f32 %v5612, %v5666
    %v5689 = vadd.f32 %v5615, %v5673
    %5698 = vset.pattern.permute.xlu0 0
    %5699 = vperm.xlu0 %5698, %v5682
    %v5700 = vpop.permute.xlu0 %5699
    %5701 = vset.pattern.permute.xlu0 0
    %5702 = vperm.xlu0 %5701, %v5683
    %v5703 = vpop.permute.xlu0 %5702
    %5704 = vset.pattern.permute.xlu0 0
    %5705 = vperm.xlu0 %5704, %v5684
    %v5706 = vpop.permute.xlu0 %5705
    %5707 = vset.pattern.permute.xlu0 0
    %5708 = vperm.xlu0 %5707, %v5685
    %v5709 = vpop.permute.xlu0 %5708
    %5710 = vset.pattern.permute.xlu0 0
    %5711 = vperm.xlu0 %5710, %v5686
    %v5712 = vpop.permute.xlu0 %5711
    %5713 = vset.pattern.permute.xlu0 0
    %5714 = vperm.xlu0 %5713, %v5687
    %v5715 = vpop.permute.xlu0 %5714
    %5716 = vset.pattern.permute.xlu0 0
    %5717 = vperm.xlu0 %5716, %v5688
    %v5718 = vpop.permute.xlu0 %5717
    %5719 = vset.pattern.permute.xlu0 0
    %5720 = vperm.xlu0 %5719, %v5689
    %v5721 = vpop.permute.xlu0 %5720
    %v5722 = vlaneseq
    %v5723 = vshrl.u32 %v5722, 7
    %v5724 = vsub.s32 %v739, %v5723
    %v5725 = vrot.slane %v5700, %v5724
    %v5726 = vlaneseq
    %v5727 = vshrl.u32 %v5726, 7
    %v5728 = vsub.s32 %v739, %v5727
    %v5729 = vrot.slane %v5703, %v5728
    %v5730 = vlaneseq
    %v5731 = vshrl.u32 %v5730, 7
    %v5732 = vsub.s32 %v739, %v5731
    %v5733 = vrot.slane %v5706, %v5732
    %v5734 = vlaneseq
    %v5735 = vshrl.u32 %v5734, 7
    %v5736 = vsub.s32 %v739, %v5735
    %v5737 = vrot.slane %v5709, %v5736
    %v5738 = vlaneseq
    %v5739 = vshrl.u32 %v5738, 7
    %v5740 = vsub.s32 %v739, %v5739
    %v5741 = vrot.slane %v5712, %v5740
    %v5742 = vlaneseq
    %v5743 = vshrl.u32 %v5742, 7
    %v5744 = vsub.s32 %v739, %v5743
    %v5745 = vrot.slane %v5715, %v5744
    %v5746 = vlaneseq
    %v5747 = vshrl.u32 %v5746, 7
    %v5748 = vsub.s32 %v739, %v5747
    %v5749 = vrot.slane %v5718, %v5748
    %v5750 = vlaneseq
    %v5751 = vshrl.u32 %v5750, 7
    %v5752 = vsub.s32 %v739, %v5751
    %v5753 = vrot.slane %v5721, %v5752
    %v5754 = vsel %vm772, %v5729, %v5725
    %v5755 = vsel %vm774, %v5733, %v5754
    %v5756 = vsel %vm776, %v5737, %v5755
    %v5757 = vsel %vm778, %v5741, %v5756
    %v5758 = vsel %vm780, %v5745, %v5757
    %v5759 = vsel %vm782, %v5749, %v5758
    %v5760 = vsel %vm784, %v5753, %v5759
    %v5762 = vsel %vm787, %v5760, -inf
    %5763 = vmax.xlane.f32.xlu0 %v5762
    %v5764 = vpop.xlane.xlu0 %5763
    %v5766 = vlaneseq
    %v5767 = vshrl.u32 %v5766, 7
    %v5768 = vsub.s32 0, %v5767
    %v5769 = vrot.slane %v5764, %v5768
    %v5770 = vlaneseq
    %v5771 = vshrl.u32 %v5770, 7
    %v5772 = vsub.s32 1, %v5771
    %v5773 = vrot.slane %v5764, %v5772
    %v5774 = vlaneseq
    %v5775 = vshrl.u32 %v5774, 7
    %v5776 = vsub.s32 2, %v5775
    %v5777 = vrot.slane %v5764, %v5776
    %v5778 = vlaneseq
    %v5779 = vshrl.u32 %v5778, 7
    %v5780 = vsub.s32 3, %v5779
    %v5781 = vrot.slane %v5764, %v5780
    %v5782 = vlaneseq
    %v5783 = vshrl.u32 %v5782, 7
    %v5784 = vsub.s32 4, %v5783
    %v5785 = vrot.slane %v5764, %v5784
    %v5786 = vlaneseq
    %v5787 = vshrl.u32 %v5786, 7
    %v5788 = vsub.s32 5, %v5787
    %v5789 = vrot.slane %v5764, %v5788
    %v5790 = vlaneseq
    %v5791 = vshrl.u32 %v5790, 7
    %v5792 = vsub.s32 6, %v5791
    %v5793 = vrot.slane %v5764, %v5792
    %v5794 = vlaneseq
    %v5795 = vshrl.u32 %v5794, 7
    %v5796 = vsub.s32 7, %v5795
    %v5797 = vrot.slane %v5764, %v5796
    %v5806 = vsub.f32 %v5682, %v5769
    %v5807 = vsub.f32 %v5683, %v5773
    %v5808 = vsub.f32 %v5684, %v5777
    %v5809 = vsub.f32 %v5685, %v5781
    %v5810 = vsub.f32 %v5686, %v5785
    %v5811 = vsub.f32 %v5687, %v5789
    %v5812 = vsub.f32 %v5688, %v5793
    %v5813 = vsub.f32 %v5689, %v5797
    %v5814 = vmul.f32 %v5806, 1.442695
    %v5815 = vpow.pop %v5814
    %v5816 = vmul.f32 %v5807, 1.442695
    %v5817 = vpow.pop %v5816
    %v5818 = vmul.f32 %v5808, 1.442695
    %v5819 = vpow.pop %v5818
    %v5820 = vmul.f32 %v5809, 1.442695
    %v5821 = vpow.pop %v5820
    %v5822 = vmul.f32 %v5810, 1.442695
    %v5823 = vpow.pop %v5822
    %v5824 = vmul.f32 %v5811, 1.442695
    %v5825 = vpow.pop %v5824
    %v5826 = vmul.f32 %v5812, 1.442695
    %v5827 = vpow.pop %v5826
    %v5828 = vmul.f32 %v5813, 1.442695
    %v5829 = vpow.pop %v5828
    %5838 = vset.pattern.permute.xlu0 0
    %5839 = vperm.xlu0 %5838, %v5815
    %v5840 = vpop.permute.xlu0 %5839
    %5841 = vset.pattern.permute.xlu0 0
    %5842 = vperm.xlu0 %5841, %v5817
    %v5843 = vpop.permute.xlu0 %5842
    %5844 = vset.pattern.permute.xlu0 0
    %5845 = vperm.xlu0 %5844, %v5819
    %v5846 = vpop.permute.xlu0 %5845
    %5847 = vset.pattern.permute.xlu0 0
    %5848 = vperm.xlu0 %5847, %v5821
    %v5849 = vpop.permute.xlu0 %5848
    %5850 = vset.pattern.permute.xlu0 0
    %5851 = vperm.xlu0 %5850, %v5823
    %v5852 = vpop.permute.xlu0 %5851
    %5853 = vset.pattern.permute.xlu0 0
    %5854 = vperm.xlu0 %5853, %v5825
    %v5855 = vpop.permute.xlu0 %5854
    %5856 = vset.pattern.permute.xlu0 0
    %5857 = vperm.xlu0 %5856, %v5827
    %v5858 = vpop.permute.xlu0 %5857
    %5859 = vset.pattern.permute.xlu0 0
    %5860 = vperm.xlu0 %5859, %v5829
    %v5861 = vpop.permute.xlu0 %5860
    %v5862 = vlaneseq
    %v5863 = vshrl.u32 %v5862, 7
    %v5864 = vsub.s32 %v739, %v5863
    %v5865 = vrot.slane %v5840, %v5864
    %v5866 = vlaneseq
    %v5867 = vshrl.u32 %v5866, 7
    %v5868 = vsub.s32 %v739, %v5867
    %v5869 = vrot.slane %v5843, %v5868
    %v5870 = vlaneseq
    %v5871 = vshrl.u32 %v5870, 7
    %v5872 = vsub.s32 %v739, %v5871
    %v5873 = vrot.slane %v5846, %v5872
    %v5874 = vlaneseq
    %v5875 = vshrl.u32 %v5874, 7
    %v5876 = vsub.s32 %v739, %v5875
    %v5877 = vrot.slane %v5849, %v5876
    %v5878 = vlaneseq
    %v5879 = vshrl.u32 %v5878, 7
    %v5880 = vsub.s32 %v739, %v5879
    %v5881 = vrot.slane %v5852, %v5880
    %v5882 = vlaneseq
    %v5883 = vshrl.u32 %v5882, 7
    %v5884 = vsub.s32 %v739, %v5883
    %v5885 = vrot.slane %v5855, %v5884
    %v5886 = vlaneseq
    %v5887 = vshrl.u32 %v5886, 7
    %v5888 = vsub.s32 %v739, %v5887
    %v5889 = vrot.slane %v5858, %v5888
    %v5890 = vlaneseq
    %v5891 = vshrl.u32 %v5890, 7
    %v5892 = vsub.s32 %v739, %v5891
    %v5893 = vrot.slane %v5861, %v5892
    %v5894 = vsel %vm772, %v5869, %v5865
    %v5895 = vsel %vm774, %v5873, %v5894
    %v5896 = vsel %vm776, %v5877, %v5895
    %v5897 = vsel %vm778, %v5881, %v5896
    %v5898 = vsel %vm780, %v5885, %v5897
    %v5899 = vsel %vm782, %v5889, %v5898
    %v5900 = vsel %vm784, %v5893, %v5899
    %v5902 = vsel %vm787, %v5900, 0.0
    %5903 = vadd.xlane.f32.xlu0 %v5902
    %v5904 = vpop.xlane.xlu0 %5903
    %v5905 = vrcp.pop %v5904
    %v5907 = vlaneseq
    %v5908 = vshrl.u32 %v5907, 7
    %v5909 = vsub.s32 0, %v5908
    %v5910 = vrot.slane %v5905, %v5909
    %v5911 = vlaneseq
    %v5912 = vshrl.u32 %v5911, 7
    %v5913 = vsub.s32 1, %v5912
    %v5914 = vrot.slane %v5905, %v5913
    %v5915 = vlaneseq
    %v5916 = vshrl.u32 %v5915, 7
    %v5917 = vsub.s32 2, %v5916
    %v5918 = vrot.slane %v5905, %v5917
    %v5919 = vlaneseq
    %v5920 = vshrl.u32 %v5919, 7
    %v5921 = vsub.s32 3, %v5920
    %v5922 = vrot.slane %v5905, %v5921
    %v5923 = vlaneseq
    %v5924 = vshrl.u32 %v5923, 7
    %v5925 = vsub.s32 4, %v5924
    %v5926 = vrot.slane %v5905, %v5925
    %v5927 = vlaneseq
    %v5928 = vshrl.u32 %v5927, 7
    %v5929 = vsub.s32 5, %v5928
    %v5930 = vrot.slane %v5905, %v5929
    %v5931 = vlaneseq
    %v5932 = vshrl.u32 %v5931, 7
    %v5933 = vsub.s32 6, %v5932
    %v5934 = vrot.slane %v5905, %v5933
    %v5935 = vlaneseq
    %v5936 = vshrl.u32 %v5935, 7
    %v5937 = vsub.s32 7, %v5936
    %v5938 = vrot.slane %v5905, %v5937
    %v5947 = vmul.f32 %v5815, %v5910
    %v5948 = vmul.f32 %v5817, %v5914
    %v5949 = vmul.f32 %v5819, %v5918
    %v5950 = vmul.f32 %v5821, %v5922
    %v5951 = vmul.f32 %v5823, %v5926
    %v5952 = vmul.f32 %v5825, %v5930
    %v5953 = vmul.f32 %v5827, %v5934
    %v5954 = vmul.f32 %v5829, %v5938
    %v5955 = vld [vmem:[#allocation18] sm:$0xff]
    %v5956 = vld [vmem:[#allocation18 + $0x8] sm:$0xff]
    %v5957 = vld [vmem:[#allocation18 + $0x10] sm:$0xff]
    %v5958 = vld [vmem:[#allocation18 + $0x18] sm:$0xff]
    %v5959 = vld [vmem:[#allocation18 + $0x20] sm:$0xff]
    %v5960 = vld [vmem:[#allocation18 + $0x28] sm:$0xff]
    %v5961 = vld [vmem:[#allocation18 + $0x30] sm:$0xff]
    %v5962 = vld [vmem:[#allocation18 + $0x38] sm:$0xff]
    %5964 = vset.pattern.permute.xlu0 0
    %5965 = vperm.xlu0 %5964, %v5947
    %v5966 = vpop.permute.xlu0 %5965
    %5969 = vset.pattern.permute.xlu0 0
    %5970 = vperm.xlu0 %5969, %v5948
    %v5971 = vpop.permute.xlu0 %5970
    %5974 = vset.pattern.permute.xlu0 0
    %5975 = vperm.xlu0 %5974, %v5949
    %v5976 = vpop.permute.xlu0 %5975
    %5979 = vset.pattern.permute.xlu0 0
    %5980 = vperm.xlu0 %5979, %v5950
    %v5981 = vpop.permute.xlu0 %5980
    %5984 = vset.pattern.permute.xlu0 0
    %5985 = vperm.xlu0 %5984, %v5951
    %v5986 = vpop.permute.xlu0 %5985
    %5989 = vset.pattern.permute.xlu0 0
    %5990 = vperm.xlu0 %5989, %v5952
    %v5991 = vpop.permute.xlu0 %5990
    %5994 = vset.pattern.permute.xlu0 0
    %5995 = vperm.xlu0 %5994, %v5953
    %v5996 = vpop.permute.xlu0 %5995
    %5999 = vset.pattern.permute.xlu0 0
    %6000 = vperm.xlu0 %5999, %v5954
    %v6001 = vpop.permute.xlu0 %6000
    %v6003 = vmul.f32 %v5966, %v5955
    %v6004 = vmul.f32 %v5971, %v5956
    %v6005 = vmul.f32 %v5976, %v5957
    %v6006 = vmul.f32 %v5981, %v5958
    %v6007 = vmul.f32 %v5986, %v5959
    %v6008 = vmul.f32 %v5991, %v5960
    %v6009 = vmul.f32 %v5996, %v5961
    %v6010 = vmul.f32 %v6001, %v5962
    %v6011 = vsel %vm199, %v6003, 0.0
    %v6012 = vrot.slane %v6011, 4
    %v6013 = vadd.f32 %v6011, %v6012
    %v6014 = vrot.slane %v6013, 2
    %v6015 = vadd.f32 %v6013, %v6014
    %v6016 = vrot.slane %v6015, 1
    %v6017 = vadd.f32 %v6015, %v6016
    %v6018 = vsel %vm199, %v6004, 0.0
    %v6019 = vrot.slane %v6018, 4
    %v6020 = vadd.f32 %v6018, %v6019
    %v6021 = vrot.slane %v6020, 2
    %v6022 = vadd.f32 %v6020, %v6021
    %v6023 = vrot.slane %v6022, 1
    %v6024 = vadd.f32 %v6022, %v6023
    %v6025 = vsel %vm199, %v6005, 0.0
    %v6026 = vrot.slane %v6025, 4
    %v6027 = vadd.f32 %v6025, %v6026
    %v6028 = vrot.slane %v6027, 2
    %v6029 = vadd.f32 %v6027, %v6028
    %v6030 = vrot.slane %v6029, 1
    %v6031 = vadd.f32 %v6029, %v6030
    %v6032 = vsel %vm199, %v6006, 0.0
    %v6033 = vrot.slane %v6032, 4
    %v6034 = vadd.f32 %v6032, %v6033
    %v6035 = vrot.slane %v6034, 2
    %v6036 = vadd.f32 %v6034, %v6035
    %v6037 = vrot.slane %v6036, 1
    %v6038 = vadd.f32 %v6036, %v6037
    %v6039 = vsel %vm199, %v6007, 0.0
    %v6040 = vrot.slane %v6039, 4
    %v6041 = vadd.f32 %v6039, %v6040
    %v6042 = vrot.slane %v6041, 2
    %v6043 = vadd.f32 %v6041, %v6042
    %v6044 = vrot.slane %v6043, 1
    %v6045 = vadd.f32 %v6043, %v6044
    %v6046 = vsel %vm199, %v6008, 0.0
    %v6047 = vrot.slane %v6046, 4
    %v6048 = vadd.f32 %v6046, %v6047
    %v6049 = vrot.slane %v6048, 2
    %v6050 = vadd.f32 %v6048, %v6049
    %v6051 = vrot.slane %v6050, 1
    %v6052 = vadd.f32 %v6050, %v6051
    %v6053 = vsel %vm199, %v6009, 0.0
    %v6054 = vrot.slane %v6053, 4
    %v6055 = vadd.f32 %v6053, %v6054
    %v6056 = vrot.slane %v6055, 2
    %v6057 = vadd.f32 %v6055, %v6056
    %v6058 = vrot.slane %v6057, 1
    %v6059 = vadd.f32 %v6057, %v6058
    %v6060 = vsel %vm199, %v6010, 0.0
    %v6061 = vrot.slane %v6060, 4
    %v6062 = vadd.f32 %v6060, %v6061
    %v6063 = vrot.slane %v6062, 2
    %v6064 = vadd.f32 %v6062, %v6063
    %v6065 = vrot.slane %v6064, 1
    %v6066 = vadd.f32 %v6064, %v6065
    %6067 = vrot.lane.b32.xlu0 %v5421, 32
    %v6068 = vpop.permute.xlu0 %6067
    %v6078 = vsel %vm772, %v6024, %v6017
    %v6079 = vsel %vm774, %v6031, %v6078
    %v6080 = vsel %vm776, %v6038, %v6079
    %v6081 = vsel %vm778, %v6045, %v6080
    %v6082 = vsel %vm780, %v6052, %v6081
    %v6083 = vsel %vm782, %v6059, %v6082
    %v6084 = vsel %vm784, %v6066, %v6083
    %6085 = vrot.lane.b32.xlu0 %v6084, 32
    %v6086 = vpop.permute.xlu0 %6085
    %v6088 = vsel %vm331, %v6068, %v6086
    %v6089 = vpack.c.bf16 %v6088, %v6088
    %v6090 = vld [vmem:[#allocation19] sm:$0xf]
    %v6091 = vld [vmem:[#allocation19 + $0x4] sm:$0xf]
    %v6092 = vld [vmem:[#allocation19 + $0x8] sm:$0xf]
    %v6093 = vld [vmem:[#allocation19 + $0xc] sm:$0xf]
    %v6094 = vld [vmem:[#allocation19 + $0x10] sm:$0xf]
    %v6095 = vld [vmem:[#allocation19 + $0x14] sm:$0xf]
    %v6096 = vld [vmem:[#allocation19 + $0x18] sm:$0xf]
    %v6097 = vld [vmem:[#allocation19 + $0x1c] sm:$0xf]
    %v6098 = vld [vmem:[#allocation19 + $0x20] sm:$0xf]
    %v6099 = vld [vmem:[#allocation19 + $0x24] sm:$0xf]
    %v6100 = vld [vmem:[#allocation19 + $0x28] sm:$0xf]
    %v6101 = vld [vmem:[#allocation19 + $0x2c] sm:$0xf]
    %v6102 = vld [vmem:[%s11] sm:$0xff]
    %v6115 = vunpack.c.l.b16 %v6090
    %v6116 = vunpack.c.l.b16 %v6091
    %v6117 = vunpack.c.l.b16 %v6092
    %v6118 = vunpack.c.l.b16 %v6093
    %v6119 = vunpack.c.l.b16 %v6094
    %v6120 = vunpack.c.l.b16 %v6095
    %v6121 = vunpack.c.l.b16 %v6096
    %v6122 = vunpack.c.l.b16 %v6097
    %v6123 = vunpack.c.l.b16 %v6098
    %v6124 = vunpack.c.l.b16 %v6099
    %v6125 = vunpack.c.l.b16 %v6100
    %v6126 = vunpack.c.l.b16 %v6101
    %v6127 = vpack.c.b16 %v6116, %v6115
    %v6128 = vpack.c.b16 %v6118, %v6117
    %v6129 = vpack.c.b16 %v6120, %v6119
    %v6130 = vpack.c.b16 %v6122, %v6121
    %v6131 = vpack.c.b16 %v6124, %v6123
    %v6132 = vpack.c.b16 %v6126, %v6125
    %v6140 = vsel %vm251, %v6089, 0
    %6142 = vmatprep.subr.bf16.mxu0 0
    %6143 = vmatpush1.bf16.msra.mxu0 0
    %6144 = vmatprep.subr.bf16.mxu0 0
    %6145 = vmatpush1.bf16.msra.mxu0 0
    %6146 = vmatprep.subr.bf16.mxu0 0
    %6147 = vmatpush1.bf16.msra.mxu0 %v6132
    %6148 = vmatprep.subr.bf16.mxu0 0
    %6149 = vmatpush1.bf16.msra.mxu0 %v6131
    %6150 = vmatprep.subr.bf16.mxu0 0
    %6151 = vmatpush1.bf16.msra.mxu0 %v6130
    %6152 = vmatprep.subr.bf16.mxu0 0
    %6153 = vmatpush1.bf16.msra.mxu0 %v6129
    %6154 = vmatprep.subr.bf16.mxu0 0
    %6155 = vmatpush1.bf16.msra.mxu0 %v6128
    %6156 = vmatprep.subr.bf16.mxu0 0
    %6157 = vmatpush1.bf16.msra.mxu0 %v6127
    %6158 = vmatprep.subr.bf16.mxu0 0
    %6159 = vmatpush2.bf16.msra.mxu0 0
    %6160 = vmatprep.subr.bf16.mxu0 0
    %6161 = vmatpush2.bf16.msra.mxu0 0
    %6162 = vmatprep.subr.bf16.mxu0 0
    %6163 = vmatpush2.bf16.msra.mxu0 0
    %6164 = vmatprep.subr.bf16.mxu0 0
    %6165 = vmatpush2.bf16.msra.mxu0 0
    %6166 = vmatprep.subr.bf16.mxu0 0
    %6167 = vmatpush2.bf16.msra.mxu0 0
    %6168 = vmatprep.subr.bf16.mxu0 0
    %6169 = vmatpush2.bf16.msra.mxu0 0
    %6170 = vmatprep.subr.bf16.mxu0 0
    %6171 = vmatpush2.bf16.msra.mxu0 0
    %6172 = vmatprep.subr.bf16.mxu0 0
    %6173 = vmatpush2.bf16.msra.mxu0 0
    %6174 = vmatprep.mubr.bf16.mxu0 0
    %6175 = vmatmul.mubr.bf16.gmra.mxu0 %v6140
    %v6176 = vpop.f32.mrf.mxu0
    %v6177 = vadd.f32 %v6102, %v6176
    %v6178 = vpop.f32.mrf.mxu0
    %v6179 = vpop.f32.mrf.mxu0
    %v6180 = vpop.f32.mrf.mxu0
    %6181 = vdwg.mxu0
    %v6182 = vtanh.pop %v6177
    %s6183 = scalar_lea.vmem [#allocation21], 40
    %6184 = vst [vmem:[%s6183] sm:$0xff] %v6182
    %6185 = vst.msk [vmem:[#allocation2] sm:$0xff] %vm331, %v5315
    %6187 = vrot.lane.b32.xlu0 %v5306, 96
    %v6188 = vpop.permute.xlu0 %6187
    %6190 = vst.msk [vmem:[#allocation3] sm:$0xff] %vm331, %v6188
    %6191 = vst.msk [vmem:[%s190] sm:$0xff] %vm331, %v6068
    %6193 = vrot.lane.b32.xlu0 %v5415, 96
    %v6194 = vpop.permute.xlu0 %6193
    %6196 = vst.msk [vmem:[%s192] sm:$0xff] %vm331, %v6194
    // Predicated region
    $region94: #{tpu_custom_call.1} parent=1 // pred_check
      _
    $region95: #{tpu_custom_call.1} parent=1 // pred_check_branch
      %6198 = sbr.rel (0) target = $region97
    $region96: #{tpu_custom_call.1} parent=1 // pred_region
      %s6200 = ssub.s32 768, 768
      %6201 = vsyncadd [#allocation6], %s6200
      %s6202 = sshll.u32 [#allocation21], 4
      %s6203 = int_to_ptr.vmem [resolvable:$true] %s6202
      %6208 = dma.vmem_to_hbm [thread:$0]  %s6203, 768, %s12, [#allocation6], 128, 128, 8
    $region97: #{tpu_custom_call.1} parent=1 // pred_fallthru
      _
    // Predicated region
    $region98: #{tpu_custom_call.1} parent=1 // pred_check
      _
    $region99: #{tpu_custom_call.1} parent=1 // pred_check_branch
      %6210 = sbr.rel (0) target = $region101
    $region100: #{tpu_custom_call.1} parent=1 // pred_region
      %6211 = dma.done [#allocation6], 768
    $region101: #{tpu_custom_call.1} parent=1 // pred_fallthru
      _
    %6212 = vsyncpa [#allocation5], 1
    %6213 = vsyncpa [#allocation8], 1
    %6214 = vsyncpa [#allocation11], 1
    %6215 = vsyncpa [#allocation14], 1
    %6216 = vsyncpa [#allocation17], 1
    %6217 = vsyncpa [#allocation20], 1
    %6218 = vsyncpa [#allocation6], 1

</llo_original>
